<compile_context>
chip_gen: v7x
topology: tpu7x:2x2x1
jax: 0.10.0
libtpu: 0.0.40
codegen_flags: <defaults>
</compile_context>

<pallas_src>
import functools

import jax
import jax.numpy as jnp
from jax import lax
from jax.experimental import pallas as pl
from jax.experimental.pallas import tpu as pltpu


def _layer_norm(v, gamma, beta, eps=1e-5):
    mu = jnp.mean(v, axis=-1, keepdims=True)
    var = jnp.mean((v - mu) ** 2, axis=-1, keepdims=True)
    return (v - mu) * jax.lax.rsqrt(var + eps) * gamma + beta


def encoder_layer_kernel(
    xq_ref, xkv_ref,
    wq_ref, bq_ref, wk_ref, bk_ref, wv_ref, bv_ref, wo_ref, bo_ref,
    ln1_g_ref, ln1_b_ref,
    w1_ref, b1_ref, w2_ref, b2_ref,
    ln2_g_ref, ln2_b_ref,
    out_ref,
    k_scr, v_scr, ctx_scr,
    *, n_heads, head_dim, compute_dtype,
):
    # xq_ref: (1, TQ, H) f32 query tile (residual/LN path);
    # xkv_ref: (1, S, H) compute_dtype full sequence (K/V path only).

    # ---- K/V projections: once per batch element (q-tile 0), persist in VMEM scratch.
    @pl.when(pl.program_id(1) == 0)
    def _():
        xkv = xkv_ref[0]                                                  # (S, H) bf16
        k = jnp.dot(xkv, wk_ref[...], preferred_element_type=jnp.float32) + bk_ref[...]
        v = jnp.dot(xkv, wv_ref[...], preferred_element_type=jnp.float32) + bv_ref[...]
        k_scr[...] = k.astype(compute_dtype)                              # (S, H)
        v_scr[...] = v.astype(compute_dtype)

    xq = xq_ref[0]                                                        # (TQ, H) f32
    xq_c = xq.astype(compute_dtype)
    inv_scale = 1.0 / (float(head_dim) ** 0.5)

    # ---- fused full-width Q projection (one MXU pass for all heads), scale folded in.
    q = jnp.dot(xq_c, wq_ref[...], preferred_element_type=jnp.float32) + bq_ref[...]
    q = (q * inv_scale).astype(compute_dtype)                             # (TQ, H)

    # ---- per-head attention (scores + attn@V only); ctx written lane-packed into a
    #      (TQ, H) bf16 scratch so the output projection is a single full-width dot.
    D = head_dim
    for h in range(n_heads):          # static Python loop -> static lane slices
        sl = slice(h * D, (h + 1) * D)
        qh = q[:, sl]                                                     # (TQ, D) bf16
        kh = k_scr[:, sl]                                                 # (S,  D) bf16
        vh = v_scr[:, sl]                                                 # (S,  D) bf16

        # QK^T without explicit transpose: contract the last dims.
        energy = lax.dot_general(
            qh, kh, (((1,), (1,)), ((), ())),
            preferred_element_type=jnp.float32)                           # (TQ, S) f32

        m = jnp.max(energy, axis=-1, keepdims=True)
        p = jnp.exp(energy - m)
        attn = p / jnp.sum(p, axis=-1, keepdims=True)   # exact softmax (matches ref)
        # TODO(synk): attention dropout omitted (module evaluated in eval mode).

        ctx_h = jnp.dot(attn.astype(compute_dtype), vh,
                        preferred_element_type=jnp.float32)               # (TQ, D) f32
        ctx_scr[:, sl] = ctx_h.astype(compute_dtype)

    # ---- fused output projection: one lane-dense (TQ,H) @ (H,H) dot.
    attn_out = jnp.dot(ctx_scr[...], wo_ref[...],
                       preferred_element_type=jnp.float32) + bo_ref[...]  # (TQ, H) f32

    # ---- residual + layer norm 1 (f32) ----
    src1 = _layer_norm(xq + attn_out, ln1_g_ref[...], ln1_b_ref[...])

    # ---- position-wise feed-forward (bf16 at the MXU, f32 accumulate/elementwise) ----
    h1 = jnp.dot(src1.astype(compute_dtype), w1_ref[...],
                 preferred_element_type=jnp.float32) + b1_ref[...]
    h1 = jnp.maximum(h1, 0.0)
    ff = jnp.dot(h1.astype(compute_dtype), w2_ref[...],
                 preferred_element_type=jnp.float32) + b2_ref[...]

    # ---- residual + layer norm 2 ----
    out_ref[0] = _layer_norm(src1 + ff, ln2_g_ref[...],
                             ln2_b_ref[...]).astype(out_ref.dtype)


def _const_index_map(ndim):
    zeros = (0,) * ndim

    def im(b, q):
        return zeros

    return im


def encoder_layer(src, params, *, n_heads, q_tile=256):
    """src: (B, S, H) f32.  Weights are y = x @ W + b with full (H,H)/(H,PF)/(PF,H) W."""
    B, S, H = src.shape
    assert H % n_heads == 0
    head_dim = H // n_heads
    compute_dtype = params["wq"].dtype
    pf_dim = params["w1"].shape[1]

    # Query-tile the sequence: bounds live state to (TQ, S) scores per head.
    TQ = S if S <= q_tile else q_tile
    assert S % TQ == 0, "sequence length must be divisible by the q tile"
    n_q = S // TQ

    kernel = functools.partial(
        encoder_layer_kernel, n_heads=n_heads, head_dim=head_dim,
        compute_dtype=compute_dtype)

    param_list = [
        params["wq"], params["bq"], params["wk"], params["bk"],
        params["wv"], params["bv"], params["wo"], params["bo"],
        params["ln1_g"], params["ln1_b"],
        params["w1"], params["b1"], params["w2"], params["b2"],
        params["ln2_g"], params["ln2_b"],
    ]
    # Constant index_map: these blocks never change across the grid, so the pipeline
    # only DMAs them once.
    param_specs = [pl.BlockSpec(p.shape, _const_index_map(p.ndim)) for p in param_list]

    # K/V path consumes a bf16 copy of src (it is only ever used as an MXU operand).
    src_kv = src.astype(compute_dtype)
    cbytes = jnp.dtype(compute_dtype).itemsize

    # --- VMEM budget: 2x (double-buffer) on pipelined I/O + params, 1x scratch,
    #     plus transient intermediates (one head's energy/p, FFN hidden, LN temps).
    param_bytes = sum(int(p.size) * p.dtype.itemsize for p in param_list)
    io_block_bytes = (TQ * H * src.dtype.itemsize      # f32 query tile
                      + S * H * cbytes                 # bf16 full-sequence block
                      + TQ * H * 4)                    # f32 output tile
    scratch_bytes = (2 * S * H + TQ * H) * cbytes      # K, V, ctx scratch
    interm_bytes = (2 * TQ * S * 4                     # energy + exp (one head live)
                    + TQ * pf_dim * 4                  # FFN hidden
                    + 6 * TQ * H * 4)                  # q / attn_out / src1 / ff / LN tmps
    est = 2 * (param_bytes + io_block_bytes) + scratch_bytes + interm_bytes
    vmem_limit = int(min(max(est + (8 << 20), 32 << 20), 52 << 20))

    return pl.pallas_call(
        kernel,
        out_shape=jax.ShapeDtypeStruct((B, S, H), jnp.float32),
        grid_spec=pltpu.PrefetchScalarGridSpec(
            num_scalar_prefetch=0,
            grid=(B, n_q),
            in_specs=[
                pl.BlockSpec((1, TQ, H), lambda b, q: (b, q, 0)),   # f32 query tile
                pl.BlockSpec((1, S, H), lambda b, q: (b, 0, 0)),    # bf16 full seq (K/V)
            ] + param_specs,
            out_specs=pl.BlockSpec((1, TQ, H), lambda b, q: (b, q, 0)),
            scratch_shapes=[
                pltpu.VMEM((S, H), compute_dtype),    # K (persists across q tiles)
                pltpu.VMEM((S, H), compute_dtype),    # V (persists across q tiles)
                pltpu.VMEM((TQ, H), compute_dtype),   # per-tile ctx (head-packed)
            ],
        ),
        compiler_params=pltpu.CompilerParams(
            # B parallel (megacore / 2-TC sharding); q "arbitrary" so the persistent
            # K/V scratch written at q==0 is legal across q iterations.
            dimension_semantics=("parallel", "arbitrary"),
            vmem_limit_bytes=vmem_limit,
        ),
    )(src, src_kv, *param_list)


def init_params(key, hidden_dim, n_heads, pf_dim, param_dtype=jnp.bfloat16):
    """Full-width weights (y = x @ W + b, i.e. W = W_torch.T); biases/LN params in f32."""
    ks = jax.random.split(key, 12)

    def w(k, din, dout):
        m = jax.random.normal(k, (din, dout), jnp.float32) / jnp.sqrt(jnp.float32(din))
        return m.astype(param_dtype)

    def b(k, dout):
        return 0.1 * jax.random.normal(k, (1, dout), jnp.float32)

    H, PF = hidden_dim, pf_dim
    return dict(
        wq=w(ks[0], H, H), bq=b(ks[1], H),
        wk=w(ks[2], H, H), bk=b(ks[3], H),
        wv=w(ks[4], H, H), bv=b(ks[5], H),
        wo=w(ks[6], H, H), bo=b(ks[7], H),
        ln1_g=jnp.ones((1, H), jnp.float32), ln1_b=jnp.zeros((1, H), jnp.float32),
        w1=w(ks[8], H, PF), b1=b(ks[9], PF),
        w2=w(ks[10], PF, H), b2=b(ks[11], H),
        ln2_g=jnp.ones((1, H), jnp.float32), ln2_b=jnp.zeros((1, H), jnp.float32),
    )


def encoder_layer_ref(src, params, *, n_heads):
    """Pure-JAX reference matching the PyTorch forward (eval mode), mirroring the
    kernel's mixed precision (bf16 MXU operands, f32 accumulate/elementwise)."""
    B, S, H = src.shape
    D = H // n_heads
    cdt = params["wq"].dtype
    inv_scale = 1.0 / jnp.sqrt(jnp.float32(D))
    xc = src.astype(cdt)

    def dense(x, w, bias):
        return jnp.dot(x, w, preferred_element_type=jnp.float32) + bias

    q = dense(xc, params["wq"], params["bq"]) * inv_scale                 # (B,S,H) f32
    k = dense(xc, params["wk"], params["bk"]).astype(cdt)
    v = dense(xc, params["wv"], params["bv"]).astype(cdt)

    qh = q.reshape(B, S, n_heads, D).transpose(0, 2, 1, 3).astype(cdt)
    kh = k.reshape(B, S, n_heads, D).transpose(0, 2, 1, 3)
    vh = v.reshape(B, S, n_heads, D).transpose(0, 2, 1, 3)

    energy = jnp.einsum("bnqd,bnkd->bnqk", qh, kh,
                        preferred_element_type=jnp.float32)
    attn = jax.nn.softmax(energy, axis=-1)
    ctx = jnp.einsum("bnqk,bnkd->bnqd", attn.astype(cdt), vh,
                     preferred_element_type=jnp.float32)
    ctx = ctx.transpose(0, 2, 1, 3).reshape(B, S, H).astype(cdt)
    attn_out = jnp.dot(ctx, params["wo"],
                       preferred_element_type=jnp.float32) + params["bo"]

    def ln(u, g, b):
        mu = u.mean(-1, keepdims=True)
        var = ((u - mu) ** 2).mean(-1, keepdims=True)
        return (u - mu) * jax.lax.rsqrt(var + 1e-5) * g + b

    src1 = ln(src + attn_out, params["ln1_g"], params["ln1_b"])
    h1 = jnp.dot(src1.astype(cdt), params["w1"],
                 preferred_element_type=jnp.float32) + params["b1"]
    h1 = jnp.maximum(h1, 0.0)
    ff = jnp.dot(h1.astype(cdt), params["w2"],
                 preferred_element_type=jnp.float32) + params["b2"]
    return ln(src1 + ff, params["ln2_g"], params["ln2_b"])


if __name__ == "__main__":
    # Small, lane-dense config; S=256 with q_tile=128 exercises n_q=2 so the
    # persistent K/V scratch path (computed at q==0, reused at q==1) is validated.
    B, S, H, NH, PF = 2, 256, 128, 4, 256
    key = jax.random.PRNGKey(0)
    k_x, k_p = jax.random.split(key)
    src = jax.random.normal(k_x, (B, S, H), jnp.float32)
    params = init_params(k_p, H, NH, PF)

    out = encoder_layer(src, params, n_heads=NH, q_tile=128)
    out = jax.block_until_ready(out)

    ref = encoder_layer_ref(src, params, n_heads=NH)
    assert out.shape == (B, S, H)
    max_err = float(jnp.max(jnp.abs(out - ref)))
    # Tolerance reflects bf16 MXU operands (both kernel and reference); softmax is exact.
    assert jnp.allclose(out, ref, atol=1e-2, rtol=1e-2), \
        f"mismatch vs reference (max err {max_err})"
    print("KERNEL_OK")
</pallas_src>

<mosaic_0001>
module attributes {stable_mosaic.version = 11 : i64} {
  func.func @encoder_layer_kernel(%arg0: i32, %arg1: i32, %arg2: memref<1x128x128xf32, #tpu.memory_space<vmem>>, %arg3: memref<1x256x128xbf16, #tpu.memory_space<vmem>>, %arg4: memref<128x128xbf16, #tpu.memory_space<vmem>>, %arg5: memref<1x128xf32, #tpu.memory_space<vmem>>, %arg6: memref<128x128xbf16, #tpu.memory_space<vmem>>, %arg7: memref<1x128xf32, #tpu.memory_space<vmem>>, %arg8: memref<128x128xbf16, #tpu.memory_space<vmem>>, %arg9: memref<1x128xf32, #tpu.memory_space<vmem>>, %arg10: memref<128x128xbf16, #tpu.memory_space<vmem>>, %arg11: memref<1x128xf32, #tpu.memory_space<vmem>>, %arg12: memref<1x128xf32, #tpu.memory_space<vmem>>, %arg13: memref<1x128xf32, #tpu.memory_space<vmem>>, %arg14: memref<128x256xbf16, #tpu.memory_space<vmem>>, %arg15: memref<1x256xf32, #tpu.memory_space<vmem>>, %arg16: memref<256x128xbf16, #tpu.memory_space<vmem>>, %arg17: memref<1x128xf32, #tpu.memory_space<vmem>>, %arg18: memref<1x128xf32, #tpu.memory_space<vmem>>, %arg19: memref<1x128xf32, #tpu.memory_space<vmem>>, %arg20: memref<1x128x128xf32, #tpu.memory_space<vmem>>, %arg21: memref<256x128xbf16, #tpu.memory_space<vmem>>, %arg22: memref<256x128xbf16, #tpu.memory_space<vmem>>, %arg23: memref<128x128xbf16, #tpu.memory_space<vmem>>) attributes {dimension_semantics = [#tpu.dimension_semantics<parallel>, #tpu.dimension_semantics<arbitrary>], iteration_bounds = array<i64: 2, 2>, scalar_prefetch = 0 : i64, scratch_operands = 3 : i64, tpu.core_type = #tpu.core_type<tc>, window_params = [{transform_indices = @transform_0, window_bounds = array<i64: 1, 128, 128>}, {transform_indices = @transform_1, window_bounds = array<i64: 1, 256, 128>}, {pipeline_mode = #tpu.pipeline_mode<synchronous>, transform_indices = @transform_2, window_bounds = array<i64: 128, 128>}, {pipeline_mode = #tpu.pipeline_mode<synchronous>, transform_indices = @transform_3, window_bounds = array<i64: 1, 128>}, {pipeline_mode = #tpu.pipeline_mode<synchronous>, transform_indices = @transform_4, window_bounds = array<i64: 128, 128>}, {pipeline_mode = #tpu.pipeline_mode<synchronous>, transform_indices = @transform_5, window_bounds = array<i64: 1, 128>}, {pipeline_mode = #tpu.pipeline_mode<synchronous>, transform_indices = @transform_6, window_bounds = array<i64: 128, 128>}, {pipeline_mode = #tpu.pipeline_mode<synchronous>, transform_indices = @transform_7, window_bounds = array<i64: 1, 128>}, {pipeline_mode = #tpu.pipeline_mode<synchronous>, transform_indices = @transform_8, window_bounds = array<i64: 128, 128>}, {pipeline_mode = #tpu.pipeline_mode<synchronous>, transform_indices = @transform_9, window_bounds = array<i64: 1, 128>}, {pipeline_mode = #tpu.pipeline_mode<synchronous>, transform_indices = @transform_10, window_bounds = array<i64: 1, 128>}, {pipeline_mode = #tpu.pipeline_mode<synchronous>, transform_indices = @transform_11, window_bounds = array<i64: 1, 128>}, {pipeline_mode = #tpu.pipeline_mode<synchronous>, transform_indices = @transform_12, window_bounds = array<i64: 128, 256>}, {pipeline_mode = #tpu.pipeline_mode<synchronous>, transform_indices = @transform_13, window_bounds = array<i64: 1, 256>}, {pipeline_mode = #tpu.pipeline_mode<synchronous>, transform_indices = @transform_14, window_bounds = array<i64: 256, 128>}, {pipeline_mode = #tpu.pipeline_mode<synchronous>, transform_indices = @transform_15, window_bounds = array<i64: 1, 128>}, {pipeline_mode = #tpu.pipeline_mode<synchronous>, transform_indices = @transform_16, window_bounds = array<i64: 1, 128>}, {pipeline_mode = #tpu.pipeline_mode<synchronous>, transform_indices = @transform_17, window_bounds = array<i64: 1, 128>}, {transform_indices = @transform_18, window_bounds = array<i64: 1, 128, 128>}]} {
    %c0_i32 = arith.constant 0 : i32
    %0 = arith.cmpi eq, %arg1, %c0_i32 : i32
    %1 = arith.extui %0 : i1 to i32
    %c0_i32_0 = arith.constant 0 : i32
    %2 = arith.cmpi ne, %1, %c0_i32_0 : i32
    scf.if %2 {
      %c0_84 = arith.constant 0 : index
      %c0_85 = arith.constant 0 : index
      %c0_86 = arith.constant 0 : index
      %155 = vector.load %arg3[%c0_84, %c0_85, %c0_86] : memref<1x256x128xbf16, #tpu.memory_space<vmem>>, vector<1x256x128xbf16>
      %156 = vector.shape_cast %155 : vector<1x256x128xbf16> to vector<256x128xbf16>
      %c0_87 = arith.constant 0 : index
      %c0_88 = arith.constant 0 : index
      %157 = vector.load %arg6[%c0_87, %c0_88] : memref<128x128xbf16, #tpu.memory_space<vmem>>, vector<128x128xbf16>
      %cst_89 = arith.constant dense<0.000000e+00> : vector<256x128xf32>
      %158 = tpu.matmul %156, %157, %cst_89 {dimension_numbers = #tpu.dot_dimension_numbers<[1], [0], [0], [1], [0, 0, 1, 1], [], []>} : vector<256x128xbf16>, vector<128x128xbf16>, vector<256x128xf32> -> vector<256x128xf32>
      %c0_90 = arith.constant 0 : index
      %c0_91 = arith.constant 0 : index
      %159 = vector.load %arg7[%c0_90, %c0_91] : memref<1x128xf32, #tpu.memory_space<vmem>>, vector<1x128xf32>
      %160 = vector.broadcast %159 : vector<1x128xf32> to vector<256x128xf32>
      %161 = arith.addf %158, %160 : vector<256x128xf32>
      %c0_92 = arith.constant 0 : index
      %c0_93 = arith.constant 0 : index
      %162 = vector.load %arg8[%c0_92, %c0_93] : memref<128x128xbf16, #tpu.memory_space<vmem>>, vector<128x128xbf16>
      %cst_94 = arith.constant dense<0.000000e+00> : vector<256x128xf32>
      %163 = tpu.matmul %156, %162, %cst_94 {dimension_numbers = #tpu.dot_dimension_numbers<[1], [0], [0], [1], [0, 0, 1, 1], [], []>} : vector<256x128xbf16>, vector<128x128xbf16>, vector<256x128xf32> -> vector<256x128xf32>
      %c0_95 = arith.constant 0 : index
      %c0_96 = arith.constant 0 : index
      %164 = vector.load %arg9[%c0_95, %c0_96] : memref<1x128xf32, #tpu.memory_space<vmem>>, vector<1x128xf32>
      %165 = vector.broadcast %164 : vector<1x128xf32> to vector<256x128xf32>
      %166 = arith.addf %163, %165 : vector<256x128xf32>
      %167 = arith.truncf %161 : vector<256x128xf32> to vector<256x128xbf16>
      %c0_97 = arith.constant 0 : index
      %c0_98 = arith.constant 0 : index
      %168 = vector.load %arg21[%c0_97, %c0_98] : memref<256x128xbf16, #tpu.memory_space<vmem>>, vector<256x128xbf16>
      tpu.vector_store %arg21[%c0_97, %c0_98], %167 {strides = array<i32>} : memref<256x128xbf16, #tpu.memory_space<vmem>>, vector<256x128xbf16>,
      %169 = arith.truncf %166 : vector<256x128xf32> to vector<256x128xbf16>
      %c0_99 = arith.constant 0 : index
      %c0_100 = arith.constant 0 : index
      %170 = vector.load %arg22[%c0_99, %c0_100] : memref<256x128xbf16, #tpu.memory_space<vmem>>, vector<256x128xbf16>
      tpu.vector_store %arg22[%c0_99, %c0_100], %169 {strides = array<i32>} : memref<256x128xbf16, #tpu.memory_space<vmem>>, vector<256x128xbf16>,
    } else {
    }
    %c0 = arith.constant 0 : index
    %c0_1 = arith.constant 0 : index
    %c0_2 = arith.constant 0 : index
    %3 = vector.load %arg2[%c0, %c0_1, %c0_2] : memref<1x128x128xf32, #tpu.memory_space<vmem>>, vector<1x128x128xf32>
    %4 = vector.shape_cast %3 : vector<1x128x128xf32> to vector<128x128xf32>
    %5 = arith.truncf %4 : vector<128x128xf32> to vector<128x128xbf16>
    %c0_3 = arith.constant 0 : index
    %c0_4 = arith.constant 0 : index
    %6 = vector.load %arg4[%c0_3, %c0_4] : memref<128x128xbf16, #tpu.memory_space<vmem>>, vector<128x128xbf16>
    %cst = arith.constant dense<0.000000e+00> : vector<128x128xf32>
    %7 = tpu.matmul %5, %6, %cst {dimension_numbers = #tpu.dot_dimension_numbers<[1], [0], [0], [1], [0, 0, 1, 1], [], []>} : vector<128x128xbf16>, vector<128x128xbf16>, vector<128x128xf32> -> vector<128x128xf32>
    %c0_5 = arith.constant 0 : index
    %c0_6 = arith.constant 0 : index
    %8 = vector.load %arg5[%c0_5, %c0_6] : memref<1x128xf32, #tpu.memory_space<vmem>>, vector<1x128xf32>
    %9 = vector.broadcast %8 : vector<1x128xf32> to vector<128x128xf32>
    %10 = arith.addf %7, %9 : vector<128x128xf32>
    %cst_7 = arith.constant 0.176776692 : f32
    %11 = vector.broadcast %cst_7 : f32 to vector<128x128xf32>
    %12 = arith.mulf %10, %11 : vector<128x128xf32>
    %13 = arith.truncf %12 : vector<128x128xf32> to vector<128x128xbf16>
    %14 = vector.extract_strided_slice %13 {offsets = [0, 0], sizes = [128, 32], strides = [1, 1]} : vector<128x128xbf16> to vector<128x32xbf16>
    %c0_8 = arith.constant 0 : index
    %c0_9 = arith.constant 0 : index
    %15 = vector.load %arg21[%c0_8, %c0_9] : memref<256x128xbf16, #tpu.memory_space<vmem>>, vector<256x32xbf16>
    %c0_10 = arith.constant 0 : index
    %c0_11 = arith.constant 0 : index
    %16 = vector.load %arg22[%c0_10, %c0_11] : memref<256x128xbf16, #tpu.memory_space<vmem>>, vector<256x32xbf16>
    %cst_12 = arith.constant dense<0.000000e+00> : vector<128x256xf32>
    %17 = tpu.matmul %14, %15, %cst_12 {dimension_numbers = #tpu.dot_dimension_numbers<[1], [1], [0], [0], [0, 0, 1, 0], [], []>} : vector<128x32xbf16>, vector<256x32xbf16>, vector<128x256xf32> -> vector<128x256xf32>
    %cst_13 = arith.constant dense<0xFF800000> : vector<128xf32>
    %18 = vector.multi_reduction <maximumf>, %17, %cst_13 [1] : vector<128x256xf32> to vector<128xf32>
    %19 = vector.shape_cast %18 : vector<128xf32> to vector<128x1xf32>
    %20 = vector.broadcast %19 : vector<128x1xf32> to vector<128x256xf32>
    %21 = arith.subf %17, %20 : vector<128x256xf32>
    %22 = math.exp %21 : vector<128x256xf32>
    %cst_14 = arith.constant dense<0.000000e+00> : vector<128xf32>
    %23 = vector.multi_reduction <add>, %22, %cst_14 [1] : vector<128x256xf32> to vector<128xf32>
    %24 = vector.shape_cast %23 : vector<128xf32> to vector<128x1xf32>
    %25 = vector.broadcast %24 : vector<128x1xf32> to vector<128x256xf32>
    %26 = arith.divf %22, %25 : vector<128x256xf32>
    %27 = arith.truncf %26 : vector<128x256xf32> to vector<128x256xbf16>
    %cst_15 = arith.constant dense<0.000000e+00> : vector<128x32xf32>
    %28 = tpu.matmul %27, %16, %cst_15 {dimension_numbers = #tpu.dot_dimension_numbers<[1], [0], [0], [1], [0, 0, 1, 1], [], []>} : vector<128x256xbf16>, vector<256x32xbf16>, vector<128x32xf32> -> vector<128x32xf32>
    %29 = arith.truncf %28 : vector<128x32xf32> to vector<128x32xbf16>
    %c0_16 = arith.constant 0 : index
    %c0_17 = arith.constant 0 : index
    %30 = vector.load %arg23[%c0_16, %c0_17] : memref<128x128xbf16, #tpu.memory_space<vmem>>, vector<128x32xbf16>
    tpu.vector_store %arg23[%c0_16, %c0_17], %29 {strides = array<i32>} : memref<128x128xbf16, #tpu.memory_space<vmem>>, vector<128x32xbf16>,
    %31 = vector.extract_strided_slice %13 {offsets = [0, 32], sizes = [128, 32], strides = [1, 1]} : vector<128x128xbf16> to vector<128x32xbf16>
    %c0_18 = arith.constant 0 : index
    %c32 = arith.constant 32 : index
    %32 = vector.load %arg21[%c0_18, %c32] : memref<256x128xbf16, #tpu.memory_space<vmem>>, vector<256x32xbf16>
    %c0_19 = arith.constant 0 : index
    %c32_20 = arith.constant 32 : index
    %33 = vector.load %arg22[%c0_19, %c32_20] : memref<256x128xbf16, #tpu.memory_space<vmem>>, vector<256x32xbf16>
    %cst_21 = arith.constant dense<0.000000e+00> : vector<128x256xf32>
    %34 = tpu.matmul %31, %32, %cst_21 {dimension_numbers = #tpu.dot_dimension_numbers<[1], [1], [0], [0], [0, 0, 1, 0], [], []>} : vector<128x32xbf16>, vector<256x32xbf16>, vector<128x256xf32> -> vector<128x256xf32>
    %cst_22 = arith.constant dense<0xFF800000> : vector<128xf32>
    %35 = vector.multi_reduction <maximumf>, %34, %cst_22 [1] : vector<128x256xf32> to vector<128xf32>
    %36 = vector.shape_cast %35 : vector<128xf32> to vector<128x1xf32>
    %37 = vector.broadcast %36 : vector<128x1xf32> to vector<128x256xf32>
    %38 = arith.subf %34, %37 : vector<128x256xf32>
    %39 = math.exp %38 : vector<128x256xf32>
    %cst_23 = arith.constant dense<0.000000e+00> : vector<128xf32>
    %40 = vector.multi_reduction <add>, %39, %cst_23 [1] : vector<128x256xf32> to vector<128xf32>
    %41 = vector.shape_cast %40 : vector<128xf32> to vector<128x1xf32>
    %42 = vector.broadcast %41 : vector<128x1xf32> to vector<128x256xf32>
    %43 = arith.divf %39, %42 : vector<128x256xf32>
    %44 = arith.truncf %43 : vector<128x256xf32> to vector<128x256xbf16>
    %cst_24 = arith.constant dense<0.000000e+00> : vector<128x32xf32>
    %45 = tpu.matmul %44, %33, %cst_24 {dimension_numbers = #tpu.dot_dimension_numbers<[1], [0], [0], [1], [0, 0, 1, 1], [], []>} : vector<128x256xbf16>, vector<256x32xbf16>, vector<128x32xf32> -> vector<128x32xf32>
    %46 = arith.truncf %45 : vector<128x32xf32> to vector<128x32xbf16>
    %c0_25 = arith.constant 0 : index
    %c32_26 = arith.constant 32 : index
    %47 = vector.load %arg23[%c0_25, %c32_26] : memref<128x128xbf16, #tpu.memory_space<vmem>>, vector<128x32xbf16>
    tpu.vector_store %arg23[%c0_25, %c32_26], %46 {strides = array<i32>} : memref<128x128xbf16, #tpu.memory_space<vmem>>, vector<128x32xbf16>,
    %48 = vector.extract_strided_slice %13 {offsets = [0, 64], sizes = [128, 32], strides = [1, 1]} : vector<128x128xbf16> to vector<128x32xbf16>
    %c0_27 = arith.constant 0 : index
    %c64 = arith.constant 64 : index
    %49 = vector.load %arg21[%c0_27, %c64] : memref<256x128xbf16, #tpu.memory_space<vmem>>, vector<256x32xbf16>
    %c0_28 = arith.constant 0 : index
    %c64_29 = arith.constant 64 : index
    %50 = vector.load %arg22[%c0_28, %c64_29] : memref<256x128xbf16, #tpu.memory_space<vmem>>, vector<256x32xbf16>
    %cst_30 = arith.constant dense<0.000000e+00> : vector<128x256xf32>
    %51 = tpu.matmul %48, %49, %cst_30 {dimension_numbers = #tpu.dot_dimension_numbers<[1], [1], [0], [0], [0, 0, 1, 0], [], []>} : vector<128x32xbf16>, vector<256x32xbf16>, vector<128x256xf32> -> vector<128x256xf32>
    %cst_31 = arith.constant dense<0xFF800000> : vector<128xf32>
    %52 = vector.multi_reduction <maximumf>, %51, %cst_31 [1] : vector<128x256xf32> to vector<128xf32>
    %53 = vector.shape_cast %52 : vector<128xf32> to vector<128x1xf32>
    %54 = vector.broadcast %53 : vector<128x1xf32> to vector<128x256xf32>
    %55 = arith.subf %51, %54 : vector<128x256xf32>
    %56 = math.exp %55 : vector<128x256xf32>
    %cst_32 = arith.constant dense<0.000000e+00> : vector<128xf32>
    %57 = vector.multi_reduction <add>, %56, %cst_32 [1] : vector<128x256xf32> to vector<128xf32>
    %58 = vector.shape_cast %57 : vector<128xf32> to vector<128x1xf32>
    %59 = vector.broadcast %58 : vector<128x1xf32> to vector<128x256xf32>
    %60 = arith.divf %56, %59 : vector<128x256xf32>
    %61 = arith.truncf %60 : vector<128x256xf32> to vector<128x256xbf16>
    %cst_33 = arith.constant dense<0.000000e+00> : vector<128x32xf32>
    %62 = tpu.matmul %61, %50, %cst_33 {dimension_numbers = #tpu.dot_dimension_numbers<[1], [0], [0], [1], [0, 0, 1, 1], [], []>} : vector<128x256xbf16>, vector<256x32xbf16>, vector<128x32xf32> -> vector<128x32xf32>
    %63 = arith.truncf %62 : vector<128x32xf32> to vector<128x32xbf16>
    %c0_34 = arith.constant 0 : index
    %c64_35 = arith.constant 64 : index
    %64 = vector.load %arg23[%c0_34, %c64_35] : memref<128x128xbf16, #tpu.memory_space<vmem>>, vector<128x32xbf16>
    tpu.vector_store %arg23[%c0_34, %c64_35], %63 {strides = array<i32>} : memref<128x128xbf16, #tpu.memory_space<vmem>>, vector<128x32xbf16>,
    %65 = vector.extract_strided_slice %13 {offsets = [0, 96], sizes = [128, 32], strides = [1, 1]} : vector<128x128xbf16> to vector<128x32xbf16>
    %c0_36 = arith.constant 0 : index
    %c96 = arith.constant 96 : index
    %66 = vector.load %arg21[%c0_36, %c96] : memref<256x128xbf16, #tpu.memory_space<vmem>>, vector<256x32xbf16>
    %c0_37 = arith.constant 0 : index
    %c96_38 = arith.constant 96 : index
    %67 = vector.load %arg22[%c0_37, %c96_38] : memref<256x128xbf16, #tpu.memory_space<vmem>>, vector<256x32xbf16>
    %cst_39 = arith.constant dense<0.000000e+00> : vector<128x256xf32>
    %68 = tpu.matmul %65, %66, %cst_39 {dimension_numbers = #tpu.dot_dimension_numbers<[1], [1], [0], [0], [0, 0, 1, 0], [], []>} : vector<128x32xbf16>, vector<256x32xbf16>, vector<128x256xf32> -> vector<128x256xf32>
    %cst_40 = arith.constant dense<0xFF800000> : vector<128xf32>
    %69 = vector.multi_reduction <maximumf>, %68, %cst_40 [1] : vector<128x256xf32> to vector<128xf32>
    %70 = vector.shape_cast %69 : vector<128xf32> to vector<128x1xf32>
    %71 = vector.broadcast %70 : vector<128x1xf32> to vector<128x256xf32>
    %72 = arith.subf %68, %71 : vector<128x256xf32>
    %73 = math.exp %72 : vector<128x256xf32>
    %cst_41 = arith.constant dense<0.000000e+00> : vector<128xf32>
    %74 = vector.multi_reduction <add>, %73, %cst_41 [1] : vector<128x256xf32> to vector<128xf32>
    %75 = vector.shape_cast %74 : vector<128xf32> to vector<128x1xf32>
    %76 = vector.broadcast %75 : vector<128x1xf32> to vector<128x256xf32>
    %77 = arith.divf %73, %76 : vector<128x256xf32>
    %78 = arith.truncf %77 : vector<128x256xf32> to vector<128x256xbf16>
    %cst_42 = arith.constant dense<0.000000e+00> : vector<128x32xf32>
    %79 = tpu.matmul %78, %67, %cst_42 {dimension_numbers = #tpu.dot_dimension_numbers<[1], [0], [0], [1], [0, 0, 1, 1], [], []>} : vector<128x256xbf16>, vector<256x32xbf16>, vector<128x32xf32> -> vector<128x32xf32>
    %80 = arith.truncf %79 : vector<128x32xf32> to vector<128x32xbf16>
    %c0_43 = arith.constant 0 : index
    %c96_44 = arith.constant 96 : index
    %81 = vector.load %arg23[%c0_43, %c96_44] : memref<128x128xbf16, #tpu.memory_space<vmem>>, vector<128x32xbf16>
    tpu.vector_store %arg23[%c0_43, %c96_44], %80 {strides = array<i32>} : memref<128x128xbf16, #tpu.memory_space<vmem>>, vector<128x32xbf16>,
    %c0_45 = arith.constant 0 : index
    %c0_46 = arith.constant 0 : index
    %82 = vector.load %arg23[%c0_45, %c0_46] : memref<128x128xbf16, #tpu.memory_space<vmem>>, vector<128x128xbf16>
    %c0_47 = arith.constant 0 : index
    %c0_48 = arith.constant 0 : index
    %83 = vector.load %arg10[%c0_47, %c0_48] : memref<128x128xbf16, #tpu.memory_space<vmem>>, vector<128x128xbf16>
    %cst_49 = arith.constant dense<0.000000e+00> : vector<128x128xf32>
    %84 = tpu.matmul %82, %83, %cst_49 {dimension_numbers = #tpu.dot_dimension_numbers<[1], [0], [0], [1], [0, 0, 1, 1], [], []>} : vector<128x128xbf16>, vector<128x128xbf16>, vector<128x128xf32> -> vector<128x128xf32>
    %c0_50 = arith.constant 0 : index
    %c0_51 = arith.constant 0 : index
    %85 = vector.load %arg11[%c0_50, %c0_51] : memref<1x128xf32, #tpu.memory_space<vmem>>, vector<1x128xf32>
    %86 = vector.broadcast %85 : vector<1x128xf32> to vector<128x128xf32>
    %87 = arith.addf %84, %86 : vector<128x128xf32>
    %88 = arith.addf %4, %87 : vector<128x128xf32>
    %c0_52 = arith.constant 0 : index
    %c0_53 = arith.constant 0 : index
    %89 = vector.load %arg12[%c0_52, %c0_53] : memref<1x128xf32, #tpu.memory_space<vmem>>, vector<1x128xf32>
    %c0_54 = arith.constant 0 : index
    %c0_55 = arith.constant 0 : index
    %90 = vector.load %arg13[%c0_54, %c0_55] : memref<1x128xf32, #tpu.memory_space<vmem>>, vector<1x128xf32>
    %cst_56 = arith.constant dense<0.000000e+00> : vector<128xf32>
    %91 = vector.multi_reduction <add>, %88, %cst_56 [1] : vector<128x128xf32> to vector<128xf32>
    %92 = vector.shape_cast %91 : vector<128xf32> to vector<128x1xf32>
    %cst_57 = arith.constant 1.280000e+02 : f32
    %93 = vector.broadcast %cst_57 : f32 to vector<128x1xf32>
    %94 = arith.divf %92, %93 : vector<128x1xf32>
    %95 = vector.broadcast %94 : vector<128x1xf32> to vector<128x128xf32>
    %96 = arith.subf %88, %95 : vector<128x128xf32>
    %97 = arith.mulf %96, %96 : vector<128x128xf32>
    %cst_58 = arith.constant dense<0.000000e+00> : vector<128xf32>
    %98 = vector.multi_reduction <add>, %97, %cst_58 [1] : vector<128x128xf32> to vector<128xf32>
    %99 = vector.shape_cast %98 : vector<128xf32> to vector<128x1xf32>
    %cst_59 = arith.constant 1.280000e+02 : f32
    %100 = vector.broadcast %cst_59 : f32 to vector<128x1xf32>
    %101 = arith.divf %99, %100 : vector<128x1xf32>
    %102 = vector.broadcast %94 : vector<128x1xf32> to vector<128x128xf32>
    %103 = arith.subf %88, %102 : vector<128x128xf32>
    %cst_60 = arith.constant 9.99999974E-6 : f32
    %104 = vector.broadcast %cst_60 : f32 to vector<128x1xf32>
    %105 = arith.addf %101, %104 : vector<128x1xf32>
    %106 = math.rsqrt %105 : vector<128x1xf32>
    %107 = vector.broadcast %106 : vector<128x1xf32> to vector<128x128xf32>
    %108 = arith.mulf %103, %107 : vector<128x128xf32>
    %109 = vector.broadcast %89 : vector<1x128xf32> to vector<128x128xf32>
    %110 = arith.mulf %108, %109 : vector<128x128xf32>
    %111 = vector.broadcast %90 : vector<1x128xf32> to vector<128x128xf32>
    %112 = arith.addf %110, %111 : vector<128x128xf32>
    %113 = arith.truncf %112 : vector<128x128xf32> to vector<128x128xbf16>
    %c0_61 = arith.constant 0 : index
    %c0_62 = arith.constant 0 : index
    %114 = vector.load %arg14[%c0_61, %c0_62] : memref<128x256xbf16, #tpu.memory_space<vmem>>, vector<128x256xbf16>
    %cst_63 = arith.constant dense<0.000000e+00> : vector<128x256xf32>
    %115 = tpu.matmul %113, %114, %cst_63 {dimension_numbers = #tpu.dot_dimension_numbers<[1], [0], [0], [1], [0, 0, 1, 1], [], []>} : vector<128x128xbf16>, vector<128x256xbf16>, vector<128x256xf32> -> vector<128x256xf32>
    %c0_64 = arith.constant 0 : index
    %c0_65 = arith.constant 0 : index
    %116 = vector.load %arg15[%c0_64, %c0_65] : memref<1x256xf32, #tpu.memory_space<vmem>>, vector<1x256xf32>
    %117 = vector.broadcast %116 : vector<1x256xf32> to vector<128x256xf32>
    %118 = arith.addf %115, %117 : vector<128x256xf32>
    %cst_66 = arith.constant 0.000000e+00 : f32
    %119 = vector.broadcast %cst_66 : f32 to vector<128x256xf32>
    %120 = arith.maximumf %118, %119 : vector<128x256xf32>
    %121 = arith.truncf %120 : vector<128x256xf32> to vector<128x256xbf16>
    %c0_67 = arith.constant 0 : index
    %c0_68 = arith.constant 0 : index
    %122 = vector.load %arg16[%c0_67, %c0_68] : memref<256x128xbf16, #tpu.memory_space<vmem>>, vector<256x128xbf16>
    %cst_69 = arith.constant dense<0.000000e+00> : vector<128x128xf32>
    %123 = tpu.matmul %121, %122, %cst_69 {dimension_numbers = #tpu.dot_dimension_numbers<[1], [0], [0], [1], [0, 0, 1, 1], [], []>} : vector<128x256xbf16>, vector<256x128xbf16>, vector<128x128xf32> -> vector<128x128xf32>
    %c0_70 = arith.constant 0 : index
    %c0_71 = arith.constant 0 : index
    %124 = vector.load %arg17[%c0_70, %c0_71] : memref<1x128xf32, #tpu.memory_space<vmem>>, vector<1x128xf32>
    %125 = vector.broadcast %124 : vector<1x128xf32> to vector<128x128xf32>
    %126 = arith.addf %123, %125 : vector<128x128xf32>
    %127 = arith.addf %112, %126 : vector<128x128xf32>
    %c0_72 = arith.constant 0 : index
    %c0_73 = arith.constant 0 : index
    %128 = vector.load %arg18[%c0_72, %c0_73] : memref<1x128xf32, #tpu.memory_space<vmem>>, vector<1x128xf32>
    %c0_74 = arith.constant 0 : index
    %c0_75 = arith.constant 0 : index
    %129 = vector.load %arg19[%c0_74, %c0_75] : memref<1x128xf32, #tpu.memory_space<vmem>>, vector<1x128xf32>
    %cst_76 = arith.constant dense<0.000000e+00> : vector<128xf32>
    %130 = vector.multi_reduction <add>, %127, %cst_76 [1] : vector<128x128xf32> to vector<128xf32>
    %131 = vector.shape_cast %130 : vector<128xf32> to vector<128x1xf32>
    %cst_77 = arith.constant 1.280000e+02 : f32
    %132 = vector.broadcast %cst_77 : f32 to vector<128x1xf32>
    %133 = arith.divf %131, %132 : vector<128x1xf32>
    %134 = vector.broadcast %133 : vector<128x1xf32> to vector<128x128xf32>
    %135 = arith.subf %127, %134 : vector<128x128xf32>
    %136 = arith.mulf %135, %135 : vector<128x128xf32>
    %cst_78 = arith.constant dense<0.000000e+00> : vector<128xf32>
    %137 = vector.multi_reduction <add>, %136, %cst_78 [1] : vector<128x128xf32> to vector<128xf32>
    %138 = vector.shape_cast %137 : vector<128xf32> to vector<128x1xf32>
    %cst_79 = arith.constant 1.280000e+02 : f32
    %139 = vector.broadcast %cst_79 : f32 to vector<128x1xf32>
    %140 = arith.divf %138, %139 : vector<128x1xf32>
    %141 = vector.broadcast %133 : vector<128x1xf32> to vector<128x128xf32>
    %142 = arith.subf %127, %141 : vector<128x128xf32>
    %cst_80 = arith.constant 9.99999974E-6 : f32
    %143 = vector.broadcast %cst_80 : f32 to vector<128x1xf32>
    %144 = arith.addf %140, %143 : vector<128x1xf32>
    %145 = math.rsqrt %144 : vector<128x1xf32>
    %146 = vector.broadcast %145 : vector<128x1xf32> to vector<128x128xf32>
    %147 = arith.mulf %142, %146 : vector<128x128xf32>
    %148 = vector.broadcast %128 : vector<1x128xf32> to vector<128x128xf32>
    %149 = arith.mulf %147, %148 : vector<128x128xf32>
    %150 = vector.broadcast %129 : vector<1x128xf32> to vector<128x128xf32>
    %151 = arith.addf %149, %150 : vector<128x128xf32>
    %c0_81 = arith.constant 0 : index
    %c0_82 = arith.constant 0 : index
    %c0_83 = arith.constant 0 : index
    %152 = vector.load %arg20[%c0_81, %c0_82, %c0_83] : memref<1x128x128xf32, #tpu.memory_space<vmem>>, vector<1x128x128xf32>
    %153 = vector.shape_cast %152 : vector<1x128x128xf32> to vector<128x128xf32>
    %154 = vector.shape_cast %151 : vector<128x128xf32> to vector<1x128x128xf32>
    tpu.vector_store %arg20[%c0_81, %c0_82, %c0_83], %154 {strides = array<i32>} : memref<1x128x128xf32, #tpu.memory_space<vmem>>, vector<1x128x128xf32>,
    return
  }
  func.func @transform_0(%arg0: i32, %arg1: i32) -> (i32, i32, i32) {
    %c0_i32 = arith.constant 0 : i32
    %c0_i32_0 = arith.constant 0 : i32
    return %arg0, %arg1, %c0_i32 : i32, i32, i32
  }
  func.func @transform_1(%arg0: i32, %arg1: i32) -> (i32, i32, i32) {
    %c0_i32 = arith.constant 0 : i32
    %c0_i32_0 = arith.constant 0 : i32
    %c0_i32_1 = arith.constant 0 : i32
    return %arg0, %c0_i32, %c0_i32_0 : i32, i32, i32
  }
  func.func @transform_2(%arg0: i32, %arg1: i32) -> (i32, i32) {
    %c0_i32 = arith.constant 0 : i32
    %c0_i32_0 = arith.constant 0 : i32
    %c0_i32_1 = arith.constant 0 : i32
    return %c0_i32, %c0_i32_0 : i32, i32
  }
  func.func @transform_3(%arg0: i32, %arg1: i32) -> (i32, i32) {
    %c0_i32 = arith.constant 0 : i32
    %c0_i32_0 = arith.constant 0 : i32
    %c0_i32_1 = arith.constant 0 : i32
    return %c0_i32, %c0_i32_0 : i32, i32
  }
  func.func @transform_4(%arg0: i32, %arg1: i32) -> (i32, i32) {
    %c0_i32 = arith.constant 0 : i32
    %c0_i32_0 = arith.constant 0 : i32
    %c0_i32_1 = arith.constant 0 : i32
    return %c0_i32, %c0_i32_0 : i32, i32
  }
  func.func @transform_5(%arg0: i32, %arg1: i32) -> (i32, i32) {
    %c0_i32 = arith.constant 0 : i32
    %c0_i32_0 = arith.constant 0 : i32
    %c0_i32_1 = arith.constant 0 : i32
    return %c0_i32, %c0_i32_0 : i32, i32
  }
  func.func @transform_6(%arg0: i32, %arg1: i32) -> (i32, i32) {
    %c0_i32 = arith.constant 0 : i32
    %c0_i32_0 = arith.constant 0 : i32
    %c0_i32_1 = arith.constant 0 : i32
    return %c0_i32, %c0_i32_0 : i32, i32
  }
  func.func @transform_7(%arg0: i32, %arg1: i32) -> (i32, i32) {
    %c0_i32 = arith.constant 0 : i32
    %c0_i32_0 = arith.constant 0 : i32
    %c0_i32_1 = arith.constant 0 : i32
    return %c0_i32, %c0_i32_0 : i32, i32
  }
  func.func @transform_8(%arg0: i32, %arg1: i32) -> (i32, i32) {
    %c0_i32 = arith.constant 0 : i32
    %c0_i32_0 = arith.constant 0 : i32
    %c0_i32_1 = arith.constant 0 : i32
    return %c0_i32, %c0_i32_0 : i32, i32
  }
  func.func @transform_9(%arg0: i32, %arg1: i32) -> (i32, i32) {
    %c0_i32 = arith.constant 0 : i32
    %c0_i32_0 = arith.constant 0 : i32
    %c0_i32_1 = arith.constant 0 : i32
    return %c0_i32, %c0_i32_0 : i32, i32
  }
  func.func @transform_10(%arg0: i32, %arg1: i32) -> (i32, i32) {
    %c0_i32 = arith.constant 0 : i32
    %c0_i32_0 = arith.constant 0 : i32
    %c0_i32_1 = arith.constant 0 : i32
    return %c0_i32, %c0_i32_0 : i32, i32
  }
  func.func @transform_11(%arg0: i32, %arg1: i32) -> (i32, i32) {
    %c0_i32 = arith.constant 0 : i32
    %c0_i32_0 = arith.constant 0 : i32
    %c0_i32_1 = arith.constant 0 : i32
    return %c0_i32, %c0_i32_0 : i32, i32
  }
  func.func @transform_12(%arg0: i32, %arg1: i32) -> (i32, i32) {
    %c0_i32 = arith.constant 0 : i32
    %c0_i32_0 = arith.constant 0 : i32
    %c0_i32_1 = arith.constant 0 : i32
    return %c0_i32, %c0_i32_0 : i32, i32
  }
  func.func @transform_13(%arg0: i32, %arg1: i32) -> (i32, i32) {
    %c0_i32 = arith.constant 0 : i32
    %c0_i32_0 = arith.constant 0 : i32
    %c0_i32_1 = arith.constant 0 : i32
    return %c0_i32, %c0_i32_0 : i32, i32
  }
  func.func @transform_14(%arg0: i32, %arg1: i32) -> (i32, i32) {
    %c0_i32 = arith.constant 0 : i32
    %c0_i32_0 = arith.constant 0 : i32
    %c0_i32_1 = arith.constant 0 : i32
    return %c0_i32, %c0_i32_0 : i32, i32
  }
  func.func @transform_15(%arg0: i32, %arg1: i32) -> (i32, i32) {
    %c0_i32 = arith.constant 0 : i32
    %c0_i32_0 = arith.constant 0 : i32
    %c0_i32_1 = arith.constant 0 : i32
    return %c0_i32, %c0_i32_0 : i32, i32
  }
  func.func @transform_16(%arg0: i32, %arg1: i32) -> (i32, i32) {
    %c0_i32 = arith.constant 0 : i32
    %c0_i32_0 = arith.constant 0 : i32
    %c0_i32_1 = arith.constant 0 : i32
    return %c0_i32, %c0_i32_0 : i32, i32
  }
  func.func @transform_17(%arg0: i32, %arg1: i32) -> (i32, i32) {
    %c0_i32 = arith.constant 0 : i32
    %c0_i32_0 = arith.constant 0 : i32
    %c0_i32_1 = arith.constant 0 : i32
    return %c0_i32, %c0_i32_0 : i32, i32
  }
  func.func @transform_18(%arg0: i32, %arg1: i32) -> (i32, i32, i32) {
    %c0_i32 = arith.constant 0 : i32
    %c0_i32_0 = arith.constant 0 : i32
    return %arg0, %arg1, %c0_i32 : i32, i32, i32
  }
}

</mosaic_0001>

<llo_original>
// kernel: tpu_custom_call.1
$region0: #{tpu_custom_call.1}
  #allocation0 [shape = 'u32[]', space=smem, size = 0x4, offset = 0x4, fixed_abs, tag = 'smem constant byte address 0x4 - core index']
  #allocation1 [shape = 'u32[144,128]{1,0:T(1,128)}', space=vmem, size = 0x12000, scoped, tag = 'internal scratch']
  #allocation2 [shape = 'bf16[256,128]{1,0:T(16,128)(2,1)}', space=vmem, size = 0x10000, scoped, tag = 'scratch operand']
  #allocation3 [shape = 'bf16[256,128]{1,0:T(16,128)(2,1)}', space=vmem, size = 0x10000, scoped, tag = 'scratch operand']
  #allocation4 [shape = 'bf16[128,128]{1,0:T(16,128)(2,1)}', space=vmem, size = 0x8000, scoped, tag = 'scratch operand']
  %s0 = inlined_call_operand.hbm [shape: f32[2,256,128], index: 0, kind: input, shape index: {}]
  %s1 = inlined_call_operand.hbm [shape: bf16[2,256,128], index: 1, kind: input, shape index: {}]
  %s2 = inlined_call_operand.hbm [shape: bf16[128,128], index: 2, kind: input, shape index: {}]
  %s3 = inlined_call_operand.vmem [shape: f32[1,128], index: 3, kind: input, shape index: {}]
  %s4 = inlined_call_operand.hbm [shape: bf16[128,128], index: 4, kind: input, shape index: {}]
  %s5 = inlined_call_operand.vmem [shape: f32[1,128], index: 5, kind: input, shape index: {}]
  %s6 = inlined_call_operand.hbm [shape: bf16[128,128], index: 6, kind: input, shape index: {}]
  %s7 = inlined_call_operand.vmem [shape: f32[1,128], index: 7, kind: input, shape index: {}]
  %s8 = inlined_call_operand.hbm [shape: bf16[128,128], index: 8, kind: input, shape index: {}]
  %s9 = inlined_call_operand.vmem [shape: f32[1,128], index: 9, kind: input, shape index: {}]
  %s10 = inlined_call_operand.vmem [shape: f32[1,128], index: 10, kind: input, shape index: {}]
  %s11 = inlined_call_operand.vmem [shape: f32[1,128], index: 11, kind: input, shape index: {}]
  %s12 = inlined_call_operand.hbm [shape: bf16[128,256], index: 12, kind: input, shape index: {}]
  %s13 = inlined_call_operand.vmem [shape: f32[1,256], index: 13, kind: input, shape index: {}]
  %s14 = inlined_call_operand.hbm [shape: bf16[256,128], index: 14, kind: input, shape index: {}]
  %s15 = inlined_call_operand.vmem [shape: f32[1,128], index: 15, kind: input, shape index: {}]
  %s16 = inlined_call_operand.vmem [shape: f32[1,128], index: 16, kind: input, shape index: {}]
  %s17 = inlined_call_operand.vmem [shape: f32[1,128], index: 17, kind: input, shape index: {}]
  %s18 = inlined_call_operand.hbm [shape: f32[2,256,128], index: 18, kind: output, shape index: {}]
  %s19 = sld [smem:[#allocation0]]
  $region141: #{tpu_custom_call.1} parent=0
    _
  %s21 = ssub.s32 1, %s19
  %s22 = scalar_select 0, %s21, %s19
  $region1: #{tpu_custom_call.1} parent=0
    #allocation5 [shape = 'u8[131072]{0}', space=vmem, size = 0x20000, scoped, tag = 'input window, operand 0']
    #allocation6 [shape = 's32[2]{0}', space=sflag, size = 0x8, scoped, tag = 'scoped memory for tpu_custom_call.1']
    #allocation7 [shape = 's32[2]{0}', space=sflag, size = 0x8, scoped, tag = 'scoped memory for tpu_custom_call.1']
    #allocation8 [shape = 'u8[131072]{0}', space=vmem, size = 0x20000, scoped, tag = 'input window, operand 1']
    #allocation9 [shape = 's32[2]{0}', space=sflag, size = 0x8, scoped, tag = 'scoped memory for tpu_custom_call.1']
    #allocation10 [shape = 'u8[32768]{0}', space=vmem, size = 0x8000, scoped, tag = 'input window, operand 2, single buffered']
    #allocation11 [shape = 'u8[32768]{0}', space=vmem, size = 0x8000, scoped, tag = 'input window, operand 4, single buffered']
    #allocation12 [shape = 's32[1]{0}', space=sflag, size = 0x4, scoped, tag = 'scoped memory for tpu_custom_call.1']
    #allocation13 [shape = 'u8[32768]{0}', space=vmem, size = 0x8000, scoped, tag = 'input window, operand 6, single buffered']
    #allocation14 [shape = 'u8[32768]{0}', space=vmem, size = 0x8000, scoped, tag = 'input window, operand 8, single buffered']
    #allocation15 [shape = 's32[1]{0}', space=sflag, size = 0x4, scoped, tag = 'scoped memory for tpu_custom_call.1']
    #allocation16 [shape = 'u8[65536]{0}', space=vmem, size = 0x10000, scoped, tag = 'input window, operand 12, single buffered']
    #allocation17 [shape = 'u8[65536]{0}', space=vmem, size = 0x10000, scoped, tag = 'input window, operand 14, single buffered']
    #allocation18 [shape = 's32[1]{0}', space=sflag, size = 0x4, scoped, tag = 'scoped memory for tpu_custom_call.1']
    #allocation19 [shape = 'u8[131072]{0}', space=vmem, size = 0x20000, scoped, tag = 'output window, operand 0']
    %23 = vsyncpa [#allocation6], 0
    %s24 = scalar_lea.sflag [#allocation6], 1
    %25 = vsyncpa %s24, 0
    %26 = vsyncpa [#allocation9], 0
    %s27 = scalar_lea.sflag [#allocation9], 1
    %28 = vsyncpa %s27, 0
    %29 = vsyncpa [#allocation12], 0
    %30 = vsyncpa [#allocation15], 0
    %31 = vsyncpa [#allocation18], 0
    %32 = vsyncpa [#allocation7], 0
    %s33 = scalar_lea.sflag [#allocation7], 1
    %34 = vsyncpa %s33, 0
    loop: start=0, step=1, limit=6
    $region2: #{tpu_custom_call.1} parent=1 // loop_pre_header
      _
    $region3: #{tpu_custom_call.1} parent=1 // loop_header
      %s36 = sphi 0, %s40
      %p37 = scmp.ge.s32.totalorder %s36, 6
      %s43 = sphi 0, %s55
      %s44 = sphi 0, %s51
      %s45 = sphi 0, %s43
      %s46 = sphi 0, %s44
      %s47 = sphi 0, %s45
      %s48 = sphi 0, %s46
      %s60 = sphi 0, %s62
      %s63 = sphi 0, %s60
      %s64 = sphi 0, %s63
      %s80 = sphi 0, %s64
      %s86 = sphi 0, %s88
      %s89 = sphi 0, %s86
      %s90 = sphi 0, %s89
      %s106 = sphi 0, %s90
      %s110 = sphi 0, %s110
      %s112 = sphi 0, %s110
      %s113 = sphi 0, %s112
      %s127 = sphi 0, %s113
      %s131 = sphi 0, %s131
      %s133 = sphi 0, %s131
      %s134 = sphi 0, %s133
      %s148 = sphi 0, %s134
      %s152 = sphi 0, %s152
      %s154 = sphi 0, %s152
      %s155 = sphi 0, %s154
      %s169 = sphi 0, %s155
      %s173 = sphi 0, %s173
      %s175 = sphi 0, %s173
      %s176 = sphi 0, %s175
      %s190 = sphi 0, %s176
      %s194 = sphi 0, %s194
      %s196 = sphi 0, %s194
      %s197 = sphi 0, %s196
      %s211 = sphi 0, %s197
      %s215 = sphi 0, %s215
      %s217 = sphi 0, %s215
      %s218 = sphi 0, %s217
      %s232 = sphi 0, %s218
      %s236 = sphi 0, %s236
      %s238 = sphi 0, %s236
      %s239 = sphi 0, %s238
      %s253 = sphi 0, %s239
      %s257 = sphi 0, %s257
      %s259 = sphi 0, %s257
      %s260 = sphi 0, %s259
      %s274 = sphi 0, %s260
      %s278 = sphi 0, %s278
      %s280 = sphi 0, %s278
      %s281 = sphi 0, %s280
      %s295 = sphi 0, %s281
      %s299 = sphi 0, %s299
      %s301 = sphi 0, %s299
      %s302 = sphi 0, %s301
      %s316 = sphi 0, %s302
      %s320 = sphi 0, %s320
      %s322 = sphi 0, %s320
      %s323 = sphi 0, %s322
      %s337 = sphi 0, %s323
      %s341 = sphi 0, %s341
      %s343 = sphi 0, %s341
      %s344 = sphi 0, %s343
      %s358 = sphi 0, %s344
      %s362 = sphi 0, %s362
      %s364 = sphi 0, %s362
      %s365 = sphi 0, %s364
      %s379 = sphi 0, %s365
      %s383 = sphi 0, %s383
      %s385 = sphi 0, %s383
      %s386 = sphi 0, %s385
      %s400 = sphi 0, %s386
      %s404 = sphi 0, %s404
      %s406 = sphi 0, %s404
      %s407 = sphi 0, %s406
      %s421 = sphi 0, %s407
      %s425 = sphi 0, %s425
      %s427 = sphi 0, %s425
      %s428 = sphi 0, %s427
      %s442 = sphi 0, %s428
      %s450 = sphi 0, %s452
      %s453 = sphi 0, %s450
      %s454 = sphi 0, %s453
      %s470 = sphi 0, %s454
    $region4: #{tpu_custom_call.1} parent=1 // loop_header_branch
      %39 = sbr.rel (%p37) target = $region8
    $region5: #{tpu_custom_call.1} parent=1 // loop_body
      %s41 = ssub.s32 %s36, 1
      %s42 = ssub.s32 %s36, 2
      %s49 = sadd.s32 1, %s44
      %p50 = scmp.ge.s32.totalorder %s49, 2
      %s51 = scalar_select %p50, 0, %s49
      %s52 = sadd.s32 1, %s43
      %s53 = scalar_select %p50, %s52, %s43
      %p54 = scmp.ge.s32.totalorder %s53, 2
      %s55 = scalar_select %p54, 0, %s53
      %s56 = ssub.s32 %s43, %s55
      %s57 = ssub.s32 %s44, %s51
      %s58 = sor.u32 %s56, %s57
      %p59 = scmp.eq.s32.totalorder %s58, 0
      %s61 = sadd.s32 %s60, 1
      %s62 = scalar_select %p59, %s60, %s61
      %p65 = pneg %p59
      %p66 = scmp.eq.s32.totalorder %s36, 3
      %p67 = por %p65, %p66
      %p68 = scmp.ne.s32.totalorder %s60, %s63
      %p69 = scmp.eq.s32.totalorder %s36, 0
      %p70 = por %p68, %p69
      %p71 = scmp.ne.s32.totalorder %s60, %s63
      %p72 = scmp.eq.s32.totalorder %s41, 3
      %p73 = por %p71, %p72
      %p74 = scmp.ne.s32.totalorder %s63, %s64
      %p75 = scmp.eq.s32.totalorder %s41, 0
      %p76 = por %p74, %p75
      %p77 = scmp.ne.s32.totalorder %s63, %s64
      %p78 = scmp.eq.s32.totalorder %s42, 3
      %p79 = por %p77, %p78
      %p81 = scmp.ne.s32.totalorder %s64, %s80
      %p82 = scmp.eq.s32.totalorder %s42, 0
      %p83 = por %p81, %p82
      %s84 = ssub.s32 %s43, %s55
      %p85 = scmp.eq.s32.totalorder %s84, 0
      %s87 = sadd.s32 %s86, 1
      %s88 = scalar_select %p85, %s86, %s87
      %p91 = pneg %p85
      %p92 = scmp.eq.s32.totalorder %s36, 3
      %p93 = por %p91, %p92
      %p94 = scmp.ne.s32.totalorder %s86, %s89
      %p95 = scmp.eq.s32.totalorder %s36, 0
      %p96 = por %p94, %p95
      %p97 = scmp.ne.s32.totalorder %s86, %s89
      %p98 = scmp.eq.s32.totalorder %s41, 3
      %p99 = por %p97, %p98
      %p100 = scmp.ne.s32.totalorder %s89, %s90
      %p101 = scmp.eq.s32.totalorder %s41, 0
      %p102 = por %p100, %p101
      %p103 = scmp.ne.s32.totalorder %s89, %s90
      %p104 = scmp.eq.s32.totalorder %s42, 3
      %p105 = por %p103, %p104
      %p107 = scmp.ne.s32.totalorder %s90, %s106
      %p108 = scmp.eq.s32.totalorder %s42, 0
      %p109 = por %p107, %p108
      %s111 = sadd.s32 %s110, 1
      %p114 = scmp.eq.s32.totalorder %s36, 3
      %p115 = scmp.ne.s32.totalorder %s110, %s112
      %p116 = scmp.eq.s32.totalorder %s36, 0
      %p117 = por %p115, %p116
      %p118 = scmp.ne.s32.totalorder %s110, %s112
      %p119 = scmp.eq.s32.totalorder %s41, 3
      %p120 = por %p118, %p119
      %p121 = scmp.ne.s32.totalorder %s112, %s113
      %p122 = scmp.eq.s32.totalorder %s41, 0
      %p123 = por %p121, %p122
      %p124 = scmp.ne.s32.totalorder %s112, %s113
      %p125 = scmp.eq.s32.totalorder %s42, 3
      %p126 = por %p124, %p125
      %p128 = scmp.ne.s32.totalorder %s113, %s127
      %p129 = scmp.eq.s32.totalorder %s42, 0
      %p130 = por %p128, %p129
      %s132 = sadd.s32 %s131, 1
      %p135 = scmp.eq.s32.totalorder %s36, 3
      %p136 = scmp.ne.s32.totalorder %s131, %s133
      %p137 = scmp.eq.s32.totalorder %s36, 0
      %p138 = por %p136, %p137
      %p139 = scmp.ne.s32.totalorder %s131, %s133
      %p140 = scmp.eq.s32.totalorder %s41, 3
      %p141 = por %p139, %p140
      %p142 = scmp.ne.s32.totalorder %s133, %s134
      %p143 = scmp.eq.s32.totalorder %s41, 0
      %p144 = por %p142, %p143
      %p145 = scmp.ne.s32.totalorder %s133, %s134
      %p146 = scmp.eq.s32.totalorder %s42, 3
      %p147 = por %p145, %p146
      %p149 = scmp.ne.s32.totalorder %s134, %s148
      %p150 = scmp.eq.s32.totalorder %s42, 0
      %p151 = por %p149, %p150
      %s153 = sadd.s32 %s152, 1
      %p156 = scmp.eq.s32.totalorder %s36, 3
      %p157 = scmp.ne.s32.totalorder %s152, %s154
      %p158 = scmp.eq.s32.totalorder %s36, 0
      %p159 = por %p157, %p158
      %p160 = scmp.ne.s32.totalorder %s152, %s154
      %p161 = scmp.eq.s32.totalorder %s41, 3
      %p162 = por %p160, %p161
      %p163 = scmp.ne.s32.totalorder %s154, %s155
      %p164 = scmp.eq.s32.totalorder %s41, 0
      %p165 = por %p163, %p164
      %p166 = scmp.ne.s32.totalorder %s154, %s155
      %p167 = scmp.eq.s32.totalorder %s42, 3
      %p168 = por %p166, %p167
      %p170 = scmp.ne.s32.totalorder %s155, %s169
      %p171 = scmp.eq.s32.totalorder %s42, 0
      %p172 = por %p170, %p171
      %s174 = sadd.s32 %s173, 1
      %p177 = scmp.eq.s32.totalorder %s36, 3
      %p178 = scmp.ne.s32.totalorder %s173, %s175
      %p179 = scmp.eq.s32.totalorder %s36, 0
      %p180 = por %p178, %p179
      %p181 = scmp.ne.s32.totalorder %s173, %s175
      %p182 = scmp.eq.s32.totalorder %s41, 3
      %p183 = por %p181, %p182
      %p184 = scmp.ne.s32.totalorder %s175, %s176
      %p185 = scmp.eq.s32.totalorder %s41, 0
      %p186 = por %p184, %p185
      %p187 = scmp.ne.s32.totalorder %s175, %s176
      %p188 = scmp.eq.s32.totalorder %s42, 3
      %p189 = por %p187, %p188
      %p191 = scmp.ne.s32.totalorder %s176, %s190
      %p192 = scmp.eq.s32.totalorder %s42, 0
      %p193 = por %p191, %p192
      %s195 = sadd.s32 %s194, 1
      %p198 = scmp.eq.s32.totalorder %s36, 3
      %p199 = scmp.ne.s32.totalorder %s194, %s196
      %p200 = scmp.eq.s32.totalorder %s36, 0
      %p201 = por %p199, %p200
      %p202 = scmp.ne.s32.totalorder %s194, %s196
      %p203 = scmp.eq.s32.totalorder %s41, 3
      %p204 = por %p202, %p203
      %p205 = scmp.ne.s32.totalorder %s196, %s197
      %p206 = scmp.eq.s32.totalorder %s41, 0
      %p207 = por %p205, %p206
      %p208 = scmp.ne.s32.totalorder %s196, %s197
      %p209 = scmp.eq.s32.totalorder %s42, 3
      %p210 = por %p208, %p209
      %p212 = scmp.ne.s32.totalorder %s197, %s211
      %p213 = scmp.eq.s32.totalorder %s42, 0
      %p214 = por %p212, %p213
      %s216 = sadd.s32 %s215, 1
      %p219 = scmp.eq.s32.totalorder %s36, 3
      %p220 = scmp.ne.s32.totalorder %s215, %s217
      %p221 = scmp.eq.s32.totalorder %s36, 0
      %p222 = por %p220, %p221
      %p223 = scmp.ne.s32.totalorder %s215, %s217
      %p224 = scmp.eq.s32.totalorder %s41, 3
      %p225 = por %p223, %p224
      %p226 = scmp.ne.s32.totalorder %s217, %s218
      %p227 = scmp.eq.s32.totalorder %s41, 0
      %p228 = por %p226, %p227
      %p229 = scmp.ne.s32.totalorder %s217, %s218
      %p230 = scmp.eq.s32.totalorder %s42, 3
      %p231 = por %p229, %p230
      %p233 = scmp.ne.s32.totalorder %s218, %s232
      %p234 = scmp.eq.s32.totalorder %s42, 0
      %p235 = por %p233, %p234
      %s237 = sadd.s32 %s236, 1
      %p240 = scmp.eq.s32.totalorder %s36, 3
      %p241 = scmp.ne.s32.totalorder %s236, %s238
      %p242 = scmp.eq.s32.totalorder %s36, 0
      %p243 = por %p241, %p242
      %p244 = scmp.ne.s32.totalorder %s236, %s238
      %p245 = scmp.eq.s32.totalorder %s41, 3
      %p246 = por %p244, %p245
      %p247 = scmp.ne.s32.totalorder %s238, %s239
      %p248 = scmp.eq.s32.totalorder %s41, 0
      %p249 = por %p247, %p248
      %p250 = scmp.ne.s32.totalorder %s238, %s239
      %p251 = scmp.eq.s32.totalorder %s42, 3
      %p252 = por %p250, %p251
      %p254 = scmp.ne.s32.totalorder %s239, %s253
      %p255 = scmp.eq.s32.totalorder %s42, 0
      %p256 = por %p254, %p255
      %s258 = sadd.s32 %s257, 1
      %p261 = scmp.eq.s32.totalorder %s36, 3
      %p262 = scmp.ne.s32.totalorder %s257, %s259
      %p263 = scmp.eq.s32.totalorder %s36, 0
      %p264 = por %p262, %p263
      %p265 = scmp.ne.s32.totalorder %s257, %s259
      %p266 = scmp.eq.s32.totalorder %s41, 3
      %p267 = por %p265, %p266
      %p268 = scmp.ne.s32.totalorder %s259, %s260
      %p269 = scmp.eq.s32.totalorder %s41, 0
      %p270 = por %p268, %p269
      %p271 = scmp.ne.s32.totalorder %s259, %s260
      %p272 = scmp.eq.s32.totalorder %s42, 3
      %p273 = por %p271, %p272
      %p275 = scmp.ne.s32.totalorder %s260, %s274
      %p276 = scmp.eq.s32.totalorder %s42, 0
      %p277 = por %p275, %p276
      %s279 = sadd.s32 %s278, 1
      %p282 = scmp.eq.s32.totalorder %s36, 3
      %p283 = scmp.ne.s32.totalorder %s278, %s280
      %p284 = scmp.eq.s32.totalorder %s36, 0
      %p285 = por %p283, %p284
      %p286 = scmp.ne.s32.totalorder %s278, %s280
      %p287 = scmp.eq.s32.totalorder %s41, 3
      %p288 = por %p286, %p287
      %p289 = scmp.ne.s32.totalorder %s280, %s281
      %p290 = scmp.eq.s32.totalorder %s41, 0
      %p291 = por %p289, %p290
      %p292 = scmp.ne.s32.totalorder %s280, %s281
      %p293 = scmp.eq.s32.totalorder %s42, 3
      %p294 = por %p292, %p293
      %p296 = scmp.ne.s32.totalorder %s281, %s295
      %p297 = scmp.eq.s32.totalorder %s42, 0
      %p298 = por %p296, %p297
      %s300 = sadd.s32 %s299, 1
      %p303 = scmp.eq.s32.totalorder %s36, 3
      %p304 = scmp.ne.s32.totalorder %s299, %s301
      %p305 = scmp.eq.s32.totalorder %s36, 0
      %p306 = por %p304, %p305
      %p307 = scmp.ne.s32.totalorder %s299, %s301
      %p308 = scmp.eq.s32.totalorder %s41, 3
      %p309 = por %p307, %p308
      %p310 = scmp.ne.s32.totalorder %s301, %s302
      %p311 = scmp.eq.s32.totalorder %s41, 0
      %p312 = por %p310, %p311
      %p313 = scmp.ne.s32.totalorder %s301, %s302
      %p314 = scmp.eq.s32.totalorder %s42, 3
      %p315 = por %p313, %p314
      %p317 = scmp.ne.s32.totalorder %s302, %s316
      %p318 = scmp.eq.s32.totalorder %s42, 0
      %p319 = por %p317, %p318
      %s321 = sadd.s32 %s320, 1
      %p324 = scmp.eq.s32.totalorder %s36, 3
      %p325 = scmp.ne.s32.totalorder %s320, %s322
      %p326 = scmp.eq.s32.totalorder %s36, 0
      %p327 = por %p325, %p326
      %p328 = scmp.ne.s32.totalorder %s320, %s322
      %p329 = scmp.eq.s32.totalorder %s41, 3
      %p330 = por %p328, %p329
      %p331 = scmp.ne.s32.totalorder %s322, %s323
      %p332 = scmp.eq.s32.totalorder %s41, 0
      %p333 = por %p331, %p332
      %p334 = scmp.ne.s32.totalorder %s322, %s323
      %p335 = scmp.eq.s32.totalorder %s42, 3
      %p336 = por %p334, %p335
      %p338 = scmp.ne.s32.totalorder %s323, %s337
      %p339 = scmp.eq.s32.totalorder %s42, 0
      %p340 = por %p338, %p339
      %s342 = sadd.s32 %s341, 1
      %p345 = scmp.eq.s32.totalorder %s36, 3
      %p346 = scmp.ne.s32.totalorder %s341, %s343
      %p347 = scmp.eq.s32.totalorder %s36, 0
      %p348 = por %p346, %p347
      %p349 = scmp.ne.s32.totalorder %s341, %s343
      %p350 = scmp.eq.s32.totalorder %s41, 3
      %p351 = por %p349, %p350
      %p352 = scmp.ne.s32.totalorder %s343, %s344
      %p353 = scmp.eq.s32.totalorder %s41, 0
      %p354 = por %p352, %p353
      %p355 = scmp.ne.s32.totalorder %s343, %s344
      %p356 = scmp.eq.s32.totalorder %s42, 3
      %p357 = por %p355, %p356
      %p359 = scmp.ne.s32.totalorder %s344, %s358
      %p360 = scmp.eq.s32.totalorder %s42, 0
      %p361 = por %p359, %p360
      %s363 = sadd.s32 %s362, 1
      %p366 = scmp.eq.s32.totalorder %s36, 3
      %p367 = scmp.ne.s32.totalorder %s362, %s364
      %p368 = scmp.eq.s32.totalorder %s36, 0
      %p369 = por %p367, %p368
      %p370 = scmp.ne.s32.totalorder %s362, %s364
      %p371 = scmp.eq.s32.totalorder %s41, 3
      %p372 = por %p370, %p371
      %p373 = scmp.ne.s32.totalorder %s364, %s365
      %p374 = scmp.eq.s32.totalorder %s41, 0
      %p375 = por %p373, %p374
      %p376 = scmp.ne.s32.totalorder %s364, %s365
      %p377 = scmp.eq.s32.totalorder %s42, 3
      %p378 = por %p376, %p377
      %p380 = scmp.ne.s32.totalorder %s365, %s379
      %p381 = scmp.eq.s32.totalorder %s42, 0
      %p382 = por %p380, %p381
      %s384 = sadd.s32 %s383, 1
      %p387 = scmp.eq.s32.totalorder %s36, 3
      %p388 = scmp.ne.s32.totalorder %s383, %s385
      %p389 = scmp.eq.s32.totalorder %s36, 0
      %p390 = por %p388, %p389
      %p391 = scmp.ne.s32.totalorder %s383, %s385
      %p392 = scmp.eq.s32.totalorder %s41, 3
      %p393 = por %p391, %p392
      %p394 = scmp.ne.s32.totalorder %s385, %s386
      %p395 = scmp.eq.s32.totalorder %s41, 0
      %p396 = por %p394, %p395
      %p397 = scmp.ne.s32.totalorder %s385, %s386
      %p398 = scmp.eq.s32.totalorder %s42, 3
      %p399 = por %p397, %p398
      %p401 = scmp.ne.s32.totalorder %s386, %s400
      %p402 = scmp.eq.s32.totalorder %s42, 0
      %p403 = por %p401, %p402
      %s405 = sadd.s32 %s404, 1
      %p408 = scmp.eq.s32.totalorder %s36, 3
      %p409 = scmp.ne.s32.totalorder %s404, %s406
      %p410 = scmp.eq.s32.totalorder %s36, 0
      %p411 = por %p409, %p410
      %p412 = scmp.ne.s32.totalorder %s404, %s406
      %p413 = scmp.eq.s32.totalorder %s41, 3
      %p414 = por %p412, %p413
      %p415 = scmp.ne.s32.totalorder %s406, %s407
      %p416 = scmp.eq.s32.totalorder %s41, 0
      %p417 = por %p415, %p416
      %p418 = scmp.ne.s32.totalorder %s406, %s407
      %p419 = scmp.eq.s32.totalorder %s42, 3
      %p420 = por %p418, %p419
      %p422 = scmp.ne.s32.totalorder %s407, %s421
      %p423 = scmp.eq.s32.totalorder %s42, 0
      %p424 = por %p422, %p423
      %s426 = sadd.s32 %s425, 1
      %p429 = scmp.eq.s32.totalorder %s36, 3
      %p430 = scmp.ne.s32.totalorder %s425, %s427
      %p431 = scmp.eq.s32.totalorder %s36, 0
      %p432 = por %p430, %p431
      %p433 = scmp.ne.s32.totalorder %s425, %s427
      %p434 = scmp.eq.s32.totalorder %s41, 3
      %p435 = por %p433, %p434
      %p436 = scmp.ne.s32.totalorder %s427, %s428
      %p437 = scmp.eq.s32.totalorder %s41, 0
      %p438 = por %p436, %p437
      %p439 = scmp.ne.s32.totalorder %s427, %s428
      %p440 = scmp.eq.s32.totalorder %s42, 3
      %p441 = por %p439, %p440
      %p443 = scmp.ne.s32.totalorder %s428, %s442
      %p444 = scmp.eq.s32.totalorder %s42, 0
      %p445 = por %p443, %p444
      %s446 = ssub.s32 %s43, %s55
      %s447 = ssub.s32 %s44, %s51
      %s448 = sor.u32 %s446, %s447
      %p449 = scmp.eq.s32.totalorder %s448, 0
      %s451 = sadd.s32 %s450, 1
      %s452 = scalar_select %p449, %s450, %s451
      %p455 = pneg %p449
      %p456 = scmp.eq.s32.totalorder %s36, 3
      %p457 = por %p455, %p456
      %p458 = scmp.ne.s32.totalorder %s450, %s453
      %p459 = scmp.eq.s32.totalorder %s36, 0
      %p460 = por %p458, %p459
      %p461 = scmp.ne.s32.totalorder %s450, %s453
      %p462 = scmp.eq.s32.totalorder %s41, 3
      %p463 = por %p461, %p462
      %p464 = scmp.ne.s32.totalorder %s453, %s454
      %p465 = scmp.eq.s32.totalorder %s41, 0
      %p466 = por %p464, %p465
      %p467 = scmp.ne.s32.totalorder %s453, %s454
      %p468 = scmp.eq.s32.totalorder %s42, 3
      %p469 = por %p467, %p468
      %p471 = scmp.ne.s32.totalorder %s454, %s470
      %p472 = scmp.eq.s32.totalorder %s42, 0
      %p473 = por %p471, %p472
      %p474 = scmp.le.s32.totalorder 1, %s36
      %p475 = scmp.lt.s32.totalorder %s36, 5
      %p476 = pnand %p474, %p475
      %p477 = pneg %p476
      // Predicated region
      $region9: #{tpu_custom_call.1} parent=5 // pred_check
        _
      $region10: #{tpu_custom_call.1} parent=5 // pred_check_branch
        %479 = sbr.rel (%p476) target = $region12
      $region11: #{tpu_custom_call.1} parent=5 // pred_region
        %s480 = ssub.s32 %s36, 1
        // Predicated region
        $region13: #{tpu_custom_call.1} parent=11 // pred_check
          %p481 = pneg %p123
        $region14: #{tpu_custom_call.1} parent=11 // pred_check_branch
          %483 = sbr.rel (%p481) target = $region16
        $region15: #{tpu_custom_call.1} parent=11 // pred_region
          %s485 = ssub.s32 1024, 1024
          %486 = vsyncadd [#allocation9], %s485
          %s487 = sshll.u32 [#allocation10], 4
          %s488 = int_to_ptr.vmem [resolvable:$true] %s487
          %493 = dma.hbm_to_vmem [thread:$0]  %s2, 1024, %s488, [#allocation9], 64, 64, 4
        $region16: #{tpu_custom_call.1} parent=11 // pred_fallthru
          _
        // Predicated region
        $region17: #{tpu_custom_call.1} parent=11 // pred_check
          %p494 = pneg %p144
        $region18: #{tpu_custom_call.1} parent=11 // pred_check_branch
          %496 = sbr.rel (%p494) target = $region20
        $region19: #{tpu_custom_call.1} parent=11 // pred_region
          _
        $region20: #{tpu_custom_call.1} parent=11 // pred_fallthru
          _
        // Predicated region
        $region21: #{tpu_custom_call.1} parent=11 // pred_check
          %p497 = pneg %p165
        $region22: #{tpu_custom_call.1} parent=11 // pred_check_branch
          %499 = sbr.rel (%p497) target = $region24
        $region23: #{tpu_custom_call.1} parent=11 // pred_region
          %s501 = ssub.s32 1024, 1024
          %502 = vsyncadd [#allocation12], %s501
          %s503 = sshll.u32 [#allocation11], 4
          %s504 = int_to_ptr.vmem [resolvable:$true] %s503
          %509 = dma.hbm_to_vmem [thread:$0]  %s4, 1024, %s504, [#allocation12], 64, 64, 4
        $region24: #{tpu_custom_call.1} parent=11 // pred_fallthru
          _
        // Predicated region
        $region25: #{tpu_custom_call.1} parent=11 // pred_check
          %p510 = pneg %p186
        $region26: #{tpu_custom_call.1} parent=11 // pred_check_branch
          %512 = sbr.rel (%p510) target = $region28
        $region27: #{tpu_custom_call.1} parent=11 // pred_region
          _
        $region28: #{tpu_custom_call.1} parent=11 // pred_fallthru
          _
        // Predicated region
        $region29: #{tpu_custom_call.1} parent=11 // pred_check
          %p513 = pneg %p207
        $region30: #{tpu_custom_call.1} parent=11 // pred_check_branch
          %515 = sbr.rel (%p513) target = $region32
        $region31: #{tpu_custom_call.1} parent=11 // pred_region
          %s517 = ssub.s32 1024, 1024
          %518 = vsyncadd [#allocation12], %s517
          %s519 = sshll.u32 [#allocation13], 4
          %s520 = int_to_ptr.vmem [resolvable:$true] %s519
          %525 = dma.hbm_to_vmem [thread:$0]  %s6, 1024, %s520, [#allocation12], 64, 64, 4
        $region32: #{tpu_custom_call.1} parent=11 // pred_fallthru
          _
        // Predicated region
        $region33: #{tpu_custom_call.1} parent=11 // pred_check
          %p526 = pneg %p228
        $region34: #{tpu_custom_call.1} parent=11 // pred_check_branch
          %528 = sbr.rel (%p526) target = $region36
        $region35: #{tpu_custom_call.1} parent=11 // pred_region
          _
        $region36: #{tpu_custom_call.1} parent=11 // pred_fallthru
          _
        // Predicated region
        $region37: #{tpu_custom_call.1} parent=11 // pred_check
          %p529 = pneg %p249
        $region38: #{tpu_custom_call.1} parent=11 // pred_check_branch
          %531 = sbr.rel (%p529) target = $region40
        $region39: #{tpu_custom_call.1} parent=11 // pred_region
          %s533 = ssub.s32 1024, 1024
          %534 = vsyncadd [#allocation15], %s533
          %s535 = sshll.u32 [#allocation14], 4
          %s536 = int_to_ptr.vmem [resolvable:$true] %s535
          %541 = dma.hbm_to_vmem [thread:$0]  %s8, 1024, %s536, [#allocation15], 64, 64, 4
        $region40: #{tpu_custom_call.1} parent=11 // pred_fallthru
          _
        // Predicated region
        $region41: #{tpu_custom_call.1} parent=11 // pred_check
          %p542 = pneg %p270
        $region42: #{tpu_custom_call.1} parent=11 // pred_check_branch
          %544 = sbr.rel (%p542) target = $region44
        $region43: #{tpu_custom_call.1} parent=11 // pred_region
          _
        $region44: #{tpu_custom_call.1} parent=11 // pred_fallthru
          _
        // Predicated region
        $region45: #{tpu_custom_call.1} parent=11 // pred_check
          %p545 = pneg %p291
        $region46: #{tpu_custom_call.1} parent=11 // pred_check_branch
          %547 = sbr.rel (%p545) target = $region48
        $region47: #{tpu_custom_call.1} parent=11 // pred_region
          _
        $region48: #{tpu_custom_call.1} parent=11 // pred_fallthru
          _
        // Predicated region
        $region49: #{tpu_custom_call.1} parent=11 // pred_check
          %p548 = pneg %p312
        $region50: #{tpu_custom_call.1} parent=11 // pred_check_branch
          %550 = sbr.rel (%p548) target = $region52
        $region51: #{tpu_custom_call.1} parent=11 // pred_region
          _
        $region52: #{tpu_custom_call.1} parent=11 // pred_fallthru
          _
        // Predicated region
        $region53: #{tpu_custom_call.1} parent=11 // pred_check
          %p551 = pneg %p333
        $region54: #{tpu_custom_call.1} parent=11 // pred_check_branch
          %553 = sbr.rel (%p551) target = $region56
        $region55: #{tpu_custom_call.1} parent=11 // pred_region
          %s555 = ssub.s32 2048, 2048
          %556 = vsyncadd [#allocation15], %s555
          %s557 = sshll.u32 [#allocation16], 4
          %s558 = int_to_ptr.vmem [resolvable:$true] %s557
          %563 = dma.hbm_to_vmem [thread:$0]  %s12, 2048, %s558, [#allocation15], 128, 128, 8
        $region56: #{tpu_custom_call.1} parent=11 // pred_fallthru
          _
        // Predicated region
        $region57: #{tpu_custom_call.1} parent=11 // pred_check
          %p564 = pneg %p354
        $region58: #{tpu_custom_call.1} parent=11 // pred_check_branch
          %566 = sbr.rel (%p564) target = $region60
        $region59: #{tpu_custom_call.1} parent=11 // pred_region
          _
        $region60: #{tpu_custom_call.1} parent=11 // pred_fallthru
          _
        // Predicated region
        $region61: #{tpu_custom_call.1} parent=11 // pred_check
          %p567 = pneg %p375
        $region62: #{tpu_custom_call.1} parent=11 // pred_check_branch
          %569 = sbr.rel (%p567) target = $region64
        $region63: #{tpu_custom_call.1} parent=11 // pred_region
          %s571 = ssub.s32 2048, 2048
          %572 = vsyncadd [#allocation18], %s571
          %s573 = sshll.u32 [#allocation17], 4
          %s574 = int_to_ptr.vmem [resolvable:$true] %s573
          %579 = dma.hbm_to_vmem [thread:$0]  %s14, 2048, %s574, [#allocation18], 64, 64, 4
        $region64: #{tpu_custom_call.1} parent=11 // pred_fallthru
          _
        // Predicated region
        $region65: #{tpu_custom_call.1} parent=11 // pred_check
          %p580 = pneg %p396
        $region66: #{tpu_custom_call.1} parent=11 // pred_check_branch
          %582 = sbr.rel (%p580) target = $region68
        $region67: #{tpu_custom_call.1} parent=11 // pred_region
          _
        $region68: #{tpu_custom_call.1} parent=11 // pred_fallthru
          _
        // Predicated region
        $region69: #{tpu_custom_call.1} parent=11 // pred_check
          %p583 = pneg %p417
        $region70: #{tpu_custom_call.1} parent=11 // pred_check_branch
          %585 = sbr.rel (%p583) target = $region72
        $region71: #{tpu_custom_call.1} parent=11 // pred_region
          _
        $region72: #{tpu_custom_call.1} parent=11 // pred_fallthru
          _
        // Predicated region
        $region73: #{tpu_custom_call.1} parent=11 // pred_check
          %p586 = pneg %p438
        $region74: #{tpu_custom_call.1} parent=11 // pred_check_branch
          %588 = sbr.rel (%p586) target = $region76
        $region75: #{tpu_custom_call.1} parent=11 // pred_region
          _
        $region76: #{tpu_custom_call.1} parent=11 // pred_fallthru
          _
      $region12: #{tpu_custom_call.1} parent=5 // pred_fallthru
        _
      %p589 = scmp.lt.s32.totalorder %s36, 4
      // Predicated region
      $region77: #{tpu_custom_call.1} parent=5 // pred_check
        %p590 = pneg %p589
      $region78: #{tpu_custom_call.1} parent=5 // pred_check_branch
        %592 = sbr.rel (%p590) target = $region80
      $region79: #{tpu_custom_call.1} parent=5 // pred_region
        // Predicated region
        $region81: #{tpu_custom_call.1} parent=79 // pred_check
          %p593 = pneg %p70
        $region82: #{tpu_custom_call.1} parent=79 // pred_check_branch
          %595 = sbr.rel (%p593) target = $region84
        $region83: #{tpu_custom_call.1} parent=79 // pred_region
          %s596 = sand.u32 %s60, 1
          %s597 = scalar_lea.sflag [#allocation6], %s596
          %s598 = sand.u32 %s60, 1
          %s599 = smul.addr %s598, 128
          %s600 = scalar_lea.vmem [#allocation5], %s599
          %s601 = smul.u32 16, %s44
          %s603 = ssub.s32 2048, 2048
          %604 = vsyncadd %s597, %s603
          %s605 = smul.addr %s43, 32
          %s606 = sadd.s32 %s601, %s605
          %s607 = smul.addr %s606, 128
          %s608 = scalar_lea.hbm %s0, %s607
          %s609 = sshll.u32 %s600, 4
          %s610 = int_to_ptr.vmem [resolvable:$true] %s609
          %615 = dma.hbm_to_vmem [thread:$0]  %s608, 2048, %s610, %s597, 128, 128, 8
        $region84: #{tpu_custom_call.1} parent=79 // pred_fallthru
          _
        // Predicated region
        $region85: #{tpu_custom_call.1} parent=79 // pred_check
          %p616 = pneg %p96
        $region86: #{tpu_custom_call.1} parent=79 // pred_check_branch
          %618 = sbr.rel (%p616) target = $region88
        $region87: #{tpu_custom_call.1} parent=79 // pred_region
          %s619 = sand.u32 %s36, 1
          %s620 = scalar_lea.sflag [#allocation9], %s619
          %s621 = sand.u32 %s86, 1
          %s622 = smul.addr %s621, 128
          %s623 = scalar_lea.vmem [#allocation8], %s622
          %s625 = ssub.s32 2048, 2048
          %626 = vsyncadd %s620, %s625
          %s627 = smul.addr %s43, 32
          %s628 = smul.addr %s627, 64
          %s629 = scalar_lea.hbm %s1, %s628
          %s630 = sshll.u32 %s623, 4
          %s631 = int_to_ptr.vmem [resolvable:$true] %s630
          %636 = dma.hbm_to_vmem [thread:$0]  %s629, 2048, %s631, %s620, 64, 64, 4
        $region88: #{tpu_custom_call.1} parent=79 // pred_fallthru
          _
      $region80: #{tpu_custom_call.1} parent=5 // pred_fallthru
        _
      %p637 = scmp.le.s32.totalorder 1, %s36
      %p638 = scmp.lt.s32.totalorder %s36, 5
      %p639 = pnand %p637, %p638
      %p640 = pneg %p639
      // Predicated region
      $region89: #{tpu_custom_call.1} parent=5 // pred_check
        _
      $region90: #{tpu_custom_call.1} parent=5 // pred_check_branch
        %642 = sbr.rel (%p639) target = $region92
      $region91: #{tpu_custom_call.1} parent=5 // pred_region
        %s643 = ssub.s32 %s36, 1
        %s644 = sand.u32 %s63, 1
        %s645 = scalar_lea.sflag [#allocation6], %s644
        %s646 = sand.u32 %s63, 1
        %s647 = smul.addr %s646, 128
        %s648 = scalar_lea.vmem [#allocation5], %s647
        // Predicated region
        $region93: #{tpu_custom_call.1} parent=91 // pred_check
          %p649 = pneg %p76
        $region94: #{tpu_custom_call.1} parent=91 // pred_check_branch
          %651 = sbr.rel (%p649) target = $region96
        $region95: #{tpu_custom_call.1} parent=91 // pred_region
          %652 = dma.done %s645, 2048
        $region96: #{tpu_custom_call.1} parent=91 // pred_fallthru
          _
        %s653 = sand.u32 %s41, 1
        %s654 = scalar_lea.sflag [#allocation9], %s653
        %s655 = sand.u32 %s89, 1
        %s656 = smul.addr %s655, 128
        %s657 = scalar_lea.vmem [#allocation8], %s656
        // Predicated region
        $region97: #{tpu_custom_call.1} parent=91 // pred_check
          %p658 = pneg %p102
        $region98: #{tpu_custom_call.1} parent=91 // pred_check_branch
          %660 = sbr.rel (%p658) target = $region100
        $region99: #{tpu_custom_call.1} parent=91 // pred_region
          %661 = dma.done %s654, 2048
        $region100: #{tpu_custom_call.1} parent=91 // pred_fallthru
          _
        // Predicated region
        $region101: #{tpu_custom_call.1} parent=91 // pred_check
          %p662 = pneg %p123
        $region102: #{tpu_custom_call.1} parent=91 // pred_check_branch
          %664 = sbr.rel (%p662) target = $region104
        $region103: #{tpu_custom_call.1} parent=91 // pred_region
          %665 = dma.done [#allocation9], 1024
        $region104: #{tpu_custom_call.1} parent=91 // pred_fallthru
          _
        // Predicated region
        $region105: #{tpu_custom_call.1} parent=91 // pred_check
          %p666 = pneg %p165
        $region106: #{tpu_custom_call.1} parent=91 // pred_check_branch
          %668 = sbr.rel (%p666) target = $region108
        $region107: #{tpu_custom_call.1} parent=91 // pred_region
          %669 = dma.done [#allocation12], 1024
        $region108: #{tpu_custom_call.1} parent=91 // pred_fallthru
          _
        // Predicated region
        $region109: #{tpu_custom_call.1} parent=91 // pred_check
          %p670 = pneg %p207
        $region110: #{tpu_custom_call.1} parent=91 // pred_check_branch
          %672 = sbr.rel (%p670) target = $region112
        $region111: #{tpu_custom_call.1} parent=91 // pred_region
          %673 = dma.done [#allocation12], 1024
        $region112: #{tpu_custom_call.1} parent=91 // pred_fallthru
          _
        // Predicated region
        $region113: #{tpu_custom_call.1} parent=91 // pred_check
          %p674 = pneg %p249
        $region114: #{tpu_custom_call.1} parent=91 // pred_check_branch
          %676 = sbr.rel (%p674) target = $region116
        $region115: #{tpu_custom_call.1} parent=91 // pred_region
          %677 = dma.done [#allocation15], 1024
        $region116: #{tpu_custom_call.1} parent=91 // pred_fallthru
          _
        // Predicated region
        $region117: #{tpu_custom_call.1} parent=91 // pred_check
          %p678 = pneg %p333
        $region118: #{tpu_custom_call.1} parent=91 // pred_check_branch
          %680 = sbr.rel (%p678) target = $region120
        $region119: #{tpu_custom_call.1} parent=91 // pred_region
          %681 = dma.done [#allocation15], 2048
        $region120: #{tpu_custom_call.1} parent=91 // pred_fallthru
          _
        // Predicated region
        $region121: #{tpu_custom_call.1} parent=91 // pred_check
          %p682 = pneg %p375
        $region122: #{tpu_custom_call.1} parent=91 // pred_check_branch
          %684 = sbr.rel (%p682) target = $region124
        $region123: #{tpu_custom_call.1} parent=91 // pred_region
          %685 = dma.done [#allocation18], 2048
        $region124: #{tpu_custom_call.1} parent=91 // pred_fallthru
          _
        %s686 = sand.u32 %s63, 1
        %s687 = scalar_lea.sflag [#allocation6], %s686
        %s688 = sand.u32 %s63, 1
        %s689 = smul.addr %s688, 128
        %s690 = scalar_lea.vmem [#allocation5], %s689
        %p691 = pneg %p76
        %p692 = pneg %p73
        %s693 = sand.u32 %s41, 1
        %s694 = scalar_lea.sflag [#allocation9], %s693
        %s695 = sand.u32 %s89, 1
        %s696 = smul.addr %s695, 128
        %s697 = scalar_lea.vmem [#allocation8], %s696
        %p698 = pneg %p102
        %p699 = pneg %p99
        %p700 = pneg %p123
        %p701 = pneg %p120
        %p702 = pneg %p144
        %p703 = pneg %p141
        %p704 = pneg %p165
        %p705 = pneg %p162
        %p706 = pneg %p186
        %p707 = pneg %p183
        %p708 = pneg %p207
        %p709 = pneg %p204
        %p710 = pneg %p228
        %p711 = pneg %p225
        %p712 = pneg %p249
        %p713 = pneg %p246
        %p714 = pneg %p270
        %p715 = pneg %p267
        %p716 = pneg %p291
        %p717 = pneg %p288
        %p718 = pneg %p312
        %p719 = pneg %p309
        %p720 = pneg %p333
        %p721 = pneg %p330
        %p722 = pneg %p354
        %p723 = pneg %p351
        %p724 = pneg %p375
        %p725 = pneg %p372
        %p726 = pneg %p396
        %p727 = pneg %p393
        %p728 = pneg %p417
        %p729 = pneg %p414
        %p730 = pneg %p438
        %p731 = pneg %p435
        %p732 = pneg %p466
        %p733 = pneg %p463
        %s734 = sand.u32 %s453, 1
        %s735 = scalar_lea.sflag [#allocation7], %s734
        %s736 = sand.u32 %s453, 1
        %s737 = smul.addr %s736, 128
        %s738 = scalar_lea.vmem [#allocation19], %s737
        %s739 = smul.u32 16, %s46
        %s740 = smul.u32 16, %s46
        %p742 = scmp.eq.s32.totalorder %s46, 0
        // Predicated region
        $region125: #{tpu_custom_call.1} parent=91 // pred_check
          %p743 = pneg %p742
        $region126: #{tpu_custom_call.1} parent=91 // pred_check_branch
          %745 = sbr.rel (%p743) target = $region128
        $region127: #{tpu_custom_call.1} parent=91 // pred_region
          %v746 = vld [vmem:[%s657] sm:$0xf]
          %v747 = vld [vmem:[%s657 + $0x4] sm:$0xf]
          %v748 = vld [vmem:[%s657 + $0x8] sm:$0xf]
          %v749 = vld [vmem:[%s657 + $0xc] sm:$0xf]
          %v750 = vld [vmem:[%s657 + $0x10] sm:$0xf]
          %v751 = vld [vmem:[%s657 + $0x14] sm:$0xf]
          %v752 = vld [vmem:[%s657 + $0x18] sm:$0xf]
          %v753 = vld [vmem:[%s657 + $0x1c] sm:$0xf]
          %v754 = vld [vmem:[%s657 + $0x20] sm:$0xf]
          %v755 = vld [vmem:[%s657 + $0x24] sm:$0xf]
          %v756 = vld [vmem:[%s657 + $0x28] sm:$0xf]
          %v757 = vld [vmem:[%s657 + $0x2c] sm:$0xf]
          %v758 = vld [vmem:[%s657 + $0x30] sm:$0xf]
          %v759 = vld [vmem:[%s657 + $0x34] sm:$0xf]
          %v760 = vld [vmem:[%s657 + $0x38] sm:$0xf]
          %v761 = vld [vmem:[%s657 + $0x3c] sm:$0xf]
          %v762 = vld [vmem:[%s657 + $0x40] sm:$0xf]
          %v763 = vld [vmem:[%s657 + $0x44] sm:$0xf]
          %v764 = vld [vmem:[%s657 + $0x48] sm:$0xf]
          %v765 = vld [vmem:[%s657 + $0x4c] sm:$0xf]
          %v766 = vld [vmem:[%s657 + $0x50] sm:$0xf]
          %v767 = vld [vmem:[%s657 + $0x54] sm:$0xf]
          %v768 = vld [vmem:[%s657 + $0x58] sm:$0xf]
          %v769 = vld [vmem:[%s657 + $0x5c] sm:$0xf]
          %v770 = vld [vmem:[%s657 + $0x60] sm:$0xf]
          %v771 = vld [vmem:[%s657 + $0x64] sm:$0xf]
          %v772 = vld [vmem:[%s657 + $0x68] sm:$0xf]
          %v773 = vld [vmem:[%s657 + $0x6c] sm:$0xf]
          %v774 = vld [vmem:[%s657 + $0x70] sm:$0xf]
          %v775 = vld [vmem:[%s657 + $0x74] sm:$0xf]
          %v776 = vld [vmem:[%s657 + $0x78] sm:$0xf]
          %v777 = vld [vmem:[%s657 + $0x7c] sm:$0xf]
          %v778 = vld [vmem:[#allocation11] sm:$0xf]
          %v779 = vld [vmem:[#allocation11 + $0x4] sm:$0xf]
          %v780 = vld [vmem:[#allocation11 + $0x8] sm:$0xf]
          %v781 = vld [vmem:[#allocation11 + $0xc] sm:$0xf]
          %v782 = vld [vmem:[#allocation11 + $0x10] sm:$0xf]
          %v783 = vld [vmem:[#allocation11 + $0x14] sm:$0xf]
          %v784 = vld [vmem:[#allocation11 + $0x18] sm:$0xf]
          %v785 = vld [vmem:[#allocation11 + $0x1c] sm:$0xf]
          %v786 = vld [vmem:[#allocation11 + $0x20] sm:$0xf]
          %v787 = vld [vmem:[#allocation11 + $0x24] sm:$0xf]
          %v788 = vld [vmem:[#allocation11 + $0x28] sm:$0xf]
          %v789 = vld [vmem:[#allocation11 + $0x2c] sm:$0xf]
          %v790 = vld [vmem:[#allocation11 + $0x30] sm:$0xf]
          %v791 = vld [vmem:[#allocation11 + $0x34] sm:$0xf]
          %v792 = vld [vmem:[#allocation11 + $0x38] sm:$0xf]
          %v793 = vld [vmem:[#allocation11 + $0x3c] sm:$0xf]
          %v794 = vld [vmem:[%s5] sm:$0x1]
          %v796 = vlaneseq
          %v797 = vshrl.u32 %v796, 7
          %v798 = vsub.s32 0, %v797
          %v799 = vrot.slane %v794, %v798
          %v833 = vunpack.c.l.b16 %v746
          %v834 = vunpack.c.l.b16 %v747
          %v835 = vunpack.c.l.b16 %v748
          %v836 = vunpack.c.l.b16 %v749
          %v837 = vunpack.c.l.b16 %v750
          %v838 = vunpack.c.l.b16 %v751
          %v839 = vunpack.c.l.b16 %v752
          %v840 = vunpack.c.l.b16 %v753
          %v841 = vunpack.c.l.b16 %v754
          %v842 = vunpack.c.l.b16 %v755
          %v843 = vunpack.c.l.b16 %v756
          %v844 = vunpack.c.l.b16 %v757
          %v845 = vunpack.c.l.b16 %v758
          %v846 = vunpack.c.l.b16 %v759
          %v847 = vunpack.c.l.b16 %v760
          %v848 = vunpack.c.l.b16 %v761
          %v849 = vunpack.c.l.b16 %v762
          %v850 = vunpack.c.l.b16 %v763
          %v851 = vunpack.c.l.b16 %v764
          %v852 = vunpack.c.l.b16 %v765
          %v853 = vunpack.c.l.b16 %v766
          %v854 = vunpack.c.l.b16 %v767
          %v855 = vunpack.c.l.b16 %v768
          %v856 = vunpack.c.l.b16 %v769
          %v857 = vunpack.c.l.b16 %v770
          %v858 = vunpack.c.l.b16 %v771
          %v859 = vunpack.c.l.b16 %v772
          %v860 = vunpack.c.l.b16 %v773
          %v861 = vunpack.c.l.b16 %v774
          %v862 = vunpack.c.l.b16 %v775
          %v863 = vunpack.c.l.b16 %v776
          %v864 = vunpack.c.l.b16 %v777
          %v865 = vpack.c.b16 %v834, %v833
          %v866 = vpack.c.b16 %v836, %v835
          %v867 = vpack.c.b16 %v838, %v837
          %v868 = vpack.c.b16 %v840, %v839
          %v869 = vpack.c.b16 %v842, %v841
          %v870 = vpack.c.b16 %v844, %v843
          %v871 = vpack.c.b16 %v846, %v845
          %v872 = vpack.c.b16 %v848, %v847
          %v873 = vpack.c.b16 %v850, %v849
          %v874 = vpack.c.b16 %v852, %v851
          %v875 = vpack.c.b16 %v854, %v853
          %v876 = vpack.c.b16 %v856, %v855
          %v877 = vpack.c.b16 %v858, %v857
          %v878 = vpack.c.b16 %v860, %v859
          %v879 = vpack.c.b16 %v862, %v861
          %v880 = vpack.c.b16 %v864, %v863
          %v913 = vunpack.c.l.b16 %v778
          %v914 = vunpack.c.l.b16 %v779
          %v915 = vunpack.c.l.b16 %v780
          %v916 = vunpack.c.l.b16 %v781
          %v917 = vunpack.c.l.b16 %v782
          %v918 = vunpack.c.l.b16 %v783
          %v919 = vunpack.c.l.b16 %v784
          %v920 = vunpack.c.l.b16 %v785
          %v921 = vunpack.c.l.b16 %v786
          %v922 = vunpack.c.l.b16 %v787
          %v923 = vunpack.c.l.b16 %v788
          %v924 = vunpack.c.l.b16 %v789
          %v925 = vunpack.c.l.b16 %v790
          %v926 = vunpack.c.l.b16 %v791
          %v927 = vunpack.c.l.b16 %v792
          %v928 = vunpack.c.l.b16 %v793
          %v929 = vpack.c.b16 %v914, %v913
          %v930 = vpack.c.b16 %v916, %v915
          %v931 = vpack.c.b16 %v918, %v917
          %v932 = vpack.c.b16 %v920, %v919
          %v933 = vpack.c.b16 %v922, %v921
          %v934 = vpack.c.b16 %v924, %v923
          %v935 = vpack.c.b16 %v926, %v925
          %v936 = vpack.c.b16 %v928, %v927
          %945 = vmatprep.subr.bf16.mxu0 0
          %946 = vmatpush1.bf16.msra.mxu0 %v929
          %947 = vmatprep.subr.bf16.mxu0 0
          %948 = vmatpush1.bf16.msra.mxu0 %v930
          %949 = vmatprep.subr.bf16.mxu0 0
          %950 = vmatpush1.bf16.msra.mxu0 %v931
          %951 = vmatprep.subr.bf16.mxu0 0
          %952 = vmatpush1.bf16.msra.mxu0 %v932
          %953 = vmatprep.subr.bf16.mxu0 0
          %954 = vmatpush1.bf16.msra.mxu0 %v933
          %955 = vmatprep.subr.bf16.mxu0 0
          %956 = vmatpush1.bf16.msra.mxu0 %v934
          %957 = vmatprep.subr.bf16.mxu0 0
          %958 = vmatpush1.bf16.msra.mxu0 %v935
          %959 = vmatprep.subr.bf16.mxu0 0
          %960 = vmatpush1.bf16.msra.mxu0 %v936
          %961 = vmatprep.subr.bf16.mxu0 0
          %962 = vmatpush1.bf16.msra.mxu0 0
          %963 = vmatprep.subr.bf16.mxu0 0
          %964 = vmatpush1.bf16.msra.mxu0 0
          %965 = vmatprep.subr.bf16.mxu0 0
          %966 = vmatpush1.bf16.msra.mxu0 0
          %967 = vmatprep.subr.bf16.mxu0 0
          %968 = vmatpush1.bf16.msra.mxu0 0
          %969 = vmatprep.subr.bf16.mxu0 0
          %970 = vmatpush1.bf16.msra.mxu0 0
          %971 = vmatprep.subr.bf16.mxu0 0
          %972 = vmatpush1.bf16.msra.mxu0 0
          %973 = vmatprep.subr.bf16.mxu0 0
          %974 = vmatpush1.bf16.msra.mxu0 0
          %975 = vmatprep.subr.bf16.mxu0 0
          %976 = vmatpush1.bf16.msra.mxu0 0
          %977 = vmatprep.mubr.bf16.mxu0 0
          %978 = vmatmul.mubr.bf16.gmra.mrb[0].mxu0 %v865
          %v979 = vpop.f32.mrb[0].mxu0
          %v980 = vadd.f32 %v799, %v979
          %v981 = vpop.f32.mrb[0].mxu0
          %v982 = vpop.f32.mrb[0].mxu0
          %v983 = vadd.f32 %v799, %v982
          %v984 = vpop.f32.mrb[0].mxu0
          %985 = vmatprep.mubr.bf16.mxu0 0
          %986 = vmatmul.mubr.bf16.gmra.mrb[0].mxu0 %v866
          %v987 = vpop.f32.mrb[0].mxu0
          %v988 = vadd.f32 %v799, %v987
          %v989 = vpop.f32.mrb[0].mxu0
          %v990 = vpop.f32.mrb[0].mxu0
          %v991 = vadd.f32 %v799, %v990
          %v992 = vpop.f32.mrb[0].mxu0
          %993 = vmatprep.mubr.bf16.mxu0 0
          %994 = vmatmul.mubr.bf16.gmra.mrb[0].mxu0 %v867
          %v995 = vpop.f32.mrb[0].mxu0
          %v996 = vadd.f32 %v799, %v995
          %v997 = vpop.f32.mrb[0].mxu0
          %v998 = vpop.f32.mrb[0].mxu0
          %v999 = vadd.f32 %v799, %v998
          %v1000 = vpop.f32.mrb[0].mxu0
          %1001 = vmatprep.mubr.bf16.mxu0 0
          %1002 = vmatmul.mubr.bf16.gmra.mrb[0].mxu0 %v868
          %v1003 = vpop.f32.mrb[0].mxu0
          %v1004 = vadd.f32 %v799, %v1003
          %v1005 = vpop.f32.mrb[0].mxu0
          %v1006 = vpop.f32.mrb[0].mxu0
          %v1007 = vadd.f32 %v799, %v1006
          %v1008 = vpop.f32.mrb[0].mxu0
          %1009 = vmatprep.mubr.bf16.mxu0 0
          %1010 = vmatmul.mubr.bf16.gmra.mrb[0].mxu0 %v869
          %v1011 = vpop.f32.mrb[0].mxu0
          %v1012 = vadd.f32 %v799, %v1011
          %v1013 = vpop.f32.mrb[0].mxu0
          %v1014 = vpop.f32.mrb[0].mxu0
          %v1015 = vadd.f32 %v799, %v1014
          %v1016 = vpop.f32.mrb[0].mxu0
          %1017 = vmatprep.mubr.bf16.mxu0 0
          %1018 = vmatmul.mubr.bf16.gmra.mrb[0].mxu0 %v870
          %v1019 = vpop.f32.mrb[0].mxu0
          %v1020 = vadd.f32 %v799, %v1019
          %v1021 = vpop.f32.mrb[0].mxu0
          %v1022 = vpop.f32.mrb[0].mxu0
          %v1023 = vadd.f32 %v799, %v1022
          %v1024 = vpop.f32.mrb[0].mxu0
          %1025 = vmatprep.mubr.bf16.mxu0 0
          %1026 = vmatmul.mubr.bf16.gmra.mrb[0].mxu0 %v871
          %v1027 = vpop.f32.mrb[0].mxu0
          %v1028 = vadd.f32 %v799, %v1027
          %v1029 = vpop.f32.mrb[0].mxu0
          %v1030 = vpop.f32.mrb[0].mxu0
          %v1031 = vadd.f32 %v799, %v1030
          %v1032 = vpop.f32.mrb[0].mxu0
          %1033 = vmatprep.mubr.bf16.mxu0 0
          %1034 = vmatmul.mubr.bf16.gmra.mrb[0].mxu0 %v872
          %v1035 = vpop.f32.mrb[0].mxu0
          %v1036 = vadd.f32 %v799, %v1035
          %v1037 = vpop.f32.mrb[0].mxu0
          %v1038 = vpop.f32.mrb[0].mxu0
          %v1039 = vadd.f32 %v799, %v1038
          %v1040 = vpop.f32.mrb[0].mxu0
          %1041 = vmatprep.mubr.bf16.mxu0 0
          %1042 = vmatmul.mubr.bf16.gmra.mrb[0].mxu0 %v873
          %v1043 = vpop.f32.mrb[0].mxu0
          %v1044 = vadd.f32 %v799, %v1043
          %v1045 = vpop.f32.mrb[0].mxu0
          %v1046 = vpop.f32.mrb[0].mxu0
          %v1047 = vadd.f32 %v799, %v1046
          %v1048 = vpop.f32.mrb[0].mxu0
          %1049 = vmatprep.mubr.bf16.mxu0 0
          %1050 = vmatmul.mubr.bf16.gmra.mrb[0].mxu0 %v874
          %v1051 = vpop.f32.mrb[0].mxu0
          %v1052 = vadd.f32 %v799, %v1051
          %v1053 = vpop.f32.mrb[0].mxu0
          %v1054 = vpop.f32.mrb[0].mxu0
          %v1055 = vadd.f32 %v799, %v1054
          %v1056 = vpop.f32.mrb[0].mxu0
          %1057 = vmatprep.mubr.bf16.mxu0 0
          %1058 = vmatmul.mubr.bf16.gmra.mrb[0].mxu0 %v875
          %v1059 = vpop.f32.mrb[0].mxu0
          %v1060 = vadd.f32 %v799, %v1059
          %v1061 = vpop.f32.mrb[0].mxu0
          %v1062 = vpop.f32.mrb[0].mxu0
          %v1063 = vadd.f32 %v799, %v1062
          %v1064 = vpop.f32.mrb[0].mxu0
          %1065 = vmatprep.mubr.bf16.mxu0 0
          %1066 = vmatmul.mubr.bf16.gmra.mrb[0].mxu0 %v876
          %v1067 = vpop.f32.mrb[0].mxu0
          %v1068 = vadd.f32 %v799, %v1067
          %v1069 = vpop.f32.mrb[0].mxu0
          %v1070 = vpop.f32.mrb[0].mxu0
          %v1071 = vadd.f32 %v799, %v1070
          %v1072 = vpop.f32.mrb[0].mxu0
          %1073 = vmatprep.mubr.bf16.mxu0 0
          %1074 = vmatmul.mubr.bf16.gmra.mrb[0].mxu0 %v877
          %v1075 = vpop.f32.mrb[0].mxu0
          %v1076 = vadd.f32 %v799, %v1075
          %v1077 = vpop.f32.mrb[0].mxu0
          %v1078 = vpop.f32.mrb[0].mxu0
          %v1079 = vadd.f32 %v799, %v1078
          %v1080 = vpop.f32.mrb[0].mxu0
          %1081 = vmatprep.mubr.bf16.mxu0 0
          %1082 = vmatmul.mubr.bf16.gmra.mrb[0].mxu0 %v878
          %v1083 = vpop.f32.mrb[0].mxu0
          %v1084 = vadd.f32 %v799, %v1083
          %v1085 = vpop.f32.mrb[0].mxu0
          %v1086 = vpop.f32.mrb[0].mxu0
          %v1087 = vadd.f32 %v799, %v1086
          %v1088 = vpop.f32.mrb[0].mxu0
          %1089 = vmatprep.mubr.bf16.mxu0 0
          %1090 = vmatmul.mubr.bf16.gmra.mrb[0].mxu0 %v879
          %v1091 = vpop.f32.mrb[0].mxu0
          %v1092 = vadd.f32 %v799, %v1091
          %v1093 = vpop.f32.mrb[0].mxu0
          %v1094 = vpop.f32.mrb[0].mxu0
          %v1095 = vadd.f32 %v799, %v1094
          %v1096 = vpop.f32.mrb[0].mxu0
          %1097 = vmatprep.mubr.bf16.mxu0 0
          %1098 = vmatmul.mubr.bf16.gmra.mrb[0].mxu0 %v880
          %v1099 = vpop.f32.mrb[0].mxu0
          %v1100 = vadd.f32 %v799, %v1099
          %v1101 = vpop.f32.mrb[0].mxu0
          %v1102 = vpop.f32.mrb[0].mxu0
          %v1103 = vadd.f32 %v799, %v1102
          %v1104 = vpop.f32.mrb[0].mxu0
          %1105 = vdwg.mxu0
          %v1106 = vld [vmem:[#allocation13] sm:$0xf]
          %v1107 = vld [vmem:[#allocation13 + $0x4] sm:$0xf]
          %v1108 = vld [vmem:[#allocation13 + $0x8] sm:$0xf]
          %v1109 = vld [vmem:[#allocation13 + $0xc] sm:$0xf]
          %v1110 = vld [vmem:[#allocation13 + $0x10] sm:$0xf]
          %v1111 = vld [vmem:[#allocation13 + $0x14] sm:$0xf]
          %v1112 = vld [vmem:[#allocation13 + $0x18] sm:$0xf]
          %v1113 = vld [vmem:[#allocation13 + $0x1c] sm:$0xf]
          %v1114 = vld [vmem:[#allocation13 + $0x20] sm:$0xf]
          %v1115 = vld [vmem:[#allocation13 + $0x24] sm:$0xf]
          %v1116 = vld [vmem:[#allocation13 + $0x28] sm:$0xf]
          %v1117 = vld [vmem:[#allocation13 + $0x2c] sm:$0xf]
          %v1118 = vld [vmem:[#allocation13 + $0x30] sm:$0xf]
          %v1119 = vld [vmem:[#allocation13 + $0x34] sm:$0xf]
          %v1120 = vld [vmem:[#allocation13 + $0x38] sm:$0xf]
          %v1121 = vld [vmem:[#allocation13 + $0x3c] sm:$0xf]
          %v1122 = vld [vmem:[%s7] sm:$0x1]
          %v1124 = vlaneseq
          %v1125 = vshrl.u32 %v1124, 7
          %v1126 = vsub.s32 0, %v1125
          %v1127 = vrot.slane %v1122, %v1126
          %v1145 = vunpack.c.l.b16 %v1106
          %v1146 = vunpack.c.l.b16 %v1107
          %v1147 = vunpack.c.l.b16 %v1108
          %v1148 = vunpack.c.l.b16 %v1109
          %v1149 = vunpack.c.l.b16 %v1110
          %v1150 = vunpack.c.l.b16 %v1111
          %v1151 = vunpack.c.l.b16 %v1112
          %v1152 = vunpack.c.l.b16 %v1113
          %v1153 = vunpack.c.l.b16 %v1114
          %v1154 = vunpack.c.l.b16 %v1115
          %v1155 = vunpack.c.l.b16 %v1116
          %v1156 = vunpack.c.l.b16 %v1117
          %v1157 = vunpack.c.l.b16 %v1118
          %v1158 = vunpack.c.l.b16 %v1119
          %v1159 = vunpack.c.l.b16 %v1120
          %v1160 = vunpack.c.l.b16 %v1121
          %v1161 = vpack.c.b16 %v1146, %v1145
          %v1162 = vpack.c.b16 %v1148, %v1147
          %v1163 = vpack.c.b16 %v1150, %v1149
          %v1164 = vpack.c.b16 %v1152, %v1151
          %v1165 = vpack.c.b16 %v1154, %v1153
          %v1166 = vpack.c.b16 %v1156, %v1155
          %v1167 = vpack.c.b16 %v1158, %v1157
          %v1168 = vpack.c.b16 %v1160, %v1159
          %1177 = vmatprep.subr.bf16.mxu0 0
          %1178 = vmatpush1.bf16.msra.mxu0 %v1161
          %1179 = vmatprep.subr.bf16.mxu0 0
          %1180 = vmatpush1.bf16.msra.mxu0 %v1162
          %1181 = vmatprep.subr.bf16.mxu0 0
          %1182 = vmatpush1.bf16.msra.mxu0 %v1163
          %1183 = vmatprep.subr.bf16.mxu0 0
          %1184 = vmatpush1.bf16.msra.mxu0 %v1164
          %1185 = vmatprep.subr.bf16.mxu0 0
          %1186 = vmatpush1.bf16.msra.mxu0 %v1165
          %1187 = vmatprep.subr.bf16.mxu0 0
          %1188 = vmatpush1.bf16.msra.mxu0 %v1166
          %1189 = vmatprep.subr.bf16.mxu0 0
          %1190 = vmatpush1.bf16.msra.mxu0 %v1167
          %1191 = vmatprep.subr.bf16.mxu0 0
          %1192 = vmatpush1.bf16.msra.mxu0 %v1168
          %1193 = vmatprep.subr.bf16.mxu0 0
          %1194 = vmatpush1.bf16.msra.mxu0 0
          %1195 = vmatprep.subr.bf16.mxu0 0
          %1196 = vmatpush1.bf16.msra.mxu0 0
          %1197 = vmatprep.subr.bf16.mxu0 0
          %1198 = vmatpush1.bf16.msra.mxu0 0
          %1199 = vmatprep.subr.bf16.mxu0 0
          %1200 = vmatpush1.bf16.msra.mxu0 0
          %1201 = vmatprep.subr.bf16.mxu0 0
          %1202 = vmatpush1.bf16.msra.mxu0 0
          %1203 = vmatprep.subr.bf16.mxu0 0
          %1204 = vmatpush1.bf16.msra.mxu0 0
          %1205 = vmatprep.subr.bf16.mxu0 0
          %1206 = vmatpush1.bf16.msra.mxu0 0
          %1207 = vmatprep.subr.bf16.mxu0 0
          %1208 = vmatpush1.bf16.msra.mxu0 0
          %1209 = vmatprep.mubr.bf16.mxu0 0
          %1210 = vmatmul.mubr.bf16.gmra.mrb[0].mxu0 %v865
          %v1211 = vpop.f32.mrb[0].mxu0
          %v1212 = vadd.f32 %v1127, %v1211
          %v1213 = vpop.f32.mrb[0].mxu0
          %v1214 = vpop.f32.mrb[0].mxu0
          %v1215 = vadd.f32 %v1127, %v1214
          %v1216 = vpop.f32.mrb[0].mxu0
          %1217 = vmatprep.mubr.bf16.mxu0 0
          %1218 = vmatmul.mubr.bf16.gmra.mrb[0].mxu0 %v866
          %v1219 = vpop.f32.mrb[0].mxu0
          %v1220 = vadd.f32 %v1127, %v1219
          %v1221 = vpop.f32.mrb[0].mxu0
          %v1222 = vpop.f32.mrb[0].mxu0
          %v1223 = vadd.f32 %v1127, %v1222
          %v1224 = vpop.f32.mrb[0].mxu0
          %1225 = vmatprep.mubr.bf16.mxu0 0
          %1226 = vmatmul.mubr.bf16.gmra.mrb[0].mxu0 %v867
          %v1227 = vpop.f32.mrb[0].mxu0
          %v1228 = vadd.f32 %v1127, %v1227
          %v1229 = vpop.f32.mrb[0].mxu0
          %v1230 = vpop.f32.mrb[0].mxu0
          %v1231 = vadd.f32 %v1127, %v1230
          %v1232 = vpop.f32.mrb[0].mxu0
          %1233 = vmatprep.mubr.bf16.mxu0 0
          %1234 = vmatmul.mubr.bf16.gmra.mrb[0].mxu0 %v868
          %v1235 = vpop.f32.mrb[0].mxu0
          %v1236 = vadd.f32 %v1127, %v1235
          %v1237 = vpop.f32.mrb[0].mxu0
          %v1238 = vpop.f32.mrb[0].mxu0
          %v1239 = vadd.f32 %v1127, %v1238
          %v1240 = vpop.f32.mrb[0].mxu0
          %1241 = vmatprep.mubr.bf16.mxu0 0
          %1242 = vmatmul.mubr.bf16.gmra.mrb[0].mxu0 %v869
          %v1243 = vpop.f32.mrb[0].mxu0
          %v1244 = vadd.f32 %v1127, %v1243
          %v1245 = vpop.f32.mrb[0].mxu0
          %v1246 = vpop.f32.mrb[0].mxu0
          %v1247 = vadd.f32 %v1127, %v1246
          %v1248 = vpop.f32.mrb[0].mxu0
          %1249 = vmatprep.mubr.bf16.mxu0 0
          %1250 = vmatmul.mubr.bf16.gmra.mrb[0].mxu0 %v870
          %v1251 = vpop.f32.mrb[0].mxu0
          %v1252 = vadd.f32 %v1127, %v1251
          %v1253 = vpop.f32.mrb[0].mxu0
          %v1254 = vpop.f32.mrb[0].mxu0
          %v1255 = vadd.f32 %v1127, %v1254
          %v1256 = vpop.f32.mrb[0].mxu0
          %1257 = vmatprep.mubr.bf16.mxu0 0
          %1258 = vmatmul.mubr.bf16.gmra.mrb[0].mxu0 %v871
          %v1259 = vpop.f32.mrb[0].mxu0
          %v1260 = vadd.f32 %v1127, %v1259
          %v1261 = vpop.f32.mrb[0].mxu0
          %v1262 = vpop.f32.mrb[0].mxu0
          %v1263 = vadd.f32 %v1127, %v1262
          %v1264 = vpop.f32.mrb[0].mxu0
          %1265 = vmatprep.mubr.bf16.mxu0 0
          %1266 = vmatmul.mubr.bf16.gmra.mrb[0].mxu0 %v872
          %v1267 = vpop.f32.mrb[0].mxu0
          %v1268 = vadd.f32 %v1127, %v1267
          %v1269 = vpop.f32.mrb[0].mxu0
          %v1270 = vpop.f32.mrb[0].mxu0
          %v1271 = vadd.f32 %v1127, %v1270
          %v1272 = vpop.f32.mrb[0].mxu0
          %1273 = vmatprep.mubr.bf16.mxu0 0
          %1274 = vmatmul.mubr.bf16.gmra.mrb[0].mxu0 %v873
          %v1275 = vpop.f32.mrb[0].mxu0
          %v1276 = vadd.f32 %v1127, %v1275
          %v1277 = vpop.f32.mrb[0].mxu0
          %v1278 = vpop.f32.mrb[0].mxu0
          %v1279 = vadd.f32 %v1127, %v1278
          %v1280 = vpop.f32.mrb[0].mxu0
          %1281 = vmatprep.mubr.bf16.mxu0 0
          %1282 = vmatmul.mubr.bf16.gmra.mrb[0].mxu0 %v874
          %v1283 = vpop.f32.mrb[0].mxu0
          %v1284 = vadd.f32 %v1127, %v1283
          %v1285 = vpop.f32.mrb[0].mxu0
          %v1286 = vpop.f32.mrb[0].mxu0
          %v1287 = vadd.f32 %v1127, %v1286
          %v1288 = vpop.f32.mrb[0].mxu0
          %1289 = vmatprep.mubr.bf16.mxu0 0
          %1290 = vmatmul.mubr.bf16.gmra.mrb[0].mxu0 %v875
          %v1291 = vpop.f32.mrb[0].mxu0
          %v1292 = vadd.f32 %v1127, %v1291
          %v1293 = vpop.f32.mrb[0].mxu0
          %v1294 = vpop.f32.mrb[0].mxu0
          %v1295 = vadd.f32 %v1127, %v1294
          %v1296 = vpop.f32.mrb[0].mxu0
          %1297 = vmatprep.mubr.bf16.mxu0 0
          %1298 = vmatmul.mubr.bf16.gmra.mrb[0].mxu0 %v876
          %v1299 = vpop.f32.mrb[0].mxu0
          %v1300 = vadd.f32 %v1127, %v1299
          %v1301 = vpop.f32.mrb[0].mxu0
          %v1302 = vpop.f32.mrb[0].mxu0
          %v1303 = vadd.f32 %v1127, %v1302
          %v1304 = vpop.f32.mrb[0].mxu0
          %1305 = vmatprep.mubr.bf16.mxu0 0
          %1306 = vmatmul.mubr.bf16.gmra.mrb[0].mxu0 %v877
          %v1307 = vpop.f32.mrb[0].mxu0
          %v1308 = vadd.f32 %v1127, %v1307
          %v1309 = vpop.f32.mrb[0].mxu0
          %v1310 = vpop.f32.mrb[0].mxu0
          %v1311 = vadd.f32 %v1127, %v1310
          %v1312 = vpop.f32.mrb[0].mxu0
          %1313 = vmatprep.mubr.bf16.mxu0 0
          %1314 = vmatmul.mubr.bf16.gmra.mrb[0].mxu0 %v878
          %v1315 = vpop.f32.mrb[0].mxu0
          %v1316 = vadd.f32 %v1127, %v1315
          %v1317 = vpop.f32.mrb[0].mxu0
          %v1318 = vpop.f32.mrb[0].mxu0
          %v1319 = vadd.f32 %v1127, %v1318
          %v1320 = vpop.f32.mrb[0].mxu0
          %1321 = vmatprep.mubr.bf16.mxu0 0
          %1322 = vmatmul.mubr.bf16.gmra.mrb[0].mxu0 %v879
          %v1323 = vpop.f32.mrb[0].mxu0
          %v1324 = vadd.f32 %v1127, %v1323
          %v1325 = vpop.f32.mrb[0].mxu0
          %v1326 = vpop.f32.mrb[0].mxu0
          %v1327 = vadd.f32 %v1127, %v1326
          %v1328 = vpop.f32.mrb[0].mxu0
          %1329 = vmatprep.mubr.bf16.mxu0 0
          %1330 = vmatmul.mubr.bf16.gmra.mrb[0].mxu0 %v880
          %v1331 = vpop.f32.mrb[0].mxu0
          %v1332 = vadd.f32 %v1127, %v1331
          %v1333 = vpop.f32.mrb[0].mxu0
          %v1334 = vpop.f32.mrb[0].mxu0
          %v1335 = vadd.f32 %v1127, %v1334
          %v1336 = vpop.f32.mrb[0].mxu0
          %1337 = vdwg.mxu0
          %v1338 = vpack.c.bf16 %v983, %v980
          %v1339 = vpack.c.bf16 %v991, %v988
          %v1340 = vpack.c.bf16 %v999, %v996
          %v1341 = vpack.c.bf16 %v1007, %v1004
          %v1342 = vpack.c.bf16 %v1015, %v1012
          %v1343 = vpack.c.bf16 %v1023, %v1020
          %v1344 = vpack.c.bf16 %v1031, %v1028
          %v1345 = vpack.c.bf16 %v1039, %v1036
          %v1346 = vpack.c.bf16 %v1047, %v1044
          %v1347 = vpack.c.bf16 %v1055, %v1052
          %v1348 = vpack.c.bf16 %v1063, %v1060
          %v1349 = vpack.c.bf16 %v1071, %v1068
          %v1350 = vpack.c.bf16 %v1079, %v1076
          %v1351 = vpack.c.bf16 %v1087, %v1084
          %v1352 = vpack.c.bf16 %v1095, %v1092
          %v1353 = vpack.c.bf16 %v1103, %v1100
          %1354 = vst [vmem:[#allocation2] sm:$0xff] %v1338
          %1355 = vst [vmem:[#allocation2 + $0x8] sm:$0xff] %v1339
          %1356 = vst [vmem:[#allocation2 + $0x10] sm:$0xff] %v1340
          %1357 = vst [vmem:[#allocation2 + $0x18] sm:$0xff] %v1341
          %1358 = vst [vmem:[#allocation2 + $0x20] sm:$0xff] %v1342
          %1359 = vst [vmem:[#allocation2 + $0x28] sm:$0xff] %v1343
          %1360 = vst [vmem:[#allocation2 + $0x30] sm:$0xff] %v1344
          %1361 = vst [vmem:[#allocation2 + $0x38] sm:$0xff] %v1345
          %1362 = vst [vmem:[#allocation2 + $0x40] sm:$0xff] %v1346
          %1363 = vst [vmem:[#allocation2 + $0x48] sm:$0xff] %v1347
          %1364 = vst [vmem:[#allocation2 + $0x50] sm:$0xff] %v1348
          %1365 = vst [vmem:[#allocation2 + $0x58] sm:$0xff] %v1349
          %1366 = vst [vmem:[#allocation2 + $0x60] sm:$0xff] %v1350
          %1367 = vst [vmem:[#allocation2 + $0x68] sm:$0xff] %v1351
          %1368 = vst [vmem:[#allocation2 + $0x70] sm:$0xff] %v1352
          %1369 = vst [vmem:[#allocation2 + $0x78] sm:$0xff] %v1353
          %v1370 = vpack.c.bf16 %v1215, %v1212
          %v1371 = vpack.c.bf16 %v1223, %v1220
          %v1372 = vpack.c.bf16 %v1231, %v1228
          %v1373 = vpack.c.bf16 %v1239, %v1236
          %v1374 = vpack.c.bf16 %v1247, %v1244
          %v1375 = vpack.c.bf16 %v1255, %v1252
          %v1376 = vpack.c.bf16 %v1263, %v1260
          %v1377 = vpack.c.bf16 %v1271, %v1268
          %v1378 = vpack.c.bf16 %v1279, %v1276
          %v1379 = vpack.c.bf16 %v1287, %v1284
          %v1380 = vpack.c.bf16 %v1295, %v1292
          %v1381 = vpack.c.bf16 %v1303, %v1300
          %v1382 = vpack.c.bf16 %v1311, %v1308
          %v1383 = vpack.c.bf16 %v1319, %v1316
          %v1384 = vpack.c.bf16 %v1327, %v1324
          %v1385 = vpack.c.bf16 %v1335, %v1332
          %1386 = vst [vmem:[#allocation3] sm:$0xff] %v1370
          %1387 = vst [vmem:[#allocation3 + $0x8] sm:$0xff] %v1371
          %1388 = vst [vmem:[#allocation3 + $0x10] sm:$0xff] %v1372
          %1389 = vst [vmem:[#allocation3 + $0x18] sm:$0xff] %v1373
          %1390 = vst [vmem:[#allocation3 + $0x20] sm:$0xff] %v1374
          %1391 = vst [vmem:[#allocation3 + $0x28] sm:$0xff] %v1375
          %1392 = vst [vmem:[#allocation3 + $0x30] sm:$0xff] %v1376
          %1393 = vst [vmem:[#allocation3 + $0x38] sm:$0xff] %v1377
          %1394 = vst [vmem:[#allocation3 + $0x40] sm:$0xff] %v1378
          %1395 = vst [vmem:[#allocation3 + $0x48] sm:$0xff] %v1379
          %1396 = vst [vmem:[#allocation3 + $0x50] sm:$0xff] %v1380
          %1397 = vst [vmem:[#allocation3 + $0x58] sm:$0xff] %v1381
          %1398 = vst [vmem:[#allocation3 + $0x60] sm:$0xff] %v1382
          %1399 = vst [vmem:[#allocation3 + $0x68] sm:$0xff] %v1383
          %1400 = vst [vmem:[#allocation3 + $0x70] sm:$0xff] %v1384
          %1401 = vst [vmem:[#allocation3 + $0x78] sm:$0xff] %v1385
        $region128: #{tpu_custom_call.1} parent=91 // pred_fallthru
          _
        %v1402 = vld [vmem:[%s648] sm:$0xff]
        %v1403 = vld [vmem:[%s648 + $0x8] sm:$0xff]
        %v1404 = vld [vmem:[%s648 + $0x10] sm:$0xff]
        %v1405 = vld [vmem:[%s648 + $0x18] sm:$0xff]
        %v1406 = vld [vmem:[%s648 + $0x20] sm:$0xff]
        %v1407 = vld [vmem:[%s648 + $0x28] sm:$0xff]
        %v1408 = vld [vmem:[%s648 + $0x30] sm:$0xff]
        %v1409 = vld [vmem:[%s648 + $0x38] sm:$0xff]
        %v1410 = vld [vmem:[%s648 + $0x40] sm:$0xff]
        %v1411 = vld [vmem:[%s648 + $0x48] sm:$0xff]
        %v1412 = vld [vmem:[%s648 + $0x50] sm:$0xff]
        %v1413 = vld [vmem:[%s648 + $0x58] sm:$0xff]
        %v1414 = vld [vmem:[%s648 + $0x60] sm:$0xff]
        %v1415 = vld [vmem:[%s648 + $0x68] sm:$0xff]
        %v1416 = vld [vmem:[%s648 + $0x70] sm:$0xff]
        %v1417 = vld [vmem:[%s648 + $0x78] sm:$0xff]
        %v1418 = vpack.c.bf16 %v1403, %v1402
        %v1419 = vpack.c.bf16 %v1405, %v1404
        %v1420 = vpack.c.bf16 %v1407, %v1406
        %v1421 = vpack.c.bf16 %v1409, %v1408
        %v1422 = vpack.c.bf16 %v1411, %v1410
        %v1423 = vpack.c.bf16 %v1413, %v1412
        %v1424 = vpack.c.bf16 %v1415, %v1414
        %v1425 = vpack.c.bf16 %v1417, %v1416
        %v1426 = vld [vmem:[#allocation10] sm:$0xf]
        %v1427 = vld [vmem:[#allocation10 + $0x4] sm:$0xf]
        %v1428 = vld [vmem:[#allocation10 + $0x8] sm:$0xf]
        %v1429 = vld [vmem:[#allocation10 + $0xc] sm:$0xf]
        %v1430 = vld [vmem:[#allocation10 + $0x10] sm:$0xf]
        %v1431 = vld [vmem:[#allocation10 + $0x14] sm:$0xf]
        %v1432 = vld [vmem:[#allocation10 + $0x18] sm:$0xf]
        %v1433 = vld [vmem:[#allocation10 + $0x1c] sm:$0xf]
        %v1434 = vld [vmem:[#allocation10 + $0x20] sm:$0xf]
        %v1435 = vld [vmem:[#allocation10 + $0x24] sm:$0xf]
        %v1436 = vld [vmem:[#allocation10 + $0x28] sm:$0xf]
        %v1437 = vld [vmem:[#allocation10 + $0x2c] sm:$0xf]
        %v1438 = vld [vmem:[#allocation10 + $0x30] sm:$0xf]
        %v1439 = vld [vmem:[#allocation10 + $0x34] sm:$0xf]
        %v1440 = vld [vmem:[#allocation10 + $0x38] sm:$0xf]
        %v1441 = vld [vmem:[#allocation10 + $0x3c] sm:$0xf]
        %v1442 = vld [vmem:[%s3] sm:$0x1]
        %v1444 = vlaneseq
        %v1445 = vshrl.u32 %v1444, 7
        %v1446 = vsub.s32 0, %v1445
        %v1447 = vrot.slane %v1442, %v1446
        %v1465 = vunpack.c.l.b16 %v1426
        %v1466 = vunpack.c.l.b16 %v1427
        %v1467 = vunpack.c.l.b16 %v1428
        %v1468 = vunpack.c.l.b16 %v1429
        %v1469 = vunpack.c.l.b16 %v1430
        %v1470 = vunpack.c.l.b16 %v1431
        %v1471 = vunpack.c.l.b16 %v1432
        %v1472 = vunpack.c.l.b16 %v1433
        %v1473 = vunpack.c.l.b16 %v1434
        %v1474 = vunpack.c.l.b16 %v1435
        %v1475 = vunpack.c.l.b16 %v1436
        %v1476 = vunpack.c.l.b16 %v1437
        %v1477 = vunpack.c.l.b16 %v1438
        %v1478 = vunpack.c.l.b16 %v1439
        %v1479 = vunpack.c.l.b16 %v1440
        %v1480 = vunpack.c.l.b16 %v1441
        %v1481 = vpack.c.b16 %v1466, %v1465
        %v1482 = vpack.c.b16 %v1468, %v1467
        %v1483 = vpack.c.b16 %v1470, %v1469
        %v1484 = vpack.c.b16 %v1472, %v1471
        %v1485 = vpack.c.b16 %v1474, %v1473
        %v1486 = vpack.c.b16 %v1476, %v1475
        %v1487 = vpack.c.b16 %v1478, %v1477
        %v1488 = vpack.c.b16 %v1480, %v1479
        %1497 = vmatprep.subr.bf16.mxu0 0
        %1498 = vmatpush1.bf16.msra.mxu0 %v1481
        %1499 = vmatprep.subr.bf16.mxu0 0
        %1500 = vmatpush1.bf16.msra.mxu0 %v1482
        %1501 = vmatprep.subr.bf16.mxu0 0
        %1502 = vmatpush1.bf16.msra.mxu0 %v1483
        %1503 = vmatprep.subr.bf16.mxu0 0
        %1504 = vmatpush1.bf16.msra.mxu0 %v1484
        %1505 = vmatprep.subr.bf16.mxu0 0
        %1506 = vmatpush1.bf16.msra.mxu0 %v1485
        %1507 = vmatprep.subr.bf16.mxu0 0
        %1508 = vmatpush1.bf16.msra.mxu0 %v1486
        %1509 = vmatprep.subr.bf16.mxu0 0
        %1510 = vmatpush1.bf16.msra.mxu0 %v1487
        %1511 = vmatprep.subr.bf16.mxu0 0
        %1512 = vmatpush1.bf16.msra.mxu0 %v1488
        %1513 = vmatprep.subr.bf16.mxu0 0
        %1514 = vmatpush1.bf16.msra.mxu0 0
        %1515 = vmatprep.subr.bf16.mxu0 0
        %1516 = vmatpush1.bf16.msra.mxu0 0
        %1517 = vmatprep.subr.bf16.mxu0 0
        %1518 = vmatpush1.bf16.msra.mxu0 0
        %1519 = vmatprep.subr.bf16.mxu0 0
        %1520 = vmatpush1.bf16.msra.mxu0 0
        %1521 = vmatprep.subr.bf16.mxu0 0
        %1522 = vmatpush1.bf16.msra.mxu0 0
        %1523 = vmatprep.subr.bf16.mxu0 0
        %1524 = vmatpush1.bf16.msra.mxu0 0
        %1525 = vmatprep.subr.bf16.mxu0 0
        %1526 = vmatpush1.bf16.msra.mxu0 0
        %1527 = vmatprep.subr.bf16.mxu0 0
        %1528 = vmatpush1.bf16.msra.mxu0 0
        %1529 = vmatprep.mubr.bf16.mxu0 0
        %1530 = vmatmul.mubr.bf16.gmra.mrb[0].mxu0 %v1418
        %v1531 = vpop.f32.mrb[0].mxu0
        %v1532 = vadd.f32 %v1447, %v1531
        %v1533 = vpop.f32.mrb[0].mxu0
        %v1534 = vpop.f32.mrb[0].mxu0
        %v1535 = vadd.f32 %v1447, %v1534
        %v1536 = vpop.f32.mrb[0].mxu0
        %1537 = vmatprep.mubr.bf16.mxu0 0
        %1538 = vmatmul.mubr.bf16.gmra.mrb[0].mxu0 %v1419
        %v1539 = vpop.f32.mrb[0].mxu0
        %v1540 = vadd.f32 %v1447, %v1539
        %v1541 = vpop.f32.mrb[0].mxu0
        %v1542 = vpop.f32.mrb[0].mxu0
        %v1543 = vadd.f32 %v1447, %v1542
        %v1544 = vpop.f32.mrb[0].mxu0
        %1545 = vmatprep.mubr.bf16.mxu0 0
        %1546 = vmatmul.mubr.bf16.gmra.mrb[0].mxu0 %v1420
        %v1547 = vpop.f32.mrb[0].mxu0
        %v1548 = vadd.f32 %v1447, %v1547
        %v1549 = vpop.f32.mrb[0].mxu0
        %v1550 = vpop.f32.mrb[0].mxu0
        %v1551 = vadd.f32 %v1447, %v1550
        %v1552 = vpop.f32.mrb[0].mxu0
        %1553 = vmatprep.mubr.bf16.mxu0 0
        %1554 = vmatmul.mubr.bf16.gmra.mrb[0].mxu0 %v1421
        %v1555 = vpop.f32.mrb[0].mxu0
        %v1556 = vadd.f32 %v1447, %v1555
        %v1557 = vpop.f32.mrb[0].mxu0
        %v1558 = vpop.f32.mrb[0].mxu0
        %v1559 = vadd.f32 %v1447, %v1558
        %v1560 = vpop.f32.mrb[0].mxu0
        %1561 = vmatprep.mubr.bf16.mxu0 0
        %1562 = vmatmul.mubr.bf16.gmra.mrb[0].mxu0 %v1422
        %v1563 = vpop.f32.mrb[0].mxu0
        %v1564 = vadd.f32 %v1447, %v1563
        %v1565 = vpop.f32.mrb[0].mxu0
        %v1566 = vpop.f32.mrb[0].mxu0
        %v1567 = vadd.f32 %v1447, %v1566
        %v1568 = vpop.f32.mrb[0].mxu0
        %1569 = vmatprep.mubr.bf16.mxu0 0
        %1570 = vmatmul.mubr.bf16.gmra.mrb[0].mxu0 %v1423
        %v1571 = vpop.f32.mrb[0].mxu0
        %v1572 = vadd.f32 %v1447, %v1571
        %v1573 = vpop.f32.mrb[0].mxu0
        %v1574 = vpop.f32.mrb[0].mxu0
        %v1575 = vadd.f32 %v1447, %v1574
        %v1576 = vpop.f32.mrb[0].mxu0
        %1577 = vmatprep.mubr.bf16.mxu0 0
        %1578 = vmatmul.mubr.bf16.gmra.mrb[0].mxu0 %v1424
        %v1579 = vpop.f32.mrb[0].mxu0
        %v1580 = vadd.f32 %v1447, %v1579
        %v1581 = vpop.f32.mrb[0].mxu0
        %v1582 = vpop.f32.mrb[0].mxu0
        %v1583 = vadd.f32 %v1447, %v1582
        %v1584 = vpop.f32.mrb[0].mxu0
        %1585 = vmatprep.mubr.bf16.mxu0 0
        %1586 = vmatmul.mubr.bf16.gmra.mrb[0].mxu0 %v1425
        %v1587 = vpop.f32.mrb[0].mxu0
        %v1588 = vadd.f32 %v1447, %v1587
        %v1589 = vpop.f32.mrb[0].mxu0
        %v1590 = vpop.f32.mrb[0].mxu0
        %v1591 = vadd.f32 %v1447, %v1590
        %v1592 = vpop.f32.mrb[0].mxu0
        %1593 = vdwg.mxu0
        %v1594 = vmul.f32 %v1532, 0.17677669
        %v1595 = vmul.f32 %v1535, 0.17677669
        %v1596 = vmul.f32 %v1540, 0.17677669
        %v1597 = vmul.f32 %v1543, 0.17677669
        %v1598 = vmul.f32 %v1548, 0.17677669
        %v1599 = vmul.f32 %v1551, 0.17677669
        %v1600 = vmul.f32 %v1556, 0.17677669
        %v1601 = vmul.f32 %v1559, 0.17677669
        %v1602 = vmul.f32 %v1564, 0.17677669
        %v1603 = vmul.f32 %v1567, 0.17677669
        %v1604 = vmul.f32 %v1572, 0.17677669
        %v1605 = vmul.f32 %v1575, 0.17677669
        %v1606 = vmul.f32 %v1580, 0.17677669
        %v1607 = vmul.f32 %v1583, 0.17677669
        %v1608 = vmul.f32 %v1588, 0.17677669
        %v1609 = vmul.f32 %v1591, 0.17677669
        %v1610 = vpack.c.bf16 %v1595, %v1594
        %v1611 = vpack.c.bf16 %v1597, %v1596
        %v1612 = vpack.c.bf16 %v1599, %v1598
        %v1613 = vpack.c.bf16 %v1601, %v1600
        %v1614 = vpack.c.bf16 %v1603, %v1602
        %v1615 = vpack.c.bf16 %v1605, %v1604
        %v1616 = vpack.c.bf16 %v1607, %v1606
        %v1617 = vpack.c.bf16 %v1609, %v1608
        %v1618 = vld [vmem:[#allocation2] sm:$0xff]
        %v1619 = vld [vmem:[#allocation2 + $0x8] sm:$0xff]
        %v1620 = vld [vmem:[#allocation2 + $0x10] sm:$0xff]
        %v1621 = vld [vmem:[#allocation2 + $0x18] sm:$0xff]
        %v1622 = vld [vmem:[#allocation2 + $0x20] sm:$0xff]
        %v1623 = vld [vmem:[#allocation2 + $0x28] sm:$0xff]
        %v1624 = vld [vmem:[#allocation2 + $0x30] sm:$0xff]
        %v1625 = vld [vmem:[#allocation2 + $0x38] sm:$0xff]
        %v1626 = vld [vmem:[#allocation2 + $0x40] sm:$0xff]
        %v1627 = vld [vmem:[#allocation2 + $0x48] sm:$0xff]
        %v1628 = vld [vmem:[#allocation2 + $0x50] sm:$0xff]
        %v1629 = vld [vmem:[#allocation2 + $0x58] sm:$0xff]
        %v1630 = vld [vmem:[#allocation2 + $0x60] sm:$0xff]
        %v1631 = vld [vmem:[#allocation2 + $0x68] sm:$0xff]
        %v1632 = vld [vmem:[#allocation2 + $0x70] sm:$0xff]
        %v1633 = vld [vmem:[#allocation2 + $0x78] sm:$0xff]
        %v1634 = vld [vmem:[#allocation3] sm:$0xff]
        %v1635 = vld [vmem:[#allocation3 + $0x8] sm:$0xff]
        %v1636 = vld [vmem:[#allocation3 + $0x10] sm:$0xff]
        %v1637 = vld [vmem:[#allocation3 + $0x18] sm:$0xff]
        %v1638 = vld [vmem:[#allocation3 + $0x20] sm:$0xff]
        %v1639 = vld [vmem:[#allocation3 + $0x28] sm:$0xff]
        %v1640 = vld [vmem:[#allocation3 + $0x30] sm:$0xff]
        %v1641 = vld [vmem:[#allocation3 + $0x38] sm:$0xff]
        %v1642 = vld [vmem:[#allocation3 + $0x40] sm:$0xff]
        %v1643 = vld [vmem:[#allocation3 + $0x48] sm:$0xff]
        %v1644 = vld [vmem:[#allocation3 + $0x50] sm:$0xff]
        %v1645 = vld [vmem:[#allocation3 + $0x58] sm:$0xff]
        %v1646 = vld [vmem:[#allocation3 + $0x60] sm:$0xff]
        %v1647 = vld [vmem:[#allocation3 + $0x68] sm:$0xff]
        %v1648 = vld [vmem:[#allocation3 + $0x70] sm:$0xff]
        %v1649 = vld [vmem:[#allocation3 + $0x78] sm:$0xff]
        %vm1650 = vcmask 261120
        %v1652 = vsel %vm1650, %v1610, 0
        %v1655 = vsel %vm1650, %v1611, 0
        %v1658 = vsel %vm1650, %v1612, 0
        %v1661 = vsel %vm1650, %v1613, 0
        %v1664 = vsel %vm1650, %v1614, 0
        %v1667 = vsel %vm1650, %v1615, 0
        %v1670 = vsel %vm1650, %v1616, 0
        %v1673 = vsel %vm1650, %v1617, 0
        %v1676 = vsel %vm1650, %v1618, 0
        %v1679 = vsel %vm1650, %v1619, 0
        %v1682 = vsel %vm1650, %v1620, 0
        %v1685 = vsel %vm1650, %v1621, 0
        %v1688 = vsel %vm1650, %v1622, 0
        %v1691 = vsel %vm1650, %v1623, 0
        %v1694 = vsel %vm1650, %v1624, 0
        %v1697 = vsel %vm1650, %v1625, 0
        %v1700 = vsel %vm1650, %v1626, 0
        %v1703 = vsel %vm1650, %v1627, 0
        %v1706 = vsel %vm1650, %v1628, 0
        %v1709 = vsel %vm1650, %v1629, 0
        %v1712 = vsel %vm1650, %v1630, 0
        %v1715 = vsel %vm1650, %v1631, 0
        %v1718 = vsel %vm1650, %v1632, 0
        %v1721 = vsel %vm1650, %v1633, 0
        %1723 = vmatprep.subr.bf16.mxu0 0
        %1724 = vmatpush1.bf16.xpose.msra.mxu0 %v1676
        %1725 = vmatprep.subr.bf16.mxu0 0
        %1726 = vmatpush1.bf16.xpose.msra.mxu0 %v1679
        %1727 = vmatprep.subr.bf16.mxu0 0
        %1728 = vmatpush1.bf16.xpose.msra.mxu0 %v1682
        %1729 = vmatprep.subr.bf16.mxu0 0
        %1730 = vmatpush1.bf16.xpose.msra.mxu0 %v1685
        %1731 = vmatprep.subr.bf16.mxu0 0
        %1732 = vmatpush1.bf16.xpose.msra.mxu0 %v1688
        %1733 = vmatprep.subr.bf16.mxu0 0
        %1734 = vmatpush1.bf16.xpose.msra.mxu0 %v1691
        %1735 = vmatprep.subr.bf16.mxu0 0
        %1736 = vmatpush1.bf16.xpose.msra.mxu0 %v1694
        %1737 = vmatprep.subr.bf16.mxu0 0
        %1738 = vmatpush1.bf16.xpose.msra.mxu0 %v1697
        %1739 = vmatprep.subr.bf16.mxu0 0
        %1740 = vmatpush1.bf16.xpose.msra.mxu0 %v1700
        %1741 = vmatprep.subr.bf16.mxu0 0
        %1742 = vmatpush1.bf16.xpose.msra.mxu0 %v1703
        %1743 = vmatprep.subr.bf16.mxu0 0
        %1744 = vmatpush1.bf16.xpose.msra.mxu0 %v1706
        %1745 = vmatprep.subr.bf16.mxu0 0
        %1746 = vmatpush1.bf16.xpose.msra.mxu0 %v1709
        %1747 = vmatprep.subr.bf16.mxu0 0
        %1748 = vmatpush1.bf16.xpose.msra.mxu0 %v1712
        %1749 = vmatprep.subr.bf16.mxu0 0
        %1750 = vmatpush1.bf16.xpose.msra.mxu0 %v1715
        %1751 = vmatprep.subr.bf16.mxu0 0
        %1752 = vmatpush1.bf16.xpose.msra.mxu0 %v1718
        %1753 = vmatprep.subr.bf16.mxu0 0
        %1754 = vmatpush1.bf16.xpose.msra.mxu0 %v1721
        %1755 = vmatprep.mubr.bf16.mxu0 0
        %1756 = vmatmul.mubr.bf16.gmra.mrb[0].mxu0 %v1652
        %v1757 = vpop.f32.mrb[0].mxu0
        %v1758 = vadd.f32 0.0, %v1757
        %v1759 = vpop.f32.mrb[0].mxu0
        %v1760 = vadd.f32 0.0, %v1759
        %v1761 = vpop.f32.mrb[0].mxu0
        %v1762 = vadd.f32 0.0, %v1761
        %v1763 = vpop.f32.mrb[0].mxu0
        %v1764 = vadd.f32 0.0, %v1763
        %1765 = vmatprep.mubr.bf16.mxu0 0
        %1766 = vmatmul.mubr.bf16.gmra.mrb[0].mxu0 %v1655
        %v1767 = vpop.f32.mrb[0].mxu0
        %v1768 = vadd.f32 0.0, %v1767
        %v1769 = vpop.f32.mrb[0].mxu0
        %v1770 = vadd.f32 0.0, %v1769
        %v1771 = vpop.f32.mrb[0].mxu0
        %v1772 = vadd.f32 0.0, %v1771
        %v1773 = vpop.f32.mrb[0].mxu0
        %v1774 = vadd.f32 0.0, %v1773
        %1775 = vmatprep.mubr.bf16.mxu0 0
        %1776 = vmatmul.mubr.bf16.gmra.mrb[0].mxu0 %v1658
        %v1777 = vpop.f32.mrb[0].mxu0
        %v1778 = vadd.f32 0.0, %v1777
        %v1779 = vpop.f32.mrb[0].mxu0
        %v1780 = vadd.f32 0.0, %v1779
        %v1781 = vpop.f32.mrb[0].mxu0
        %v1782 = vadd.f32 0.0, %v1781
        %v1783 = vpop.f32.mrb[0].mxu0
        %v1784 = vadd.f32 0.0, %v1783
        %1785 = vmatprep.mubr.bf16.mxu0 0
        %1786 = vmatmul.mubr.bf16.gmra.mrb[0].mxu0 %v1661
        %v1787 = vpop.f32.mrb[0].mxu0
        %v1788 = vadd.f32 0.0, %v1787
        %v1789 = vpop.f32.mrb[0].mxu0
        %v1790 = vadd.f32 0.0, %v1789
        %v1791 = vpop.f32.mrb[0].mxu0
        %v1792 = vadd.f32 0.0, %v1791
        %v1793 = vpop.f32.mrb[0].mxu0
        %v1794 = vadd.f32 0.0, %v1793
        %1795 = vmatprep.mubr.bf16.mxu0 0
        %1796 = vmatmul.mubr.bf16.gmra.mrb[0].mxu0 %v1664
        %v1797 = vpop.f32.mrb[0].mxu0
        %v1798 = vadd.f32 0.0, %v1797
        %v1799 = vpop.f32.mrb[0].mxu0
        %v1800 = vadd.f32 0.0, %v1799
        %v1801 = vpop.f32.mrb[0].mxu0
        %v1802 = vadd.f32 0.0, %v1801
        %v1803 = vpop.f32.mrb[0].mxu0
        %v1804 = vadd.f32 0.0, %v1803
        %1805 = vmatprep.mubr.bf16.mxu0 0
        %1806 = vmatmul.mubr.bf16.gmra.mrb[0].mxu0 %v1667
        %v1807 = vpop.f32.mrb[0].mxu0
        %v1808 = vadd.f32 0.0, %v1807
        %v1809 = vpop.f32.mrb[0].mxu0
        %v1810 = vadd.f32 0.0, %v1809
        %v1811 = vpop.f32.mrb[0].mxu0
        %v1812 = vadd.f32 0.0, %v1811
        %v1813 = vpop.f32.mrb[0].mxu0
        %v1814 = vadd.f32 0.0, %v1813
        %1815 = vmatprep.mubr.bf16.mxu0 0
        %1816 = vmatmul.mubr.bf16.gmra.mrb[0].mxu0 %v1670
        %v1817 = vpop.f32.mrb[0].mxu0
        %v1818 = vadd.f32 0.0, %v1817
        %v1819 = vpop.f32.mrb[0].mxu0
        %v1820 = vadd.f32 0.0, %v1819
        %v1821 = vpop.f32.mrb[0].mxu0
        %v1822 = vadd.f32 0.0, %v1821
        %v1823 = vpop.f32.mrb[0].mxu0
        %v1824 = vadd.f32 0.0, %v1823
        %1825 = vmatprep.mubr.bf16.mxu0 0
        %1826 = vmatmul.mubr.bf16.gmra.mrb[0].mxu0 %v1673
        %v1827 = vpop.f32.mrb[0].mxu0
        %v1828 = vadd.f32 0.0, %v1827
        %v1829 = vpop.f32.mrb[0].mxu0
        %v1830 = vadd.f32 0.0, %v1829
        %v1831 = vpop.f32.mrb[0].mxu0
        %v1832 = vadd.f32 0.0, %v1831
        %v1833 = vpop.f32.mrb[0].mxu0
        %v1834 = vadd.f32 0.0, %v1833
        %1835 = vdwg.mxu0
        %v1836 = vmax.f32 %v1758, %v1760
        %1837 = vmax.xlane.f32.xlu0 %v1836
        %v1838 = vpop.xlane.xlu0 %1837
        %v1839 = vmax.f32 %v1762, %v1764
        %1840 = vmax.xlane.f32.xlu0 %v1839
        %v1841 = vpop.xlane.xlu0 %1840
        %v1842 = vmax.f32 %v1768, %v1770
        %1843 = vmax.xlane.f32.xlu0 %v1842
        %v1844 = vpop.xlane.xlu0 %1843
        %v1845 = vmax.f32 %v1772, %v1774
        %1846 = vmax.xlane.f32.xlu0 %v1845
        %v1847 = vpop.xlane.xlu0 %1846
        %v1848 = vmax.f32 %v1778, %v1780
        %1849 = vmax.xlane.f32.xlu0 %v1848
        %v1850 = vpop.xlane.xlu0 %1849
        %v1851 = vmax.f32 %v1782, %v1784
        %1852 = vmax.xlane.f32.xlu0 %v1851
        %v1853 = vpop.xlane.xlu0 %1852
        %v1854 = vmax.f32 %v1788, %v1790
        %1855 = vmax.xlane.f32.xlu0 %v1854
        %v1856 = vpop.xlane.xlu0 %1855
        %v1857 = vmax.f32 %v1792, %v1794
        %1858 = vmax.xlane.f32.xlu0 %v1857
        %v1859 = vpop.xlane.xlu0 %1858
        %v1860 = vmax.f32 %v1798, %v1800
        %1861 = vmax.xlane.f32.xlu0 %v1860
        %v1862 = vpop.xlane.xlu0 %1861
        %v1863 = vmax.f32 %v1802, %v1804
        %1864 = vmax.xlane.f32.xlu0 %v1863
        %v1865 = vpop.xlane.xlu0 %1864
        %v1866 = vmax.f32 %v1808, %v1810
        %1867 = vmax.xlane.f32.xlu0 %v1866
        %v1868 = vpop.xlane.xlu0 %1867
        %v1869 = vmax.f32 %v1812, %v1814
        %1870 = vmax.xlane.f32.xlu0 %v1869
        %v1871 = vpop.xlane.xlu0 %1870
        %v1872 = vmax.f32 %v1818, %v1820
        %1873 = vmax.xlane.f32.xlu0 %v1872
        %v1874 = vpop.xlane.xlu0 %1873
        %v1875 = vmax.f32 %v1822, %v1824
        %1876 = vmax.xlane.f32.xlu0 %v1875
        %v1877 = vpop.xlane.xlu0 %1876
        %v1878 = vmax.f32 %v1828, %v1830
        %1879 = vmax.xlane.f32.xlu0 %v1878
        %v1880 = vpop.xlane.xlu0 %1879
        %v1881 = vmax.f32 %v1832, %v1834
        %1882 = vmax.xlane.f32.xlu0 %v1881
        %v1883 = vpop.xlane.xlu0 %1882
        %v1884 = vsub.f32 %v1758, %v1838
        %v1885 = vsub.f32 %v1760, %v1838
        %v1886 = vsub.f32 %v1762, %v1841
        %v1887 = vsub.f32 %v1764, %v1841
        %v1888 = vsub.f32 %v1768, %v1844
        %v1889 = vsub.f32 %v1770, %v1844
        %v1890 = vsub.f32 %v1772, %v1847
        %v1891 = vsub.f32 %v1774, %v1847
        %v1892 = vsub.f32 %v1778, %v1850
        %v1893 = vsub.f32 %v1780, %v1850
        %v1894 = vsub.f32 %v1782, %v1853
        %v1895 = vsub.f32 %v1784, %v1853
        %v1896 = vsub.f32 %v1788, %v1856
        %v1897 = vsub.f32 %v1790, %v1856
        %v1898 = vsub.f32 %v1792, %v1859
        %v1899 = vsub.f32 %v1794, %v1859
        %v1900 = vsub.f32 %v1798, %v1862
        %v1901 = vsub.f32 %v1800, %v1862
        %v1902 = vsub.f32 %v1802, %v1865
        %v1903 = vsub.f32 %v1804, %v1865
        %v1904 = vsub.f32 %v1808, %v1868
        %v1905 = vsub.f32 %v1810, %v1868
        %v1906 = vsub.f32 %v1812, %v1871
        %v1907 = vsub.f32 %v1814, %v1871
        %v1908 = vsub.f32 %v1818, %v1874
        %v1909 = vsub.f32 %v1820, %v1874
        %v1910 = vsub.f32 %v1822, %v1877
        %v1911 = vsub.f32 %v1824, %v1877
        %v1912 = vsub.f32 %v1828, %v1880
        %v1913 = vsub.f32 %v1830, %v1880
        %v1914 = vsub.f32 %v1832, %v1883
        %v1915 = vsub.f32 %v1834, %v1883
        %v1916 = vmul.f32 %v1884, 1.442695
        %v1917 = vpow.pop %v1916
        %v1918 = vmul.f32 %v1885, 1.442695
        %v1919 = vpow.pop %v1918
        %v1920 = vmul.f32 %v1886, 1.442695
        %v1921 = vpow.pop %v1920
        %v1922 = vmul.f32 %v1887, 1.442695
        %v1923 = vpow.pop %v1922
        %v1924 = vmul.f32 %v1888, 1.442695
        %v1925 = vpow.pop %v1924
        %v1926 = vmul.f32 %v1889, 1.442695
        %v1927 = vpow.pop %v1926
        %v1928 = vmul.f32 %v1890, 1.442695
        %v1929 = vpow.pop %v1928
        %v1930 = vmul.f32 %v1891, 1.442695
        %v1931 = vpow.pop %v1930
        %v1932 = vmul.f32 %v1892, 1.442695
        %v1933 = vpow.pop %v1932
        %v1934 = vmul.f32 %v1893, 1.442695
        %v1935 = vpow.pop %v1934
        %v1936 = vmul.f32 %v1894, 1.442695
        %v1937 = vpow.pop %v1936
        %v1938 = vmul.f32 %v1895, 1.442695
        %v1939 = vpow.pop %v1938
        %v1940 = vmul.f32 %v1896, 1.442695
        %v1941 = vpow.pop %v1940
        %v1942 = vmul.f32 %v1897, 1.442695
        %v1943 = vpow.pop %v1942
        %v1944 = vmul.f32 %v1898, 1.442695
        %v1945 = vpow.pop %v1944
        %v1946 = vmul.f32 %v1899, 1.442695
        %v1947 = vpow.pop %v1946
        %v1948 = vmul.f32 %v1900, 1.442695
        %v1949 = vpow.pop %v1948
        %v1950 = vmul.f32 %v1901, 1.442695
        %v1951 = vpow.pop %v1950
        %v1952 = vmul.f32 %v1902, 1.442695
        %v1953 = vpow.pop %v1952
        %v1954 = vmul.f32 %v1903, 1.442695
        %v1955 = vpow.pop %v1954
        %v1956 = vmul.f32 %v1904, 1.442695
        %v1957 = vpow.pop %v1956
        %v1958 = vmul.f32 %v1905, 1.442695
        %v1959 = vpow.pop %v1958
        %v1960 = vmul.f32 %v1906, 1.442695
        %v1961 = vpow.pop %v1960
        %v1962 = vmul.f32 %v1907, 1.442695
        %v1963 = vpow.pop %v1962
        %v1964 = vmul.f32 %v1908, 1.442695
        %v1965 = vpow.pop %v1964
        %v1966 = vmul.f32 %v1909, 1.442695
        %v1967 = vpow.pop %v1966
        %v1968 = vmul.f32 %v1910, 1.442695
        %v1969 = vpow.pop %v1968
        %v1970 = vmul.f32 %v1911, 1.442695
        %v1971 = vpow.pop %v1970
        %v1972 = vmul.f32 %v1912, 1.442695
        %v1973 = vpow.pop %v1972
        %v1974 = vmul.f32 %v1913, 1.442695
        %v1975 = vpow.pop %v1974
        %v1976 = vmul.f32 %v1914, 1.442695
        %v1977 = vpow.pop %v1976
        %v1978 = vmul.f32 %v1915, 1.442695
        %v1979 = vpow.pop %v1978
        %v1980 = vadd.f32 %v1917, %v1919
        %1981 = vadd.xlane.f32.xlu0 %v1980
        %v1982 = vpop.xlane.xlu0 %1981
        %v1983 = vadd.f32 %v1921, %v1923
        %1984 = vadd.xlane.f32.xlu0 %v1983
        %v1985 = vpop.xlane.xlu0 %1984
        %v1986 = vadd.f32 %v1925, %v1927
        %1987 = vadd.xlane.f32.xlu0 %v1986
        %v1988 = vpop.xlane.xlu0 %1987
        %v1989 = vadd.f32 %v1929, %v1931
        %1990 = vadd.xlane.f32.xlu0 %v1989
        %v1991 = vpop.xlane.xlu0 %1990
        %v1992 = vadd.f32 %v1933, %v1935
        %1993 = vadd.xlane.f32.xlu0 %v1992
        %v1994 = vpop.xlane.xlu0 %1993
        %v1995 = vadd.f32 %v1937, %v1939
        %1996 = vadd.xlane.f32.xlu0 %v1995
        %v1997 = vpop.xlane.xlu0 %1996
        %v1998 = vadd.f32 %v1941, %v1943
        %1999 = vadd.xlane.f32.xlu0 %v1998
        %v2000 = vpop.xlane.xlu0 %1999
        %v2001 = vadd.f32 %v1945, %v1947
        %2002 = vadd.xlane.f32.xlu0 %v2001
        %v2003 = vpop.xlane.xlu0 %2002
        %v2004 = vadd.f32 %v1949, %v1951
        %2005 = vadd.xlane.f32.xlu0 %v2004
        %v2006 = vpop.xlane.xlu0 %2005
        %v2007 = vadd.f32 %v1953, %v1955
        %2008 = vadd.xlane.f32.xlu0 %v2007
        %v2009 = vpop.xlane.xlu0 %2008
        %v2010 = vadd.f32 %v1957, %v1959
        %2011 = vadd.xlane.f32.xlu0 %v2010
        %v2012 = vpop.xlane.xlu0 %2011
        %v2013 = vadd.f32 %v1961, %v1963
        %2014 = vadd.xlane.f32.xlu0 %v2013
        %v2015 = vpop.xlane.xlu0 %2014
        %v2016 = vadd.f32 %v1965, %v1967
        %2017 = vadd.xlane.f32.xlu0 %v2016
        %v2018 = vpop.xlane.xlu0 %2017
        %v2019 = vadd.f32 %v1969, %v1971
        %2020 = vadd.xlane.f32.xlu0 %v2019
        %v2021 = vpop.xlane.xlu0 %2020
        %v2022 = vadd.f32 %v1973, %v1975
        %2023 = vadd.xlane.f32.xlu0 %v2022
        %v2024 = vpop.xlane.xlu0 %2023
        %v2025 = vadd.f32 %v1977, %v1979
        %2026 = vadd.xlane.f32.xlu0 %v2025
        %v2027 = vpop.xlane.xlu0 %2026
        %v2028 = vrcp.pop %v1982
        %v2029 = vmul.f32 %v1917, %v2028
        %v2030 = vmul.f32 %v1919, %v2028
        %v2031 = vrcp.pop %v1985
        %v2032 = vmul.f32 %v1921, %v2031
        %v2033 = vmul.f32 %v1923, %v2031
        %v2034 = vrcp.pop %v1988
        %v2035 = vmul.f32 %v1925, %v2034
        %v2036 = vmul.f32 %v1927, %v2034
        %v2037 = vrcp.pop %v1991
        %v2038 = vmul.f32 %v1929, %v2037
        %v2039 = vmul.f32 %v1931, %v2037
        %v2040 = vrcp.pop %v1994
        %v2041 = vmul.f32 %v1933, %v2040
        %v2042 = vmul.f32 %v1935, %v2040
        %v2043 = vrcp.pop %v1997
        %v2044 = vmul.f32 %v1937, %v2043
        %v2045 = vmul.f32 %v1939, %v2043
        %v2046 = vrcp.pop %v2000
        %v2047 = vmul.f32 %v1941, %v2046
        %v2048 = vmul.f32 %v1943, %v2046
        %v2049 = vrcp.pop %v2003
        %v2050 = vmul.f32 %v1945, %v2049
        %v2051 = vmul.f32 %v1947, %v2049
        %v2052 = vrcp.pop %v2006
        %v2053 = vmul.f32 %v1949, %v2052
        %v2054 = vmul.f32 %v1951, %v2052
        %v2055 = vrcp.pop %v2009
        %v2056 = vmul.f32 %v1953, %v2055
        %v2057 = vmul.f32 %v1955, %v2055
        %v2058 = vrcp.pop %v2012
        %v2059 = vmul.f32 %v1957, %v2058
        %v2060 = vmul.f32 %v1959, %v2058
        %v2061 = vrcp.pop %v2015
        %v2062 = vmul.f32 %v1961, %v2061
        %v2063 = vmul.f32 %v1963, %v2061
        %v2064 = vrcp.pop %v2018
        %v2065 = vmul.f32 %v1965, %v2064
        %v2066 = vmul.f32 %v1967, %v2064
        %v2067 = vrcp.pop %v2021
        %v2068 = vmul.f32 %v1969, %v2067
        %v2069 = vmul.f32 %v1971, %v2067
        %v2070 = vrcp.pop %v2024
        %v2071 = vmul.f32 %v1973, %v2070
        %v2072 = vmul.f32 %v1975, %v2070
        %v2073 = vrcp.pop %v2027
        %v2074 = vmul.f32 %v1977, %v2073
        %v2075 = vmul.f32 %v1979, %v2073
        %v2076 = vpack.c.bf16 %v2032, %v2029
        %v2077 = vpack.c.bf16 %v2033, %v2030
        %v2078 = vpack.c.bf16 %v2038, %v2035
        %v2079 = vpack.c.bf16 %v2039, %v2036
        %v2080 = vpack.c.bf16 %v2044, %v2041
        %v2081 = vpack.c.bf16 %v2045, %v2042
        %v2082 = vpack.c.bf16 %v2050, %v2047
        %v2083 = vpack.c.bf16 %v2051, %v2048
        %v2084 = vpack.c.bf16 %v2056, %v2053
        %v2085 = vpack.c.bf16 %v2057, %v2054
        %v2086 = vpack.c.bf16 %v2062, %v2059
        %v2087 = vpack.c.bf16 %v2063, %v2060
        %v2088 = vpack.c.bf16 %v2068, %v2065
        %v2089 = vpack.c.bf16 %v2069, %v2066
        %v2090 = vpack.c.bf16 %v2074, %v2071
        %v2091 = vpack.c.bf16 %v2075, %v2072
        %2092 = vmatprep.subr.bf16.mxu0 0
        %2093 = vmatpush1.bf16.msra.mxu0 %v1634
        %2094 = vmatprep.subr.bf16.mxu0 0
        %2095 = vmatpush1.bf16.msra.mxu0 %v1635
        %2096 = vmatprep.subr.bf16.mxu0 0
        %2097 = vmatpush1.bf16.msra.mxu0 %v1636
        %2098 = vmatprep.subr.bf16.mxu0 0
        %2099 = vmatpush1.bf16.msra.mxu0 %v1637
        %2100 = vmatprep.subr.bf16.mxu0 0
        %2101 = vmatpush1.bf16.msra.mxu0 %v1638
        %2102 = vmatprep.subr.bf16.mxu0 0
        %2103 = vmatpush1.bf16.msra.mxu0 %v1639
        %2104 = vmatprep.subr.bf16.mxu0 0
        %2105 = vmatpush1.bf16.msra.mxu0 %v1640
        %2106 = vmatprep.subr.bf16.mxu0 0
        %2107 = vmatpush1.bf16.msra.mxu0 %v1641
        %2108 = vmatprep.subr.bf16.mxu0 0
        %2109 = vmatpush1.bf16.msra.mxu0 %v1642
        %2110 = vmatprep.subr.bf16.mxu0 0
        %2111 = vmatpush1.bf16.msra.mxu0 %v1643
        %2112 = vmatprep.subr.bf16.mxu0 0
        %2113 = vmatpush1.bf16.msra.mxu0 %v1644
        %2114 = vmatprep.subr.bf16.mxu0 0
        %2115 = vmatpush1.bf16.msra.mxu0 %v1645
        %2116 = vmatprep.subr.bf16.mxu0 0
        %2117 = vmatpush1.bf16.msra.mxu0 %v1646
        %2118 = vmatprep.subr.bf16.mxu0 0
        %2119 = vmatpush1.bf16.msra.mxu0 %v1647
        %2120 = vmatprep.subr.bf16.mxu0 0
        %2121 = vmatpush1.bf16.msra.mxu0 %v1648
        %2122 = vmatprep.subr.bf16.mxu0 0
        %2123 = vmatpush1.bf16.msra.mxu0 %v1649
        %2124 = vmatprep.mubr.bf16.mxu0 %v2077
        %2125 = vmatmul.mubr.bf16.gmra.mrb[0].mxu0 %v2076
        %v2126 = vpop.f32.mrb[0].mxu0
        %v2127 = vadd.f32 0.0, %v2126
        %v2128 = vpop.f32.mrb[0].mxu0
        %v2129 = vpop.f32.mrb[0].mxu0
        %v2130 = vadd.f32 0.0, %v2129
        %v2131 = vpop.f32.mrb[0].mxu0
        %2132 = vmatprep.mubr.bf16.mxu0 %v2079
        %2133 = vmatmul.mubr.bf16.gmra.mrb[0].mxu0 %v2078
        %v2134 = vpop.f32.mrb[0].mxu0
        %v2135 = vadd.f32 0.0, %v2134
        %v2136 = vpop.f32.mrb[0].mxu0
        %v2137 = vpop.f32.mrb[0].mxu0
        %v2138 = vadd.f32 0.0, %v2137
        %v2139 = vpop.f32.mrb[0].mxu0
        %2140 = vmatprep.mubr.bf16.mxu0 %v2081
        %2141 = vmatmul.mubr.bf16.gmra.mrb[0].mxu0 %v2080
        %v2142 = vpop.f32.mrb[0].mxu0
        %v2143 = vadd.f32 0.0, %v2142
        %v2144 = vpop.f32.mrb[0].mxu0
        %v2145 = vpop.f32.mrb[0].mxu0
        %v2146 = vadd.f32 0.0, %v2145
        %v2147 = vpop.f32.mrb[0].mxu0
        %2148 = vmatprep.mubr.bf16.mxu0 %v2083
        %2149 = vmatmul.mubr.bf16.gmra.mrb[0].mxu0 %v2082
        %v2150 = vpop.f32.mrb[0].mxu0
        %v2151 = vadd.f32 0.0, %v2150
        %v2152 = vpop.f32.mrb[0].mxu0
        %v2153 = vpop.f32.mrb[0].mxu0
        %v2154 = vadd.f32 0.0, %v2153
        %v2155 = vpop.f32.mrb[0].mxu0
        %2156 = vmatprep.mubr.bf16.mxu0 %v2085
        %2157 = vmatmul.mubr.bf16.gmra.mrb[0].mxu0 %v2084
        %v2158 = vpop.f32.mrb[0].mxu0
        %v2159 = vadd.f32 0.0, %v2158
        %v2160 = vpop.f32.mrb[0].mxu0
        %v2161 = vpop.f32.mrb[0].mxu0
        %v2162 = vadd.f32 0.0, %v2161
        %v2163 = vpop.f32.mrb[0].mxu0
        %2164 = vmatprep.mubr.bf16.mxu0 %v2087
        %2165 = vmatmul.mubr.bf16.gmra.mrb[0].mxu0 %v2086
        %v2166 = vpop.f32.mrb[0].mxu0
        %v2167 = vadd.f32 0.0, %v2166
        %v2168 = vpop.f32.mrb[0].mxu0
        %v2169 = vpop.f32.mrb[0].mxu0
        %v2170 = vadd.f32 0.0, %v2169
        %v2171 = vpop.f32.mrb[0].mxu0
        %2172 = vmatprep.mubr.bf16.mxu0 %v2089
        %2173 = vmatmul.mubr.bf16.gmra.mrb[0].mxu0 %v2088
        %v2174 = vpop.f32.mrb[0].mxu0
        %v2175 = vadd.f32 0.0, %v2174
        %v2176 = vpop.f32.mrb[0].mxu0
        %v2177 = vpop.f32.mrb[0].mxu0
        %v2178 = vadd.f32 0.0, %v2177
        %v2179 = vpop.f32.mrb[0].mxu0
        %2180 = vmatprep.mubr.bf16.mxu0 %v2091
        %2181 = vmatmul.mubr.bf16.gmra.mrb[0].mxu0 %v2090
        %v2182 = vpop.f32.mrb[0].mxu0
        %v2183 = vadd.f32 0.0, %v2182
        %v2184 = vpop.f32.mrb[0].mxu0
        %v2185 = vpop.f32.mrb[0].mxu0
        %v2186 = vadd.f32 0.0, %v2185
        %v2187 = vpop.f32.mrb[0].mxu0
        %2188 = vdwg.mxu0
        %v2189 = vpack.c.bf16 %v2130, %v2127
        %v2190 = vpack.c.bf16 %v2138, %v2135
        %v2191 = vpack.c.bf16 %v2146, %v2143
        %v2192 = vpack.c.bf16 %v2154, %v2151
        %v2193 = vpack.c.bf16 %v2162, %v2159
        %v2194 = vpack.c.bf16 %v2170, %v2167
        %v2195 = vpack.c.bf16 %v2178, %v2175
        %v2196 = vpack.c.bf16 %v2186, %v2183
        %2197 = vst.msk [vmem:[#allocation4] sm:$0xff] %vm1650, %v2189
        %2198 = vst.msk [vmem:[#allocation4 + $0x8] sm:$0xff] %vm1650, %v2190
        %2199 = vst.msk [vmem:[#allocation4 + $0x10] sm:$0xff] %vm1650, %v2191
        %2200 = vst.msk [vmem:[#allocation4 + $0x18] sm:$0xff] %vm1650, %v2192
        %2201 = vst.msk [vmem:[#allocation4 + $0x20] sm:$0xff] %vm1650, %v2193
        %2202 = vst.msk [vmem:[#allocation4 + $0x28] sm:$0xff] %vm1650, %v2194
        %2203 = vst.msk [vmem:[#allocation4 + $0x30] sm:$0xff] %vm1650, %v2195
        %2204 = vst.msk [vmem:[#allocation4 + $0x38] sm:$0xff] %vm1650, %v2196
        %v2205 = vld [vmem:[#allocation2] sm:$0xff]
        %v2206 = vld [vmem:[#allocation2 + $0x8] sm:$0xff]
        %v2207 = vld [vmem:[#allocation2 + $0x10] sm:$0xff]
        %v2208 = vld [vmem:[#allocation2 + $0x18] sm:$0xff]
        %v2209 = vld [vmem:[#allocation2 + $0x20] sm:$0xff]
        %v2210 = vld [vmem:[#allocation2 + $0x28] sm:$0xff]
        %v2211 = vld [vmem:[#allocation2 + $0x30] sm:$0xff]
        %v2212 = vld [vmem:[#allocation2 + $0x38] sm:$0xff]
        %v2213 = vld [vmem:[#allocation2 + $0x40] sm:$0xff]
        %v2214 = vld [vmem:[#allocation2 + $0x48] sm:$0xff]
        %v2215 = vld [vmem:[#allocation2 + $0x50] sm:$0xff]
        %v2216 = vld [vmem:[#allocation2 + $0x58] sm:$0xff]
        %v2217 = vld [vmem:[#allocation2 + $0x60] sm:$0xff]
        %v2218 = vld [vmem:[#allocation2 + $0x68] sm:$0xff]
        %v2219 = vld [vmem:[#allocation2 + $0x70] sm:$0xff]
        %v2220 = vld [vmem:[#allocation2 + $0x78] sm:$0xff]
        %v2221 = vld [vmem:[#allocation3] sm:$0xff]
        %v2222 = vld [vmem:[#allocation3 + $0x8] sm:$0xff]
        %v2223 = vld [vmem:[#allocation3 + $0x10] sm:$0xff]
        %v2224 = vld [vmem:[#allocation3 + $0x18] sm:$0xff]
        %v2225 = vld [vmem:[#allocation3 + $0x20] sm:$0xff]
        %v2226 = vld [vmem:[#allocation3 + $0x28] sm:$0xff]
        %v2227 = vld [vmem:[#allocation3 + $0x30] sm:$0xff]
        %v2228 = vld [vmem:[#allocation3 + $0x38] sm:$0xff]
        %v2229 = vld [vmem:[#allocation3 + $0x40] sm:$0xff]
        %v2230 = vld [vmem:[#allocation3 + $0x48] sm:$0xff]
        %v2231 = vld [vmem:[#allocation3 + $0x50] sm:$0xff]
        %v2232 = vld [vmem:[#allocation3 + $0x58] sm:$0xff]
        %v2233 = vld [vmem:[#allocation3 + $0x60] sm:$0xff]
        %v2234 = vld [vmem:[#allocation3 + $0x68] sm:$0xff]
        %v2235 = vld [vmem:[#allocation3 + $0x70] sm:$0xff]
        %v2236 = vld [vmem:[#allocation3 + $0x78] sm:$0xff]
        %2245 = vrot.lane.b32.xlu0 %v1610, 96
        %v2246 = vpop.permute.xlu0 %2245
        %2247 = vrot.lane.b32.xlu0 %v1611, 96
        %v2248 = vpop.permute.xlu0 %2247
        %2249 = vrot.lane.b32.xlu0 %v1612, 96
        %v2250 = vpop.permute.xlu0 %2249
        %2251 = vrot.lane.b32.xlu0 %v1613, 96
        %v2252 = vpop.permute.xlu0 %2251
        %2253 = vrot.lane.b32.xlu0 %v1614, 96
        %v2254 = vpop.permute.xlu0 %2253
        %2255 = vrot.lane.b32.xlu0 %v1615, 96
        %v2256 = vpop.permute.xlu0 %2255
        %2257 = vrot.lane.b32.xlu0 %v1616, 96
        %v2258 = vpop.permute.xlu0 %2257
        %2259 = vrot.lane.b32.xlu0 %v1617, 96
        %v2260 = vpop.permute.xlu0 %2259
        %2277 = vrot.lane.b32.xlu0 %v2205, 96
        %v2278 = vpop.permute.xlu0 %2277
        %2279 = vrot.lane.b32.xlu0 %v2206, 96
        %v2280 = vpop.permute.xlu0 %2279
        %2281 = vrot.lane.b32.xlu0 %v2207, 96
        %v2282 = vpop.permute.xlu0 %2281
        %2283 = vrot.lane.b32.xlu0 %v2208, 96
        %v2284 = vpop.permute.xlu0 %2283
        %2285 = vrot.lane.b32.xlu0 %v2209, 96
        %v2286 = vpop.permute.xlu0 %2285
        %2287 = vrot.lane.b32.xlu0 %v2210, 96
        %v2288 = vpop.permute.xlu0 %2287
        %2289 = vrot.lane.b32.xlu0 %v2211, 96
        %v2290 = vpop.permute.xlu0 %2289
        %2291 = vrot.lane.b32.xlu0 %v2212, 96
        %v2292 = vpop.permute.xlu0 %2291
        %2293 = vrot.lane.b32.xlu0 %v2213, 96
        %v2294 = vpop.permute.xlu0 %2293
        %2295 = vrot.lane.b32.xlu0 %v2214, 96
        %v2296 = vpop.permute.xlu0 %2295
        %2297 = vrot.lane.b32.xlu0 %v2215, 96
        %v2298 = vpop.permute.xlu0 %2297
        %2299 = vrot.lane.b32.xlu0 %v2216, 96
        %v2300 = vpop.permute.xlu0 %2299
        %2301 = vrot.lane.b32.xlu0 %v2217, 96
        %v2302 = vpop.permute.xlu0 %2301
        %2303 = vrot.lane.b32.xlu0 %v2218, 96
        %v2304 = vpop.permute.xlu0 %2303
        %2305 = vrot.lane.b32.xlu0 %v2219, 96
        %v2306 = vpop.permute.xlu0 %2305
        %2307 = vrot.lane.b32.xlu0 %v2220, 96
        %v2308 = vpop.permute.xlu0 %2307
        %v2310 = vsel %vm1650, %v2246, 0
        %v2313 = vsel %vm1650, %v2248, 0
        %v2316 = vsel %vm1650, %v2250, 0
        %v2319 = vsel %vm1650, %v2252, 0
        %v2322 = vsel %vm1650, %v2254, 0
        %v2325 = vsel %vm1650, %v2256, 0
        %v2328 = vsel %vm1650, %v2258, 0
        %v2331 = vsel %vm1650, %v2260, 0
        %v2334 = vsel %vm1650, %v2278, 0
        %v2337 = vsel %vm1650, %v2280, 0
        %v2340 = vsel %vm1650, %v2282, 0
        %v2343 = vsel %vm1650, %v2284, 0
        %v2346 = vsel %vm1650, %v2286, 0
        %v2349 = vsel %vm1650, %v2288, 0
        %v2352 = vsel %vm1650, %v2290, 0
        %v2355 = vsel %vm1650, %v2292, 0
        %v2358 = vsel %vm1650, %v2294, 0
        %v2361 = vsel %vm1650, %v2296, 0
        %v2364 = vsel %vm1650, %v2298, 0
        %v2367 = vsel %vm1650, %v2300, 0
        %v2370 = vsel %vm1650, %v2302, 0
        %v2373 = vsel %vm1650, %v2304, 0
        %v2376 = vsel %vm1650, %v2306, 0
        %v2379 = vsel %vm1650, %v2308, 0
        %2381 = vmatprep.subr.bf16.mxu0 0
        %2382 = vmatpush1.bf16.xpose.msra.mxu0 %v2334
        %2383 = vmatprep.subr.bf16.mxu0 0
        %2384 = vmatpush1.bf16.xpose.msra.mxu0 %v2337
        %2385 = vmatprep.subr.bf16.mxu0 0
        %2386 = vmatpush1.bf16.xpose.msra.mxu0 %v2340
        %2387 = vmatprep.subr.bf16.mxu0 0
        %2388 = vmatpush1.bf16.xpose.msra.mxu0 %v2343
        %2389 = vmatprep.subr.bf16.mxu0 0
        %2390 = vmatpush1.bf16.xpose.msra.mxu0 %v2346
        %2391 = vmatprep.subr.bf16.mxu0 0
        %2392 = vmatpush1.bf16.xpose.msra.mxu0 %v2349
        %2393 = vmatprep.subr.bf16.mxu0 0
        %2394 = vmatpush1.bf16.xpose.msra.mxu0 %v2352
        %2395 = vmatprep.subr.bf16.mxu0 0
        %2396 = vmatpush1.bf16.xpose.msra.mxu0 %v2355
        %2397 = vmatprep.subr.bf16.mxu0 0
        %2398 = vmatpush1.bf16.xpose.msra.mxu0 %v2358
        %2399 = vmatprep.subr.bf16.mxu0 0
        %2400 = vmatpush1.bf16.xpose.msra.mxu0 %v2361
        %2401 = vmatprep.subr.bf16.mxu0 0
        %2402 = vmatpush1.bf16.xpose.msra.mxu0 %v2364
        %2403 = vmatprep.subr.bf16.mxu0 0
        %2404 = vmatpush1.bf16.xpose.msra.mxu0 %v2367
        %2405 = vmatprep.subr.bf16.mxu0 0
        %2406 = vmatpush1.bf16.xpose.msra.mxu0 %v2370
        %2407 = vmatprep.subr.bf16.mxu0 0
        %2408 = vmatpush1.bf16.xpose.msra.mxu0 %v2373
        %2409 = vmatprep.subr.bf16.mxu0 0
        %2410 = vmatpush1.bf16.xpose.msra.mxu0 %v2376
        %2411 = vmatprep.subr.bf16.mxu0 0
        %2412 = vmatpush1.bf16.xpose.msra.mxu0 %v2379
        %2413 = vmatprep.mubr.bf16.mxu0 0
        %2414 = vmatmul.mubr.bf16.gmra.mrb[0].mxu0 %v2310
        %v2415 = vpop.f32.mrb[0].mxu0
        %v2416 = vadd.f32 0.0, %v2415
        %v2417 = vpop.f32.mrb[0].mxu0
        %v2418 = vadd.f32 0.0, %v2417
        %v2419 = vpop.f32.mrb[0].mxu0
        %v2420 = vadd.f32 0.0, %v2419
        %v2421 = vpop.f32.mrb[0].mxu0
        %v2422 = vadd.f32 0.0, %v2421
        %2423 = vmatprep.mubr.bf16.mxu0 0
        %2424 = vmatmul.mubr.bf16.gmra.mrb[0].mxu0 %v2313
        %v2425 = vpop.f32.mrb[0].mxu0
        %v2426 = vadd.f32 0.0, %v2425
        %v2427 = vpop.f32.mrb[0].mxu0
        %v2428 = vadd.f32 0.0, %v2427
        %v2429 = vpop.f32.mrb[0].mxu0
        %v2430 = vadd.f32 0.0, %v2429
        %v2431 = vpop.f32.mrb[0].mxu0
        %v2432 = vadd.f32 0.0, %v2431
        %2433 = vmatprep.mubr.bf16.mxu0 0
        %2434 = vmatmul.mubr.bf16.gmra.mrb[0].mxu0 %v2316
        %v2435 = vpop.f32.mrb[0].mxu0
        %v2436 = vadd.f32 0.0, %v2435
        %v2437 = vpop.f32.mrb[0].mxu0
        %v2438 = vadd.f32 0.0, %v2437
        %v2439 = vpop.f32.mrb[0].mxu0
        %v2440 = vadd.f32 0.0, %v2439
        %v2441 = vpop.f32.mrb[0].mxu0
        %v2442 = vadd.f32 0.0, %v2441
        %2443 = vmatprep.mubr.bf16.mxu0 0
        %2444 = vmatmul.mubr.bf16.gmra.mrb[0].mxu0 %v2319
        %v2445 = vpop.f32.mrb[0].mxu0
        %v2446 = vadd.f32 0.0, %v2445
        %v2447 = vpop.f32.mrb[0].mxu0
        %v2448 = vadd.f32 0.0, %v2447
        %v2449 = vpop.f32.mrb[0].mxu0
        %v2450 = vadd.f32 0.0, %v2449
        %v2451 = vpop.f32.mrb[0].mxu0
        %v2452 = vadd.f32 0.0, %v2451
        %2453 = vmatprep.mubr.bf16.mxu0 0
        %2454 = vmatmul.mubr.bf16.gmra.mrb[0].mxu0 %v2322
        %v2455 = vpop.f32.mrb[0].mxu0
        %v2456 = vadd.f32 0.0, %v2455
        %v2457 = vpop.f32.mrb[0].mxu0
        %v2458 = vadd.f32 0.0, %v2457
        %v2459 = vpop.f32.mrb[0].mxu0
        %v2460 = vadd.f32 0.0, %v2459
        %v2461 = vpop.f32.mrb[0].mxu0
        %v2462 = vadd.f32 0.0, %v2461
        %2463 = vmatprep.mubr.bf16.mxu0 0
        %2464 = vmatmul.mubr.bf16.gmra.mrb[0].mxu0 %v2325
        %v2465 = vpop.f32.mrb[0].mxu0
        %v2466 = vadd.f32 0.0, %v2465
        %v2467 = vpop.f32.mrb[0].mxu0
        %v2468 = vadd.f32 0.0, %v2467
        %v2469 = vpop.f32.mrb[0].mxu0
        %v2470 = vadd.f32 0.0, %v2469
        %v2471 = vpop.f32.mrb[0].mxu0
        %v2472 = vadd.f32 0.0, %v2471
        %2473 = vmatprep.mubr.bf16.mxu0 0
        %2474 = vmatmul.mubr.bf16.gmra.mrb[0].mxu0 %v2328
        %v2475 = vpop.f32.mrb[0].mxu0
        %v2476 = vadd.f32 0.0, %v2475
        %v2477 = vpop.f32.mrb[0].mxu0
        %v2478 = vadd.f32 0.0, %v2477
        %v2479 = vpop.f32.mrb[0].mxu0
        %v2480 = vadd.f32 0.0, %v2479
        %v2481 = vpop.f32.mrb[0].mxu0
        %v2482 = vadd.f32 0.0, %v2481
        %2483 = vmatprep.mubr.bf16.mxu0 0
        %2484 = vmatmul.mubr.bf16.gmra.mrb[0].mxu0 %v2331
        %v2485 = vpop.f32.mrb[0].mxu0
        %v2486 = vadd.f32 0.0, %v2485
        %v2487 = vpop.f32.mrb[0].mxu0
        %v2488 = vadd.f32 0.0, %v2487
        %v2489 = vpop.f32.mrb[0].mxu0
        %v2490 = vadd.f32 0.0, %v2489
        %v2491 = vpop.f32.mrb[0].mxu0
        %v2492 = vadd.f32 0.0, %v2491
        %2493 = vdwg.mxu0
        %v2494 = vmax.f32 %v2416, %v2418
        %2495 = vmax.xlane.f32.xlu0 %v2494
        %v2496 = vpop.xlane.xlu0 %2495
        %v2497 = vmax.f32 %v2420, %v2422
        %2498 = vmax.xlane.f32.xlu0 %v2497
        %v2499 = vpop.xlane.xlu0 %2498
        %v2500 = vmax.f32 %v2426, %v2428
        %2501 = vmax.xlane.f32.xlu0 %v2500
        %v2502 = vpop.xlane.xlu0 %2501
        %v2503 = vmax.f32 %v2430, %v2432
        %2504 = vmax.xlane.f32.xlu0 %v2503
        %v2505 = vpop.xlane.xlu0 %2504
        %v2506 = vmax.f32 %v2436, %v2438
        %2507 = vmax.xlane.f32.xlu0 %v2506
        %v2508 = vpop.xlane.xlu0 %2507
        %v2509 = vmax.f32 %v2440, %v2442
        %2510 = vmax.xlane.f32.xlu0 %v2509
        %v2511 = vpop.xlane.xlu0 %2510
        %v2512 = vmax.f32 %v2446, %v2448
        %2513 = vmax.xlane.f32.xlu0 %v2512
        %v2514 = vpop.xlane.xlu0 %2513
        %v2515 = vmax.f32 %v2450, %v2452
        %2516 = vmax.xlane.f32.xlu0 %v2515
        %v2517 = vpop.xlane.xlu0 %2516
        %v2518 = vmax.f32 %v2456, %v2458
        %2519 = vmax.xlane.f32.xlu0 %v2518
        %v2520 = vpop.xlane.xlu0 %2519
        %v2521 = vmax.f32 %v2460, %v2462
        %2522 = vmax.xlane.f32.xlu0 %v2521
        %v2523 = vpop.xlane.xlu0 %2522
        %v2524 = vmax.f32 %v2466, %v2468
        %2525 = vmax.xlane.f32.xlu0 %v2524
        %v2526 = vpop.xlane.xlu0 %2525
        %v2527 = vmax.f32 %v2470, %v2472
        %2528 = vmax.xlane.f32.xlu0 %v2527
        %v2529 = vpop.xlane.xlu0 %2528
        %v2530 = vmax.f32 %v2476, %v2478
        %2531 = vmax.xlane.f32.xlu0 %v2530
        %v2532 = vpop.xlane.xlu0 %2531
        %v2533 = vmax.f32 %v2480, %v2482
        %2534 = vmax.xlane.f32.xlu0 %v2533
        %v2535 = vpop.xlane.xlu0 %2534
        %v2536 = vmax.f32 %v2486, %v2488
        %2537 = vmax.xlane.f32.xlu0 %v2536
        %v2538 = vpop.xlane.xlu0 %2537
        %v2539 = vmax.f32 %v2490, %v2492
        %2540 = vmax.xlane.f32.xlu0 %v2539
        %v2541 = vpop.xlane.xlu0 %2540
        %v2542 = vsub.f32 %v2416, %v2496
        %v2543 = vsub.f32 %v2418, %v2496
        %v2544 = vsub.f32 %v2420, %v2499
        %v2545 = vsub.f32 %v2422, %v2499
        %v2546 = vsub.f32 %v2426, %v2502
        %v2547 = vsub.f32 %v2428, %v2502
        %v2548 = vsub.f32 %v2430, %v2505
        %v2549 = vsub.f32 %v2432, %v2505
        %v2550 = vsub.f32 %v2436, %v2508
        %v2551 = vsub.f32 %v2438, %v2508
        %v2552 = vsub.f32 %v2440, %v2511
        %v2553 = vsub.f32 %v2442, %v2511
        %v2554 = vsub.f32 %v2446, %v2514
        %v2555 = vsub.f32 %v2448, %v2514
        %v2556 = vsub.f32 %v2450, %v2517
        %v2557 = vsub.f32 %v2452, %v2517
        %v2558 = vsub.f32 %v2456, %v2520
        %v2559 = vsub.f32 %v2458, %v2520
        %v2560 = vsub.f32 %v2460, %v2523
        %v2561 = vsub.f32 %v2462, %v2523
        %v2562 = vsub.f32 %v2466, %v2526
        %v2563 = vsub.f32 %v2468, %v2526
        %v2564 = vsub.f32 %v2470, %v2529
        %v2565 = vsub.f32 %v2472, %v2529
        %v2566 = vsub.f32 %v2476, %v2532
        %v2567 = vsub.f32 %v2478, %v2532
        %v2568 = vsub.f32 %v2480, %v2535
        %v2569 = vsub.f32 %v2482, %v2535
        %v2570 = vsub.f32 %v2486, %v2538
        %v2571 = vsub.f32 %v2488, %v2538
        %v2572 = vsub.f32 %v2490, %v2541
        %v2573 = vsub.f32 %v2492, %v2541
        %v2574 = vmul.f32 %v2542, 1.442695
        %v2575 = vpow.pop %v2574
        %v2576 = vmul.f32 %v2543, 1.442695
        %v2577 = vpow.pop %v2576
        %v2578 = vmul.f32 %v2544, 1.442695
        %v2579 = vpow.pop %v2578
        %v2580 = vmul.f32 %v2545, 1.442695
        %v2581 = vpow.pop %v2580
        %v2582 = vmul.f32 %v2546, 1.442695
        %v2583 = vpow.pop %v2582
        %v2584 = vmul.f32 %v2547, 1.442695
        %v2585 = vpow.pop %v2584
        %v2586 = vmul.f32 %v2548, 1.442695
        %v2587 = vpow.pop %v2586
        %v2588 = vmul.f32 %v2549, 1.442695
        %v2589 = vpow.pop %v2588
        %v2590 = vmul.f32 %v2550, 1.442695
        %v2591 = vpow.pop %v2590
        %v2592 = vmul.f32 %v2551, 1.442695
        %v2593 = vpow.pop %v2592
        %v2594 = vmul.f32 %v2552, 1.442695
        %v2595 = vpow.pop %v2594
        %v2596 = vmul.f32 %v2553, 1.442695
        %v2597 = vpow.pop %v2596
        %v2598 = vmul.f32 %v2554, 1.442695
        %v2599 = vpow.pop %v2598
        %v2600 = vmul.f32 %v2555, 1.442695
        %v2601 = vpow.pop %v2600
        %v2602 = vmul.f32 %v2556, 1.442695
        %v2603 = vpow.pop %v2602
        %v2604 = vmul.f32 %v2557, 1.442695
        %v2605 = vpow.pop %v2604
        %v2606 = vmul.f32 %v2558, 1.442695
        %v2607 = vpow.pop %v2606
        %v2608 = vmul.f32 %v2559, 1.442695
        %v2609 = vpow.pop %v2608
        %v2610 = vmul.f32 %v2560, 1.442695
        %v2611 = vpow.pop %v2610
        %v2612 = vmul.f32 %v2561, 1.442695
        %v2613 = vpow.pop %v2612
        %v2614 = vmul.f32 %v2562, 1.442695
        %v2615 = vpow.pop %v2614
        %v2616 = vmul.f32 %v2563, 1.442695
        %v2617 = vpow.pop %v2616
        %v2618 = vmul.f32 %v2564, 1.442695
        %v2619 = vpow.pop %v2618
        %v2620 = vmul.f32 %v2565, 1.442695
        %v2621 = vpow.pop %v2620
        %v2622 = vmul.f32 %v2566, 1.442695
        %v2623 = vpow.pop %v2622
        %v2624 = vmul.f32 %v2567, 1.442695
        %v2625 = vpow.pop %v2624
        %v2626 = vmul.f32 %v2568, 1.442695
        %v2627 = vpow.pop %v2626
        %v2628 = vmul.f32 %v2569, 1.442695
        %v2629 = vpow.pop %v2628
        %v2630 = vmul.f32 %v2570, 1.442695
        %v2631 = vpow.pop %v2630
        %v2632 = vmul.f32 %v2571, 1.442695
        %v2633 = vpow.pop %v2632
        %v2634 = vmul.f32 %v2572, 1.442695
        %v2635 = vpow.pop %v2634
        %v2636 = vmul.f32 %v2573, 1.442695
        %v2637 = vpow.pop %v2636
        %v2638 = vadd.f32 %v2575, %v2577
        %2639 = vadd.xlane.f32.xlu0 %v2638
        %v2640 = vpop.xlane.xlu0 %2639
        %v2641 = vadd.f32 %v2579, %v2581
        %2642 = vadd.xlane.f32.xlu0 %v2641
        %v2643 = vpop.xlane.xlu0 %2642
        %v2644 = vadd.f32 %v2583, %v2585
        %2645 = vadd.xlane.f32.xlu0 %v2644
        %v2646 = vpop.xlane.xlu0 %2645
        %v2647 = vadd.f32 %v2587, %v2589
        %2648 = vadd.xlane.f32.xlu0 %v2647
        %v2649 = vpop.xlane.xlu0 %2648
        %v2650 = vadd.f32 %v2591, %v2593
        %2651 = vadd.xlane.f32.xlu0 %v2650
        %v2652 = vpop.xlane.xlu0 %2651
        %v2653 = vadd.f32 %v2595, %v2597
        %2654 = vadd.xlane.f32.xlu0 %v2653
        %v2655 = vpop.xlane.xlu0 %2654
        %v2656 = vadd.f32 %v2599, %v2601
        %2657 = vadd.xlane.f32.xlu0 %v2656
        %v2658 = vpop.xlane.xlu0 %2657
        %v2659 = vadd.f32 %v2603, %v2605
        %2660 = vadd.xlane.f32.xlu0 %v2659
        %v2661 = vpop.xlane.xlu0 %2660
        %v2662 = vadd.f32 %v2607, %v2609
        %2663 = vadd.xlane.f32.xlu0 %v2662
        %v2664 = vpop.xlane.xlu0 %2663
        %v2665 = vadd.f32 %v2611, %v2613
        %2666 = vadd.xlane.f32.xlu0 %v2665
        %v2667 = vpop.xlane.xlu0 %2666
        %v2668 = vadd.f32 %v2615, %v2617
        %2669 = vadd.xlane.f32.xlu0 %v2668
        %v2670 = vpop.xlane.xlu0 %2669
        %v2671 = vadd.f32 %v2619, %v2621
        %2672 = vadd.xlane.f32.xlu0 %v2671
        %v2673 = vpop.xlane.xlu0 %2672
        %v2674 = vadd.f32 %v2623, %v2625
        %2675 = vadd.xlane.f32.xlu0 %v2674
        %v2676 = vpop.xlane.xlu0 %2675
        %v2677 = vadd.f32 %v2627, %v2629
        %2678 = vadd.xlane.f32.xlu0 %v2677
        %v2679 = vpop.xlane.xlu0 %2678
        %v2680 = vadd.f32 %v2631, %v2633
        %2681 = vadd.xlane.f32.xlu0 %v2680
        %v2682 = vpop.xlane.xlu0 %2681
        %v2683 = vadd.f32 %v2635, %v2637
        %2684 = vadd.xlane.f32.xlu0 %v2683
        %v2685 = vpop.xlane.xlu0 %2684
        %v2686 = vrcp.pop %v2640
        %v2687 = vmul.f32 %v2575, %v2686
        %v2688 = vmul.f32 %v2577, %v2686
        %v2689 = vrcp.pop %v2643
        %v2690 = vmul.f32 %v2579, %v2689
        %v2691 = vmul.f32 %v2581, %v2689
        %v2692 = vrcp.pop %v2646
        %v2693 = vmul.f32 %v2583, %v2692
        %v2694 = vmul.f32 %v2585, %v2692
        %v2695 = vrcp.pop %v2649
        %v2696 = vmul.f32 %v2587, %v2695
        %v2697 = vmul.f32 %v2589, %v2695
        %v2698 = vrcp.pop %v2652
        %v2699 = vmul.f32 %v2591, %v2698
        %v2700 = vmul.f32 %v2593, %v2698
        %v2701 = vrcp.pop %v2655
        %v2702 = vmul.f32 %v2595, %v2701
        %v2703 = vmul.f32 %v2597, %v2701
        %v2704 = vrcp.pop %v2658
        %v2705 = vmul.f32 %v2599, %v2704
        %v2706 = vmul.f32 %v2601, %v2704
        %v2707 = vrcp.pop %v2661
        %v2708 = vmul.f32 %v2603, %v2707
        %v2709 = vmul.f32 %v2605, %v2707
        %v2710 = vrcp.pop %v2664
        %v2711 = vmul.f32 %v2607, %v2710
        %v2712 = vmul.f32 %v2609, %v2710
        %v2713 = vrcp.pop %v2667
        %v2714 = vmul.f32 %v2611, %v2713
        %v2715 = vmul.f32 %v2613, %v2713
        %v2716 = vrcp.pop %v2670
        %v2717 = vmul.f32 %v2615, %v2716
        %v2718 = vmul.f32 %v2617, %v2716
        %v2719 = vrcp.pop %v2673
        %v2720 = vmul.f32 %v2619, %v2719
        %v2721 = vmul.f32 %v2621, %v2719
        %v2722 = vrcp.pop %v2676
        %v2723 = vmul.f32 %v2623, %v2722
        %v2724 = vmul.f32 %v2625, %v2722
        %v2725 = vrcp.pop %v2679
        %v2726 = vmul.f32 %v2627, %v2725
        %v2727 = vmul.f32 %v2629, %v2725
        %v2728 = vrcp.pop %v2682
        %v2729 = vmul.f32 %v2631, %v2728
        %v2730 = vmul.f32 %v2633, %v2728
        %v2731 = vrcp.pop %v2685
        %v2732 = vmul.f32 %v2635, %v2731
        %v2733 = vmul.f32 %v2637, %v2731
        %v2734 = vpack.c.bf16 %v2690, %v2687
        %v2735 = vpack.c.bf16 %v2691, %v2688
        %v2736 = vpack.c.bf16 %v2696, %v2693
        %v2737 = vpack.c.bf16 %v2697, %v2694
        %v2738 = vpack.c.bf16 %v2702, %v2699
        %v2739 = vpack.c.bf16 %v2703, %v2700
        %v2740 = vpack.c.bf16 %v2708, %v2705
        %v2741 = vpack.c.bf16 %v2709, %v2706
        %v2742 = vpack.c.bf16 %v2714, %v2711
        %v2743 = vpack.c.bf16 %v2715, %v2712
        %v2744 = vpack.c.bf16 %v2720, %v2717
        %v2745 = vpack.c.bf16 %v2721, %v2718
        %v2746 = vpack.c.bf16 %v2726, %v2723
        %v2747 = vpack.c.bf16 %v2727, %v2724
        %v2748 = vpack.c.bf16 %v2732, %v2729
        %v2749 = vpack.c.bf16 %v2733, %v2730
        %2766 = vrot.lane.b32.xlu0 %v2221, 96
        %v2767 = vpop.permute.xlu0 %2766
        %2768 = vrot.lane.b32.xlu0 %v2222, 96
        %v2769 = vpop.permute.xlu0 %2768
        %2770 = vrot.lane.b32.xlu0 %v2223, 96
        %v2771 = vpop.permute.xlu0 %2770
        %2772 = vrot.lane.b32.xlu0 %v2224, 96
        %v2773 = vpop.permute.xlu0 %2772
        %2774 = vrot.lane.b32.xlu0 %v2225, 96
        %v2775 = vpop.permute.xlu0 %2774
        %2776 = vrot.lane.b32.xlu0 %v2226, 96
        %v2777 = vpop.permute.xlu0 %2776
        %2778 = vrot.lane.b32.xlu0 %v2227, 96
        %v2779 = vpop.permute.xlu0 %2778
        %2780 = vrot.lane.b32.xlu0 %v2228, 96
        %v2781 = vpop.permute.xlu0 %2780
        %2782 = vrot.lane.b32.xlu0 %v2229, 96
        %v2783 = vpop.permute.xlu0 %2782
        %2784 = vrot.lane.b32.xlu0 %v2230, 96
        %v2785 = vpop.permute.xlu0 %2784
        %2786 = vrot.lane.b32.xlu0 %v2231, 96
        %v2787 = vpop.permute.xlu0 %2786
        %2788 = vrot.lane.b32.xlu0 %v2232, 96
        %v2789 = vpop.permute.xlu0 %2788
        %2790 = vrot.lane.b32.xlu0 %v2233, 96
        %v2791 = vpop.permute.xlu0 %2790
        %2792 = vrot.lane.b32.xlu0 %v2234, 96
        %v2793 = vpop.permute.xlu0 %2792
        %2794 = vrot.lane.b32.xlu0 %v2235, 96
        %v2795 = vpop.permute.xlu0 %2794
        %2796 = vrot.lane.b32.xlu0 %v2236, 96
        %v2797 = vpop.permute.xlu0 %2796
        %2814 = vmatprep.subr.bf16.mxu0 0
        %2815 = vmatpush1.bf16.msra.mxu0 %v2767
        %2816 = vmatprep.subr.bf16.mxu0 0
        %2817 = vmatpush1.bf16.msra.mxu0 %v2769
        %2818 = vmatprep.subr.bf16.mxu0 0
        %2819 = vmatpush1.bf16.msra.mxu0 %v2771
        %2820 = vmatprep.subr.bf16.mxu0 0
        %2821 = vmatpush1.bf16.msra.mxu0 %v2773
        %2822 = vmatprep.subr.bf16.mxu0 0
        %2823 = vmatpush1.bf16.msra.mxu0 %v2775
        %2824 = vmatprep.subr.bf16.mxu0 0
        %2825 = vmatpush1.bf16.msra.mxu0 %v2777
        %2826 = vmatprep.subr.bf16.mxu0 0
        %2827 = vmatpush1.bf16.msra.mxu0 %v2779
        %2828 = vmatprep.subr.bf16.mxu0 0
        %2829 = vmatpush1.bf16.msra.mxu0 %v2781
        %2830 = vmatprep.subr.bf16.mxu0 0
        %2831 = vmatpush1.bf16.msra.mxu0 %v2783
        %2832 = vmatprep.subr.bf16.mxu0 0
        %2833 = vmatpush1.bf16.msra.mxu0 %v2785
        %2834 = vmatprep.subr.bf16.mxu0 0
        %2835 = vmatpush1.bf16.msra.mxu0 %v2787
        %2836 = vmatprep.subr.bf16.mxu0 0
        %2837 = vmatpush1.bf16.msra.mxu0 %v2789
        %2838 = vmatprep.subr.bf16.mxu0 0
        %2839 = vmatpush1.bf16.msra.mxu0 %v2791
        %2840 = vmatprep.subr.bf16.mxu0 0
        %2841 = vmatpush1.bf16.msra.mxu0 %v2793
        %2842 = vmatprep.subr.bf16.mxu0 0
        %2843 = vmatpush1.bf16.msra.mxu0 %v2795
        %2844 = vmatprep.subr.bf16.mxu0 0
        %2845 = vmatpush1.bf16.msra.mxu0 %v2797
        %2846 = vmatprep.mubr.bf16.mxu0 %v2735
        %2847 = vmatmul.mubr.bf16.gmra.mrb[0].mxu0 %v2734
        %v2848 = vpop.f32.mrb[0].mxu0
        %v2849 = vadd.f32 0.0, %v2848
        %v2850 = vpop.f32.mrb[0].mxu0
        %v2851 = vpop.f32.mrb[0].mxu0
        %v2852 = vadd.f32 0.0, %v2851
        %v2853 = vpop.f32.mrb[0].mxu0
        %2854 = vmatprep.mubr.bf16.mxu0 %v2737
        %2855 = vmatmul.mubr.bf16.gmra.mrb[0].mxu0 %v2736
        %v2856 = vpop.f32.mrb[0].mxu0
        %v2857 = vadd.f32 0.0, %v2856
        %v2858 = vpop.f32.mrb[0].mxu0
        %v2859 = vpop.f32.mrb[0].mxu0
        %v2860 = vadd.f32 0.0, %v2859
        %v2861 = vpop.f32.mrb[0].mxu0
        %2862 = vmatprep.mubr.bf16.mxu0 %v2739
        %2863 = vmatmul.mubr.bf16.gmra.mrb[0].mxu0 %v2738
        %v2864 = vpop.f32.mrb[0].mxu0
        %v2865 = vadd.f32 0.0, %v2864
        %v2866 = vpop.f32.mrb[0].mxu0
        %v2867 = vpop.f32.mrb[0].mxu0
        %v2868 = vadd.f32 0.0, %v2867
        %v2869 = vpop.f32.mrb[0].mxu0
        %2870 = vmatprep.mubr.bf16.mxu0 %v2741
        %2871 = vmatmul.mubr.bf16.gmra.mrb[0].mxu0 %v2740
        %v2872 = vpop.f32.mrb[0].mxu0
        %v2873 = vadd.f32 0.0, %v2872
        %v2874 = vpop.f32.mrb[0].mxu0
        %v2875 = vpop.f32.mrb[0].mxu0
        %v2876 = vadd.f32 0.0, %v2875
        %v2877 = vpop.f32.mrb[0].mxu0
        %2878 = vmatprep.mubr.bf16.mxu0 %v2743
        %2879 = vmatmul.mubr.bf16.gmra.mrb[0].mxu0 %v2742
        %v2880 = vpop.f32.mrb[0].mxu0
        %v2881 = vadd.f32 0.0, %v2880
        %v2882 = vpop.f32.mrb[0].mxu0
        %v2883 = vpop.f32.mrb[0].mxu0
        %v2884 = vadd.f32 0.0, %v2883
        %v2885 = vpop.f32.mrb[0].mxu0
        %2886 = vmatprep.mubr.bf16.mxu0 %v2745
        %2887 = vmatmul.mubr.bf16.gmra.mrb[0].mxu0 %v2744
        %v2888 = vpop.f32.mrb[0].mxu0
        %v2889 = vadd.f32 0.0, %v2888
        %v2890 = vpop.f32.mrb[0].mxu0
        %v2891 = vpop.f32.mrb[0].mxu0
        %v2892 = vadd.f32 0.0, %v2891
        %v2893 = vpop.f32.mrb[0].mxu0
        %2894 = vmatprep.mubr.bf16.mxu0 %v2747
        %2895 = vmatmul.mubr.bf16.gmra.mrb[0].mxu0 %v2746
        %v2896 = vpop.f32.mrb[0].mxu0
        %v2897 = vadd.f32 0.0, %v2896
        %v2898 = vpop.f32.mrb[0].mxu0
        %v2899 = vpop.f32.mrb[0].mxu0
        %v2900 = vadd.f32 0.0, %v2899
        %v2901 = vpop.f32.mrb[0].mxu0
        %2902 = vmatprep.mubr.bf16.mxu0 %v2749
        %2903 = vmatmul.mubr.bf16.gmra.mrb[0].mxu0 %v2748
        %v2904 = vpop.f32.mrb[0].mxu0
        %v2905 = vadd.f32 0.0, %v2904
        %v2906 = vpop.f32.mrb[0].mxu0
        %v2907 = vpop.f32.mrb[0].mxu0
        %v2908 = vadd.f32 0.0, %v2907
        %v2909 = vpop.f32.mrb[0].mxu0
        %2910 = vdwg.mxu0
        %v2911 = vpack.c.bf16 %v2852, %v2849
        %v2912 = vpack.c.bf16 %v2860, %v2857
        %v2913 = vpack.c.bf16 %v2868, %v2865
        %v2914 = vpack.c.bf16 %v2876, %v2873
        %v2915 = vpack.c.bf16 %v2884, %v2881
        %v2916 = vpack.c.bf16 %v2892, %v2889
        %v2917 = vpack.c.bf16 %v2900, %v2897
        %v2918 = vpack.c.bf16 %v2908, %v2905
        %2927 = vrot.lane.b32.xlu0 %v2911, 32
        %v2928 = vpop.permute.xlu0 %2927
        %2929 = vrot.lane.b32.xlu0 %v2912, 32
        %v2930 = vpop.permute.xlu0 %2929
        %2931 = vrot.lane.b32.xlu0 %v2913, 32
        %v2932 = vpop.permute.xlu0 %2931
        %2933 = vrot.lane.b32.xlu0 %v2914, 32
        %v2934 = vpop.permute.xlu0 %2933
        %2935 = vrot.lane.b32.xlu0 %v2915, 32
        %v2936 = vpop.permute.xlu0 %2935
        %2937 = vrot.lane.b32.xlu0 %v2916, 32
        %v2938 = vpop.permute.xlu0 %2937
        %2939 = vrot.lane.b32.xlu0 %v2917, 32
        %v2940 = vpop.permute.xlu0 %2939
        %2941 = vrot.lane.b32.xlu0 %v2918, 32
        %v2942 = vpop.permute.xlu0 %2941
        %vm2951 = vcmask 523520
        %2952 = vst.msk [vmem:[#allocation4] sm:$0xff] %vm2951, %v2928
        %2953 = vst.msk [vmem:[#allocation4 + $0x8] sm:$0xff] %vm2951, %v2930
        %2954 = vst.msk [vmem:[#allocation4 + $0x10] sm:$0xff] %vm2951, %v2932
        %2955 = vst.msk [vmem:[#allocation4 + $0x18] sm:$0xff] %vm2951, %v2934
        %2956 = vst.msk [vmem:[#allocation4 + $0x20] sm:$0xff] %vm2951, %v2936
        %2957 = vst.msk [vmem:[#allocation4 + $0x28] sm:$0xff] %vm2951, %v2938
        %2958 = vst.msk [vmem:[#allocation4 + $0x30] sm:$0xff] %vm2951, %v2940
        %2959 = vst.msk [vmem:[#allocation4 + $0x38] sm:$0xff] %vm2951, %v2942
        %v2960 = vld [vmem:[#allocation2] sm:$0xff]
        %v2961 = vld [vmem:[#allocation2 + $0x8] sm:$0xff]
        %v2962 = vld [vmem:[#allocation2 + $0x10] sm:$0xff]
        %v2963 = vld [vmem:[#allocation2 + $0x18] sm:$0xff]
        %v2964 = vld [vmem:[#allocation2 + $0x20] sm:$0xff]
        %v2965 = vld [vmem:[#allocation2 + $0x28] sm:$0xff]
        %v2966 = vld [vmem:[#allocation2 + $0x30] sm:$0xff]
        %v2967 = vld [vmem:[#allocation2 + $0x38] sm:$0xff]
        %v2968 = vld [vmem:[#allocation2 + $0x40] sm:$0xff]
        %v2969 = vld [vmem:[#allocation2 + $0x48] sm:$0xff]
        %v2970 = vld [vmem:[#allocation2 + $0x50] sm:$0xff]
        %v2971 = vld [vmem:[#allocation2 + $0x58] sm:$0xff]
        %v2972 = vld [vmem:[#allocation2 + $0x60] sm:$0xff]
        %v2973 = vld [vmem:[#allocation2 + $0x68] sm:$0xff]
        %v2974 = vld [vmem:[#allocation2 + $0x70] sm:$0xff]
        %v2975 = vld [vmem:[#allocation2 + $0x78] sm:$0xff]
        %v2976 = vld [vmem:[#allocation3] sm:$0xff]
        %v2977 = vld [vmem:[#allocation3 + $0x8] sm:$0xff]
        %v2978 = vld [vmem:[#allocation3 + $0x10] sm:$0xff]
        %v2979 = vld [vmem:[#allocation3 + $0x18] sm:$0xff]
        %v2980 = vld [vmem:[#allocation3 + $0x20] sm:$0xff]
        %v2981 = vld [vmem:[#allocation3 + $0x28] sm:$0xff]
        %v2982 = vld [vmem:[#allocation3 + $0x30] sm:$0xff]
        %v2983 = vld [vmem:[#allocation3 + $0x38] sm:$0xff]
        %v2984 = vld [vmem:[#allocation3 + $0x40] sm:$0xff]
        %v2985 = vld [vmem:[#allocation3 + $0x48] sm:$0xff]
        %v2986 = vld [vmem:[#allocation3 + $0x50] sm:$0xff]
        %v2987 = vld [vmem:[#allocation3 + $0x58] sm:$0xff]
        %v2988 = vld [vmem:[#allocation3 + $0x60] sm:$0xff]
        %v2989 = vld [vmem:[#allocation3 + $0x68] sm:$0xff]
        %v2990 = vld [vmem:[#allocation3 + $0x70] sm:$0xff]
        %v2991 = vld [vmem:[#allocation3 + $0x78] sm:$0xff]
        %2992 = vrot.lane.b32.xlu0 %v1610, 64
        %v2993 = vpop.permute.xlu0 %2992
        %2994 = vrot.lane.b32.xlu0 %v1611, 64
        %v2995 = vpop.permute.xlu0 %2994
        %2996 = vrot.lane.b32.xlu0 %v1612, 64
        %v2997 = vpop.permute.xlu0 %2996
        %2998 = vrot.lane.b32.xlu0 %v1613, 64
        %v2999 = vpop.permute.xlu0 %2998
        %3000 = vrot.lane.b32.xlu0 %v1614, 64
        %v3001 = vpop.permute.xlu0 %3000
        %3002 = vrot.lane.b32.xlu0 %v1615, 64
        %v3003 = vpop.permute.xlu0 %3002
        %3004 = vrot.lane.b32.xlu0 %v1616, 64
        %v3005 = vpop.permute.xlu0 %3004
        %3006 = vrot.lane.b32.xlu0 %v1617, 64
        %v3007 = vpop.permute.xlu0 %3006
        %3024 = vrot.lane.b32.xlu0 %v2960, 64
        %v3025 = vpop.permute.xlu0 %3024
        %3026 = vrot.lane.b32.xlu0 %v2961, 64
        %v3027 = vpop.permute.xlu0 %3026
        %3028 = vrot.lane.b32.xlu0 %v2962, 64
        %v3029 = vpop.permute.xlu0 %3028
        %3030 = vrot.lane.b32.xlu0 %v2963, 64
        %v3031 = vpop.permute.xlu0 %3030
        %3032 = vrot.lane.b32.xlu0 %v2964, 64
        %v3033 = vpop.permute.xlu0 %3032
        %3034 = vrot.lane.b32.xlu0 %v2965, 64
        %v3035 = vpop.permute.xlu0 %3034
        %3036 = vrot.lane.b32.xlu0 %v2966, 64
        %v3037 = vpop.permute.xlu0 %3036
        %3038 = vrot.lane.b32.xlu0 %v2967, 64
        %v3039 = vpop.permute.xlu0 %3038
        %3040 = vrot.lane.b32.xlu0 %v2968, 64
        %v3041 = vpop.permute.xlu0 %3040
        %3042 = vrot.lane.b32.xlu0 %v2969, 64
        %v3043 = vpop.permute.xlu0 %3042
        %3044 = vrot.lane.b32.xlu0 %v2970, 64
        %v3045 = vpop.permute.xlu0 %3044
        %3046 = vrot.lane.b32.xlu0 %v2971, 64
        %v3047 = vpop.permute.xlu0 %3046
        %3048 = vrot.lane.b32.xlu0 %v2972, 64
        %v3049 = vpop.permute.xlu0 %3048
        %3050 = vrot.lane.b32.xlu0 %v2973, 64
        %v3051 = vpop.permute.xlu0 %3050
        %3052 = vrot.lane.b32.xlu0 %v2974, 64
        %v3053 = vpop.permute.xlu0 %3052
        %3054 = vrot.lane.b32.xlu0 %v2975, 64
        %v3055 = vpop.permute.xlu0 %3054
        %v3057 = vsel %vm1650, %v2993, 0
        %v3060 = vsel %vm1650, %v2995, 0
        %v3063 = vsel %vm1650, %v2997, 0
        %v3066 = vsel %vm1650, %v2999, 0
        %v3069 = vsel %vm1650, %v3001, 0
        %v3072 = vsel %vm1650, %v3003, 0
        %v3075 = vsel %vm1650, %v3005, 0
        %v3078 = vsel %vm1650, %v3007, 0
        %v3081 = vsel %vm1650, %v3025, 0
        %v3084 = vsel %vm1650, %v3027, 0
        %v3087 = vsel %vm1650, %v3029, 0
        %v3090 = vsel %vm1650, %v3031, 0
        %v3093 = vsel %vm1650, %v3033, 0
        %v3096 = vsel %vm1650, %v3035, 0
        %v3099 = vsel %vm1650, %v3037, 0
        %v3102 = vsel %vm1650, %v3039, 0
        %v3105 = vsel %vm1650, %v3041, 0
        %v3108 = vsel %vm1650, %v3043, 0
        %v3111 = vsel %vm1650, %v3045, 0
        %v3114 = vsel %vm1650, %v3047, 0
        %v3117 = vsel %vm1650, %v3049, 0
        %v3120 = vsel %vm1650, %v3051, 0
        %v3123 = vsel %vm1650, %v3053, 0
        %v3126 = vsel %vm1650, %v3055, 0
        %3128 = vmatprep.subr.bf16.mxu0 0
        %3129 = vmatpush1.bf16.xpose.msra.mxu0 %v3081
        %3130 = vmatprep.subr.bf16.mxu0 0
        %3131 = vmatpush1.bf16.xpose.msra.mxu0 %v3084
        %3132 = vmatprep.subr.bf16.mxu0 0
        %3133 = vmatpush1.bf16.xpose.msra.mxu0 %v3087
        %3134 = vmatprep.subr.bf16.mxu0 0
        %3135 = vmatpush1.bf16.xpose.msra.mxu0 %v3090
        %3136 = vmatprep.subr.bf16.mxu0 0
        %3137 = vmatpush1.bf16.xpose.msra.mxu0 %v3093
        %3138 = vmatprep.subr.bf16.mxu0 0
        %3139 = vmatpush1.bf16.xpose.msra.mxu0 %v3096
        %3140 = vmatprep.subr.bf16.mxu0 0
        %3141 = vmatpush1.bf16.xpose.msra.mxu0 %v3099
        %3142 = vmatprep.subr.bf16.mxu0 0
        %3143 = vmatpush1.bf16.xpose.msra.mxu0 %v3102
        %3144 = vmatprep.subr.bf16.mxu0 0
        %3145 = vmatpush1.bf16.xpose.msra.mxu0 %v3105
        %3146 = vmatprep.subr.bf16.mxu0 0
        %3147 = vmatpush1.bf16.xpose.msra.mxu0 %v3108
        %3148 = vmatprep.subr.bf16.mxu0 0
        %3149 = vmatpush1.bf16.xpose.msra.mxu0 %v3111
        %3150 = vmatprep.subr.bf16.mxu0 0
        %3151 = vmatpush1.bf16.xpose.msra.mxu0 %v3114
        %3152 = vmatprep.subr.bf16.mxu0 0
        %3153 = vmatpush1.bf16.xpose.msra.mxu0 %v3117
        %3154 = vmatprep.subr.bf16.mxu0 0
        %3155 = vmatpush1.bf16.xpose.msra.mxu0 %v3120
        %3156 = vmatprep.subr.bf16.mxu0 0
        %3157 = vmatpush1.bf16.xpose.msra.mxu0 %v3123
        %3158 = vmatprep.subr.bf16.mxu0 0
        %3159 = vmatpush1.bf16.xpose.msra.mxu0 %v3126
        %3160 = vmatprep.mubr.bf16.mxu0 0
        %3161 = vmatmul.mubr.bf16.gmra.mrb[0].mxu0 %v3057
        %v3162 = vpop.f32.mrb[0].mxu0
        %v3163 = vadd.f32 0.0, %v3162
        %v3164 = vpop.f32.mrb[0].mxu0
        %v3165 = vadd.f32 0.0, %v3164
        %v3166 = vpop.f32.mrb[0].mxu0
        %v3167 = vadd.f32 0.0, %v3166
        %v3168 = vpop.f32.mrb[0].mxu0
        %v3169 = vadd.f32 0.0, %v3168
        %3170 = vmatprep.mubr.bf16.mxu0 0
        %3171 = vmatmul.mubr.bf16.gmra.mrb[0].mxu0 %v3060
        %v3172 = vpop.f32.mrb[0].mxu0
        %v3173 = vadd.f32 0.0, %v3172
        %v3174 = vpop.f32.mrb[0].mxu0
        %v3175 = vadd.f32 0.0, %v3174
        %v3176 = vpop.f32.mrb[0].mxu0
        %v3177 = vadd.f32 0.0, %v3176
        %v3178 = vpop.f32.mrb[0].mxu0
        %v3179 = vadd.f32 0.0, %v3178
        %3180 = vmatprep.mubr.bf16.mxu0 0
        %3181 = vmatmul.mubr.bf16.gmra.mrb[0].mxu0 %v3063
        %v3182 = vpop.f32.mrb[0].mxu0
        %v3183 = vadd.f32 0.0, %v3182
        %v3184 = vpop.f32.mrb[0].mxu0
        %v3185 = vadd.f32 0.0, %v3184
        %v3186 = vpop.f32.mrb[0].mxu0
        %v3187 = vadd.f32 0.0, %v3186
        %v3188 = vpop.f32.mrb[0].mxu0
        %v3189 = vadd.f32 0.0, %v3188
        %3190 = vmatprep.mubr.bf16.mxu0 0
        %3191 = vmatmul.mubr.bf16.gmra.mrb[0].mxu0 %v3066
        %v3192 = vpop.f32.mrb[0].mxu0
        %v3193 = vadd.f32 0.0, %v3192
        %v3194 = vpop.f32.mrb[0].mxu0
        %v3195 = vadd.f32 0.0, %v3194
        %v3196 = vpop.f32.mrb[0].mxu0
        %v3197 = vadd.f32 0.0, %v3196
        %v3198 = vpop.f32.mrb[0].mxu0
        %v3199 = vadd.f32 0.0, %v3198
        %3200 = vmatprep.mubr.bf16.mxu0 0
        %3201 = vmatmul.mubr.bf16.gmra.mrb[0].mxu0 %v3069
        %v3202 = vpop.f32.mrb[0].mxu0
        %v3203 = vadd.f32 0.0, %v3202
        %v3204 = vpop.f32.mrb[0].mxu0
        %v3205 = vadd.f32 0.0, %v3204
        %v3206 = vpop.f32.mrb[0].mxu0
        %v3207 = vadd.f32 0.0, %v3206
        %v3208 = vpop.f32.mrb[0].mxu0
        %v3209 = vadd.f32 0.0, %v3208
        %3210 = vmatprep.mubr.bf16.mxu0 0
        %3211 = vmatmul.mubr.bf16.gmra.mrb[0].mxu0 %v3072
        %v3212 = vpop.f32.mrb[0].mxu0
        %v3213 = vadd.f32 0.0, %v3212
        %v3214 = vpop.f32.mrb[0].mxu0
        %v3215 = vadd.f32 0.0, %v3214
        %v3216 = vpop.f32.mrb[0].mxu0
        %v3217 = vadd.f32 0.0, %v3216
        %v3218 = vpop.f32.mrb[0].mxu0
        %v3219 = vadd.f32 0.0, %v3218
        %3220 = vmatprep.mubr.bf16.mxu0 0
        %3221 = vmatmul.mubr.bf16.gmra.mrb[0].mxu0 %v3075
        %v3222 = vpop.f32.mrb[0].mxu0
        %v3223 = vadd.f32 0.0, %v3222
        %v3224 = vpop.f32.mrb[0].mxu0
        %v3225 = vadd.f32 0.0, %v3224
        %v3226 = vpop.f32.mrb[0].mxu0
        %v3227 = vadd.f32 0.0, %v3226
        %v3228 = vpop.f32.mrb[0].mxu0
        %v3229 = vadd.f32 0.0, %v3228
        %3230 = vmatprep.mubr.bf16.mxu0 0
        %3231 = vmatmul.mubr.bf16.gmra.mrb[0].mxu0 %v3078
        %v3232 = vpop.f32.mrb[0].mxu0
        %v3233 = vadd.f32 0.0, %v3232
        %v3234 = vpop.f32.mrb[0].mxu0
        %v3235 = vadd.f32 0.0, %v3234
        %v3236 = vpop.f32.mrb[0].mxu0
        %v3237 = vadd.f32 0.0, %v3236
        %v3238 = vpop.f32.mrb[0].mxu0
        %v3239 = vadd.f32 0.0, %v3238
        %3240 = vdwg.mxu0
        %v3241 = vmax.f32 %v3163, %v3165
        %3242 = vmax.xlane.f32.xlu0 %v3241
        %v3243 = vpop.xlane.xlu0 %3242
        %v3244 = vmax.f32 %v3167, %v3169
        %3245 = vmax.xlane.f32.xlu0 %v3244
        %v3246 = vpop.xlane.xlu0 %3245
        %v3247 = vmax.f32 %v3173, %v3175
        %3248 = vmax.xlane.f32.xlu0 %v3247
        %v3249 = vpop.xlane.xlu0 %3248
        %v3250 = vmax.f32 %v3177, %v3179
        %3251 = vmax.xlane.f32.xlu0 %v3250
        %v3252 = vpop.xlane.xlu0 %3251
        %v3253 = vmax.f32 %v3183, %v3185
        %3254 = vmax.xlane.f32.xlu0 %v3253
        %v3255 = vpop.xlane.xlu0 %3254
        %v3256 = vmax.f32 %v3187, %v3189
        %3257 = vmax.xlane.f32.xlu0 %v3256
        %v3258 = vpop.xlane.xlu0 %3257
        %v3259 = vmax.f32 %v3193, %v3195
        %3260 = vmax.xlane.f32.xlu0 %v3259
        %v3261 = vpop.xlane.xlu0 %3260
        %v3262 = vmax.f32 %v3197, %v3199
        %3263 = vmax.xlane.f32.xlu0 %v3262
        %v3264 = vpop.xlane.xlu0 %3263
        %v3265 = vmax.f32 %v3203, %v3205
        %3266 = vmax.xlane.f32.xlu0 %v3265
        %v3267 = vpop.xlane.xlu0 %3266
        %v3268 = vmax.f32 %v3207, %v3209
        %3269 = vmax.xlane.f32.xlu0 %v3268
        %v3270 = vpop.xlane.xlu0 %3269
        %v3271 = vmax.f32 %v3213, %v3215
        %3272 = vmax.xlane.f32.xlu0 %v3271
        %v3273 = vpop.xlane.xlu0 %3272
        %v3274 = vmax.f32 %v3217, %v3219
        %3275 = vmax.xlane.f32.xlu0 %v3274
        %v3276 = vpop.xlane.xlu0 %3275
        %v3277 = vmax.f32 %v3223, %v3225
        %3278 = vmax.xlane.f32.xlu0 %v3277
        %v3279 = vpop.xlane.xlu0 %3278
        %v3280 = vmax.f32 %v3227, %v3229
        %3281 = vmax.xlane.f32.xlu0 %v3280
        %v3282 = vpop.xlane.xlu0 %3281
        %v3283 = vmax.f32 %v3233, %v3235
        %3284 = vmax.xlane.f32.xlu0 %v3283
        %v3285 = vpop.xlane.xlu0 %3284
        %v3286 = vmax.f32 %v3237, %v3239
        %3287 = vmax.xlane.f32.xlu0 %v3286
        %v3288 = vpop.xlane.xlu0 %3287
        %v3289 = vsub.f32 %v3163, %v3243
        %v3290 = vsub.f32 %v3165, %v3243
        %v3291 = vsub.f32 %v3167, %v3246
        %v3292 = vsub.f32 %v3169, %v3246
        %v3293 = vsub.f32 %v3173, %v3249
        %v3294 = vsub.f32 %v3175, %v3249
        %v3295 = vsub.f32 %v3177, %v3252
        %v3296 = vsub.f32 %v3179, %v3252
        %v3297 = vsub.f32 %v3183, %v3255
        %v3298 = vsub.f32 %v3185, %v3255
        %v3299 = vsub.f32 %v3187, %v3258
        %v3300 = vsub.f32 %v3189, %v3258
        %v3301 = vsub.f32 %v3193, %v3261
        %v3302 = vsub.f32 %v3195, %v3261
        %v3303 = vsub.f32 %v3197, %v3264
        %v3304 = vsub.f32 %v3199, %v3264
        %v3305 = vsub.f32 %v3203, %v3267
        %v3306 = vsub.f32 %v3205, %v3267
        %v3307 = vsub.f32 %v3207, %v3270
        %v3308 = vsub.f32 %v3209, %v3270
        %v3309 = vsub.f32 %v3213, %v3273
        %v3310 = vsub.f32 %v3215, %v3273
        %v3311 = vsub.f32 %v3217, %v3276
        %v3312 = vsub.f32 %v3219, %v3276
        %v3313 = vsub.f32 %v3223, %v3279
        %v3314 = vsub.f32 %v3225, %v3279
        %v3315 = vsub.f32 %v3227, %v3282
        %v3316 = vsub.f32 %v3229, %v3282
        %v3317 = vsub.f32 %v3233, %v3285
        %v3318 = vsub.f32 %v3235, %v3285
        %v3319 = vsub.f32 %v3237, %v3288
        %v3320 = vsub.f32 %v3239, %v3288
        %v3321 = vmul.f32 %v3289, 1.442695
        %v3322 = vpow.pop %v3321
        %v3323 = vmul.f32 %v3290, 1.442695
        %v3324 = vpow.pop %v3323
        %v3325 = vmul.f32 %v3291, 1.442695
        %v3326 = vpow.pop %v3325
        %v3327 = vmul.f32 %v3292, 1.442695
        %v3328 = vpow.pop %v3327
        %v3329 = vmul.f32 %v3293, 1.442695
        %v3330 = vpow.pop %v3329
        %v3331 = vmul.f32 %v3294, 1.442695
        %v3332 = vpow.pop %v3331
        %v3333 = vmul.f32 %v3295, 1.442695
        %v3334 = vpow.pop %v3333
        %v3335 = vmul.f32 %v3296, 1.442695
        %v3336 = vpow.pop %v3335
        %v3337 = vmul.f32 %v3297, 1.442695
        %v3338 = vpow.pop %v3337
        %v3339 = vmul.f32 %v3298, 1.442695
        %v3340 = vpow.pop %v3339
        %v3341 = vmul.f32 %v3299, 1.442695
        %v3342 = vpow.pop %v3341
        %v3343 = vmul.f32 %v3300, 1.442695
        %v3344 = vpow.pop %v3343
        %v3345 = vmul.f32 %v3301, 1.442695
        %v3346 = vpow.pop %v3345
        %v3347 = vmul.f32 %v3302, 1.442695
        %v3348 = vpow.pop %v3347
        %v3349 = vmul.f32 %v3303, 1.442695
        %v3350 = vpow.pop %v3349
        %v3351 = vmul.f32 %v3304, 1.442695
        %v3352 = vpow.pop %v3351
        %v3353 = vmul.f32 %v3305, 1.442695
        %v3354 = vpow.pop %v3353
        %v3355 = vmul.f32 %v3306, 1.442695
        %v3356 = vpow.pop %v3355
        %v3357 = vmul.f32 %v3307, 1.442695
        %v3358 = vpow.pop %v3357
        %v3359 = vmul.f32 %v3308, 1.442695
        %v3360 = vpow.pop %v3359
        %v3361 = vmul.f32 %v3309, 1.442695
        %v3362 = vpow.pop %v3361
        %v3363 = vmul.f32 %v3310, 1.442695
        %v3364 = vpow.pop %v3363
        %v3365 = vmul.f32 %v3311, 1.442695
        %v3366 = vpow.pop %v3365
        %v3367 = vmul.f32 %v3312, 1.442695
        %v3368 = vpow.pop %v3367
        %v3369 = vmul.f32 %v3313, 1.442695
        %v3370 = vpow.pop %v3369
        %v3371 = vmul.f32 %v3314, 1.442695
        %v3372 = vpow.pop %v3371
        %v3373 = vmul.f32 %v3315, 1.442695
        %v3374 = vpow.pop %v3373
        %v3375 = vmul.f32 %v3316, 1.442695
        %v3376 = vpow.pop %v3375
        %v3377 = vmul.f32 %v3317, 1.442695
        %v3378 = vpow.pop %v3377
        %v3379 = vmul.f32 %v3318, 1.442695
        %v3380 = vpow.pop %v3379
        %v3381 = vmul.f32 %v3319, 1.442695
        %v3382 = vpow.pop %v3381
        %v3383 = vmul.f32 %v3320, 1.442695
        %v3384 = vpow.pop %v3383
        %v3385 = vadd.f32 %v3322, %v3324
        %3386 = vadd.xlane.f32.xlu0 %v3385
        %v3387 = vpop.xlane.xlu0 %3386
        %v3388 = vadd.f32 %v3326, %v3328
        %3389 = vadd.xlane.f32.xlu0 %v3388
        %v3390 = vpop.xlane.xlu0 %3389
        %v3391 = vadd.f32 %v3330, %v3332
        %3392 = vadd.xlane.f32.xlu0 %v3391
        %v3393 = vpop.xlane.xlu0 %3392
        %v3394 = vadd.f32 %v3334, %v3336
        %3395 = vadd.xlane.f32.xlu0 %v3394
        %v3396 = vpop.xlane.xlu0 %3395
        %v3397 = vadd.f32 %v3338, %v3340
        %3398 = vadd.xlane.f32.xlu0 %v3397
        %v3399 = vpop.xlane.xlu0 %3398
        %v3400 = vadd.f32 %v3342, %v3344
        %3401 = vadd.xlane.f32.xlu0 %v3400
        %v3402 = vpop.xlane.xlu0 %3401
        %v3403 = vadd.f32 %v3346, %v3348
        %3404 = vadd.xlane.f32.xlu0 %v3403
        %v3405 = vpop.xlane.xlu0 %3404
        %v3406 = vadd.f32 %v3350, %v3352
        %3407 = vadd.xlane.f32.xlu0 %v3406
        %v3408 = vpop.xlane.xlu0 %3407
        %v3409 = vadd.f32 %v3354, %v3356
        %3410 = vadd.xlane.f32.xlu0 %v3409
        %v3411 = vpop.xlane.xlu0 %3410
        %v3412 = vadd.f32 %v3358, %v3360
        %3413 = vadd.xlane.f32.xlu0 %v3412
        %v3414 = vpop.xlane.xlu0 %3413
        %v3415 = vadd.f32 %v3362, %v3364
        %3416 = vadd.xlane.f32.xlu0 %v3415
        %v3417 = vpop.xlane.xlu0 %3416
        %v3418 = vadd.f32 %v3366, %v3368
        %3419 = vadd.xlane.f32.xlu0 %v3418
        %v3420 = vpop.xlane.xlu0 %3419
        %v3421 = vadd.f32 %v3370, %v3372
        %3422 = vadd.xlane.f32.xlu0 %v3421
        %v3423 = vpop.xlane.xlu0 %3422
        %v3424 = vadd.f32 %v3374, %v3376
        %3425 = vadd.xlane.f32.xlu0 %v3424
        %v3426 = vpop.xlane.xlu0 %3425
        %v3427 = vadd.f32 %v3378, %v3380
        %3428 = vadd.xlane.f32.xlu0 %v3427
        %v3429 = vpop.xlane.xlu0 %3428
        %v3430 = vadd.f32 %v3382, %v3384
        %3431 = vadd.xlane.f32.xlu0 %v3430
        %v3432 = vpop.xlane.xlu0 %3431
        %v3433 = vrcp.pop %v3387
        %v3434 = vmul.f32 %v3322, %v3433
        %v3435 = vmul.f32 %v3324, %v3433
        %v3436 = vrcp.pop %v3390
        %v3437 = vmul.f32 %v3326, %v3436
        %v3438 = vmul.f32 %v3328, %v3436
        %v3439 = vrcp.pop %v3393
        %v3440 = vmul.f32 %v3330, %v3439
        %v3441 = vmul.f32 %v3332, %v3439
        %v3442 = vrcp.pop %v3396
        %v3443 = vmul.f32 %v3334, %v3442
        %v3444 = vmul.f32 %v3336, %v3442
        %v3445 = vrcp.pop %v3399
        %v3446 = vmul.f32 %v3338, %v3445
        %v3447 = vmul.f32 %v3340, %v3445
        %v3448 = vrcp.pop %v3402
        %v3449 = vmul.f32 %v3342, %v3448
        %v3450 = vmul.f32 %v3344, %v3448
        %v3451 = vrcp.pop %v3405
        %v3452 = vmul.f32 %v3346, %v3451
        %v3453 = vmul.f32 %v3348, %v3451
        %v3454 = vrcp.pop %v3408
        %v3455 = vmul.f32 %v3350, %v3454
        %v3456 = vmul.f32 %v3352, %v3454
        %v3457 = vrcp.pop %v3411
        %v3458 = vmul.f32 %v3354, %v3457
        %v3459 = vmul.f32 %v3356, %v3457
        %v3460 = vrcp.pop %v3414
        %v3461 = vmul.f32 %v3358, %v3460
        %v3462 = vmul.f32 %v3360, %v3460
        %v3463 = vrcp.pop %v3417
        %v3464 = vmul.f32 %v3362, %v3463
        %v3465 = vmul.f32 %v3364, %v3463
        %v3466 = vrcp.pop %v3420
        %v3467 = vmul.f32 %v3366, %v3466
        %v3468 = vmul.f32 %v3368, %v3466
        %v3469 = vrcp.pop %v3423
        %v3470 = vmul.f32 %v3370, %v3469
        %v3471 = vmul.f32 %v3372, %v3469
        %v3472 = vrcp.pop %v3426
        %v3473 = vmul.f32 %v3374, %v3472
        %v3474 = vmul.f32 %v3376, %v3472
        %v3475 = vrcp.pop %v3429
        %v3476 = vmul.f32 %v3378, %v3475
        %v3477 = vmul.f32 %v3380, %v3475
        %v3478 = vrcp.pop %v3432
        %v3479 = vmul.f32 %v3382, %v3478
        %v3480 = vmul.f32 %v3384, %v3478
        %v3481 = vpack.c.bf16 %v3437, %v3434
        %v3482 = vpack.c.bf16 %v3438, %v3435
        %v3483 = vpack.c.bf16 %v3443, %v3440
        %v3484 = vpack.c.bf16 %v3444, %v3441
        %v3485 = vpack.c.bf16 %v3449, %v3446
        %v3486 = vpack.c.bf16 %v3450, %v3447
        %v3487 = vpack.c.bf16 %v3455, %v3452
        %v3488 = vpack.c.bf16 %v3456, %v3453
        %v3489 = vpack.c.bf16 %v3461, %v3458
        %v3490 = vpack.c.bf16 %v3462, %v3459
        %v3491 = vpack.c.bf16 %v3467, %v3464
        %v3492 = vpack.c.bf16 %v3468, %v3465
        %v3493 = vpack.c.bf16 %v3473, %v3470
        %v3494 = vpack.c.bf16 %v3474, %v3471
        %v3495 = vpack.c.bf16 %v3479, %v3476
        %v3496 = vpack.c.bf16 %v3480, %v3477
        %3513 = vrot.lane.b32.xlu0 %v2976, 64
        %v3514 = vpop.permute.xlu0 %3513
        %3515 = vrot.lane.b32.xlu0 %v2977, 64
        %v3516 = vpop.permute.xlu0 %3515
        %3517 = vrot.lane.b32.xlu0 %v2978, 64
        %v3518 = vpop.permute.xlu0 %3517
        %3519 = vrot.lane.b32.xlu0 %v2979, 64
        %v3520 = vpop.permute.xlu0 %3519
        %3521 = vrot.lane.b32.xlu0 %v2980, 64
        %v3522 = vpop.permute.xlu0 %3521
        %3523 = vrot.lane.b32.xlu0 %v2981, 64
        %v3524 = vpop.permute.xlu0 %3523
        %3525 = vrot.lane.b32.xlu0 %v2982, 64
        %v3526 = vpop.permute.xlu0 %3525
        %3527 = vrot.lane.b32.xlu0 %v2983, 64
        %v3528 = vpop.permute.xlu0 %3527
        %3529 = vrot.lane.b32.xlu0 %v2984, 64
        %v3530 = vpop.permute.xlu0 %3529
        %3531 = vrot.lane.b32.xlu0 %v2985, 64
        %v3532 = vpop.permute.xlu0 %3531
        %3533 = vrot.lane.b32.xlu0 %v2986, 64
        %v3534 = vpop.permute.xlu0 %3533
        %3535 = vrot.lane.b32.xlu0 %v2987, 64
        %v3536 = vpop.permute.xlu0 %3535
        %3537 = vrot.lane.b32.xlu0 %v2988, 64
        %v3538 = vpop.permute.xlu0 %3537
        %3539 = vrot.lane.b32.xlu0 %v2989, 64
        %v3540 = vpop.permute.xlu0 %3539
        %3541 = vrot.lane.b32.xlu0 %v2990, 64
        %v3542 = vpop.permute.xlu0 %3541
        %3543 = vrot.lane.b32.xlu0 %v2991, 64
        %v3544 = vpop.permute.xlu0 %3543
        %3561 = vmatprep.subr.bf16.mxu0 0
        %3562 = vmatpush1.bf16.msra.mxu0 %v3514
        %3563 = vmatprep.subr.bf16.mxu0 0
        %3564 = vmatpush1.bf16.msra.mxu0 %v3516
        %3565 = vmatprep.subr.bf16.mxu0 0
        %3566 = vmatpush1.bf16.msra.mxu0 %v3518
        %3567 = vmatprep.subr.bf16.mxu0 0
        %3568 = vmatpush1.bf16.msra.mxu0 %v3520
        %3569 = vmatprep.subr.bf16.mxu0 0
        %3570 = vmatpush1.bf16.msra.mxu0 %v3522
        %3571 = vmatprep.subr.bf16.mxu0 0
        %3572 = vmatpush1.bf16.msra.mxu0 %v3524
        %3573 = vmatprep.subr.bf16.mxu0 0
        %3574 = vmatpush1.bf16.msra.mxu0 %v3526
        %3575 = vmatprep.subr.bf16.mxu0 0
        %3576 = vmatpush1.bf16.msra.mxu0 %v3528
        %3577 = vmatprep.subr.bf16.mxu0 0
        %3578 = vmatpush1.bf16.msra.mxu0 %v3530
        %3579 = vmatprep.subr.bf16.mxu0 0
        %3580 = vmatpush1.bf16.msra.mxu0 %v3532
        %3581 = vmatprep.subr.bf16.mxu0 0
        %3582 = vmatpush1.bf16.msra.mxu0 %v3534
        %3583 = vmatprep.subr.bf16.mxu0 0
        %3584 = vmatpush1.bf16.msra.mxu0 %v3536
        %3585 = vmatprep.subr.bf16.mxu0 0
        %3586 = vmatpush1.bf16.msra.mxu0 %v3538
        %3587 = vmatprep.subr.bf16.mxu0 0
        %3588 = vmatpush1.bf16.msra.mxu0 %v3540
        %3589 = vmatprep.subr.bf16.mxu0 0
        %3590 = vmatpush1.bf16.msra.mxu0 %v3542
        %3591 = vmatprep.subr.bf16.mxu0 0
        %3592 = vmatpush1.bf16.msra.mxu0 %v3544
        %3593 = vmatprep.mubr.bf16.mxu0 %v3482
        %3594 = vmatmul.mubr.bf16.gmra.mrb[0].mxu0 %v3481
        %v3595 = vpop.f32.mrb[0].mxu0
        %v3596 = vadd.f32 0.0, %v3595
        %v3597 = vpop.f32.mrb[0].mxu0
        %v3598 = vpop.f32.mrb[0].mxu0
        %v3599 = vadd.f32 0.0, %v3598
        %v3600 = vpop.f32.mrb[0].mxu0
        %3601 = vmatprep.mubr.bf16.mxu0 %v3484
        %3602 = vmatmul.mubr.bf16.gmra.mrb[0].mxu0 %v3483
        %v3603 = vpop.f32.mrb[0].mxu0
        %v3604 = vadd.f32 0.0, %v3603
        %v3605 = vpop.f32.mrb[0].mxu0
        %v3606 = vpop.f32.mrb[0].mxu0
        %v3607 = vadd.f32 0.0, %v3606
        %v3608 = vpop.f32.mrb[0].mxu0
        %3609 = vmatprep.mubr.bf16.mxu0 %v3486
        %3610 = vmatmul.mubr.bf16.gmra.mrb[0].mxu0 %v3485
        %v3611 = vpop.f32.mrb[0].mxu0
        %v3612 = vadd.f32 0.0, %v3611
        %v3613 = vpop.f32.mrb[0].mxu0
        %v3614 = vpop.f32.mrb[0].mxu0
        %v3615 = vadd.f32 0.0, %v3614
        %v3616 = vpop.f32.mrb[0].mxu0
        %3617 = vmatprep.mubr.bf16.mxu0 %v3488
        %3618 = vmatmul.mubr.bf16.gmra.mrb[0].mxu0 %v3487
        %v3619 = vpop.f32.mrb[0].mxu0
        %v3620 = vadd.f32 0.0, %v3619
        %v3621 = vpop.f32.mrb[0].mxu0
        %v3622 = vpop.f32.mrb[0].mxu0
        %v3623 = vadd.f32 0.0, %v3622
        %v3624 = vpop.f32.mrb[0].mxu0
        %3625 = vmatprep.mubr.bf16.mxu0 %v3490
        %3626 = vmatmul.mubr.bf16.gmra.mrb[0].mxu0 %v3489
        %v3627 = vpop.f32.mrb[0].mxu0
        %v3628 = vadd.f32 0.0, %v3627
        %v3629 = vpop.f32.mrb[0].mxu0
        %v3630 = vpop.f32.mrb[0].mxu0
        %v3631 = vadd.f32 0.0, %v3630
        %v3632 = vpop.f32.mrb[0].mxu0
        %3633 = vmatprep.mubr.bf16.mxu0 %v3492
        %3634 = vmatmul.mubr.bf16.gmra.mrb[0].mxu0 %v3491
        %v3635 = vpop.f32.mrb[0].mxu0
        %v3636 = vadd.f32 0.0, %v3635
        %v3637 = vpop.f32.mrb[0].mxu0
        %v3638 = vpop.f32.mrb[0].mxu0
        %v3639 = vadd.f32 0.0, %v3638
        %v3640 = vpop.f32.mrb[0].mxu0
        %3641 = vmatprep.mubr.bf16.mxu0 %v3494
        %3642 = vmatmul.mubr.bf16.gmra.mrb[0].mxu0 %v3493
        %v3643 = vpop.f32.mrb[0].mxu0
        %v3644 = vadd.f32 0.0, %v3643
        %v3645 = vpop.f32.mrb[0].mxu0
        %v3646 = vpop.f32.mrb[0].mxu0
        %v3647 = vadd.f32 0.0, %v3646
        %v3648 = vpop.f32.mrb[0].mxu0
        %3649 = vmatprep.mubr.bf16.mxu0 %v3496
        %3650 = vmatmul.mubr.bf16.gmra.mrb[0].mxu0 %v3495
        %v3651 = vpop.f32.mrb[0].mxu0
        %v3652 = vadd.f32 0.0, %v3651
        %v3653 = vpop.f32.mrb[0].mxu0
        %v3654 = vpop.f32.mrb[0].mxu0
        %v3655 = vadd.f32 0.0, %v3654
        %v3656 = vpop.f32.mrb[0].mxu0
        %3657 = vdwg.mxu0
        %v3658 = vpack.c.bf16 %v3599, %v3596
        %v3659 = vpack.c.bf16 %v3607, %v3604
        %v3660 = vpack.c.bf16 %v3615, %v3612
        %v3661 = vpack.c.bf16 %v3623, %v3620
        %v3662 = vpack.c.bf16 %v3631, %v3628
        %v3663 = vpack.c.bf16 %v3639, %v3636
        %v3664 = vpack.c.bf16 %v3647, %v3644
        %v3665 = vpack.c.bf16 %v3655, %v3652
        %3674 = vrot.lane.b32.xlu0 %v3658, 64
        %v3675 = vpop.permute.xlu0 %3674
        %3676 = vrot.lane.b32.xlu0 %v3659, 64
        %v3677 = vpop.permute.xlu0 %3676
        %3678 = vrot.lane.b32.xlu0 %v3660, 64
        %v3679 = vpop.permute.xlu0 %3678
        %3680 = vrot.lane.b32.xlu0 %v3661, 64
        %v3681 = vpop.permute.xlu0 %3680
        %3682 = vrot.lane.b32.xlu0 %v3662, 64
        %v3683 = vpop.permute.xlu0 %3682
        %3684 = vrot.lane.b32.xlu0 %v3663, 64
        %v3685 = vpop.permute.xlu0 %3684
        %3686 = vrot.lane.b32.xlu0 %v3664, 64
        %v3687 = vpop.permute.xlu0 %3686
        %3688 = vrot.lane.b32.xlu0 %v3665, 64
        %v3689 = vpop.permute.xlu0 %3688
        %vm3698 = vcmask 785920
        %3699 = vst.msk [vmem:[#allocation4] sm:$0xff] %vm3698, %v3675
        %3700 = vst.msk [vmem:[#allocation4 + $0x8] sm:$0xff] %vm3698, %v3677
        %3701 = vst.msk [vmem:[#allocation4 + $0x10] sm:$0xff] %vm3698, %v3679
        %3702 = vst.msk [vmem:[#allocation4 + $0x18] sm:$0xff] %vm3698, %v3681
        %3703 = vst.msk [vmem:[#allocation4 + $0x20] sm:$0xff] %vm3698, %v3683
        %3704 = vst.msk [vmem:[#allocation4 + $0x28] sm:$0xff] %vm3698, %v3685
        %3705 = vst.msk [vmem:[#allocation4 + $0x30] sm:$0xff] %vm3698, %v3687
        %3706 = vst.msk [vmem:[#allocation4 + $0x38] sm:$0xff] %vm3698, %v3689
        %v3707 = vld [vmem:[#allocation2] sm:$0xff]
        %v3708 = vld [vmem:[#allocation2 + $0x8] sm:$0xff]
        %v3709 = vld [vmem:[#allocation2 + $0x10] sm:$0xff]
        %v3710 = vld [vmem:[#allocation2 + $0x18] sm:$0xff]
        %v3711 = vld [vmem:[#allocation2 + $0x20] sm:$0xff]
        %v3712 = vld [vmem:[#allocation2 + $0x28] sm:$0xff]
        %v3713 = vld [vmem:[#allocation2 + $0x30] sm:$0xff]
        %v3714 = vld [vmem:[#allocation2 + $0x38] sm:$0xff]
        %v3715 = vld [vmem:[#allocation2 + $0x40] sm:$0xff]
        %v3716 = vld [vmem:[#allocation2 + $0x48] sm:$0xff]
        %v3717 = vld [vmem:[#allocation2 + $0x50] sm:$0xff]
        %v3718 = vld [vmem:[#allocation2 + $0x58] sm:$0xff]
        %v3719 = vld [vmem:[#allocation2 + $0x60] sm:$0xff]
        %v3720 = vld [vmem:[#allocation2 + $0x68] sm:$0xff]
        %v3721 = vld [vmem:[#allocation2 + $0x70] sm:$0xff]
        %v3722 = vld [vmem:[#allocation2 + $0x78] sm:$0xff]
        %v3723 = vld [vmem:[#allocation3] sm:$0xff]
        %v3724 = vld [vmem:[#allocation3 + $0x8] sm:$0xff]
        %v3725 = vld [vmem:[#allocation3 + $0x10] sm:$0xff]
        %v3726 = vld [vmem:[#allocation3 + $0x18] sm:$0xff]
        %v3727 = vld [vmem:[#allocation3 + $0x20] sm:$0xff]
        %v3728 = vld [vmem:[#allocation3 + $0x28] sm:$0xff]
        %v3729 = vld [vmem:[#allocation3 + $0x30] sm:$0xff]
        %v3730 = vld [vmem:[#allocation3 + $0x38] sm:$0xff]
        %v3731 = vld [vmem:[#allocation3 + $0x40] sm:$0xff]
        %v3732 = vld [vmem:[#allocation3 + $0x48] sm:$0xff]
        %v3733 = vld [vmem:[#allocation3 + $0x50] sm:$0xff]
        %v3734 = vld [vmem:[#allocation3 + $0x58] sm:$0xff]
        %v3735 = vld [vmem:[#allocation3 + $0x60] sm:$0xff]
        %v3736 = vld [vmem:[#allocation3 + $0x68] sm:$0xff]
        %v3737 = vld [vmem:[#allocation3 + $0x70] sm:$0xff]
        %v3738 = vld [vmem:[#allocation3 + $0x78] sm:$0xff]
        %3739 = vrot.lane.b32.xlu0 %v1610, 32
        %v3740 = vpop.permute.xlu0 %3739
        %3741 = vrot.lane.b32.xlu0 %v1611, 32
        %v3742 = vpop.permute.xlu0 %3741
        %3743 = vrot.lane.b32.xlu0 %v1612, 32
        %v3744 = vpop.permute.xlu0 %3743
        %3745 = vrot.lane.b32.xlu0 %v1613, 32
        %v3746 = vpop.permute.xlu0 %3745
        %3747 = vrot.lane.b32.xlu0 %v1614, 32
        %v3748 = vpop.permute.xlu0 %3747
        %3749 = vrot.lane.b32.xlu0 %v1615, 32
        %v3750 = vpop.permute.xlu0 %3749
        %3751 = vrot.lane.b32.xlu0 %v1616, 32
        %v3752 = vpop.permute.xlu0 %3751
        %3753 = vrot.lane.b32.xlu0 %v1617, 32
        %v3754 = vpop.permute.xlu0 %3753
        %3771 = vrot.lane.b32.xlu0 %v3707, 32
        %v3772 = vpop.permute.xlu0 %3771
        %3773 = vrot.lane.b32.xlu0 %v3708, 32
        %v3774 = vpop.permute.xlu0 %3773
        %3775 = vrot.lane.b32.xlu0 %v3709, 32
        %v3776 = vpop.permute.xlu0 %3775
        %3777 = vrot.lane.b32.xlu0 %v3710, 32
        %v3778 = vpop.permute.xlu0 %3777
        %3779 = vrot.lane.b32.xlu0 %v3711, 32
        %v3780 = vpop.permute.xlu0 %3779
        %3781 = vrot.lane.b32.xlu0 %v3712, 32
        %v3782 = vpop.permute.xlu0 %3781
        %3783 = vrot.lane.b32.xlu0 %v3713, 32
        %v3784 = vpop.permute.xlu0 %3783
        %3785 = vrot.lane.b32.xlu0 %v3714, 32
        %v3786 = vpop.permute.xlu0 %3785
        %3787 = vrot.lane.b32.xlu0 %v3715, 32
        %v3788 = vpop.permute.xlu0 %3787
        %3789 = vrot.lane.b32.xlu0 %v3716, 32
        %v3790 = vpop.permute.xlu0 %3789
        %3791 = vrot.lane.b32.xlu0 %v3717, 32
        %v3792 = vpop.permute.xlu0 %3791
        %3793 = vrot.lane.b32.xlu0 %v3718, 32
        %v3794 = vpop.permute.xlu0 %3793
        %3795 = vrot.lane.b32.xlu0 %v3719, 32
        %v3796 = vpop.permute.xlu0 %3795
        %3797 = vrot.lane.b32.xlu0 %v3720, 32
        %v3798 = vpop.permute.xlu0 %3797
        %3799 = vrot.lane.b32.xlu0 %v3721, 32
        %v3800 = vpop.permute.xlu0 %3799
        %3801 = vrot.lane.b32.xlu0 %v3722, 32
        %v3802 = vpop.permute.xlu0 %3801
        %v3804 = vsel %vm1650, %v3740, 0
        %v3807 = vsel %vm1650, %v3742, 0
        %v3810 = vsel %vm1650, %v3744, 0
        %v3813 = vsel %vm1650, %v3746, 0
        %v3816 = vsel %vm1650, %v3748, 0
        %v3819 = vsel %vm1650, %v3750, 0
        %v3822 = vsel %vm1650, %v3752, 0
        %v3825 = vsel %vm1650, %v3754, 0
        %v3828 = vsel %vm1650, %v3772, 0
        %v3831 = vsel %vm1650, %v3774, 0
        %v3834 = vsel %vm1650, %v3776, 0
        %v3837 = vsel %vm1650, %v3778, 0
        %v3840 = vsel %vm1650, %v3780, 0
        %v3843 = vsel %vm1650, %v3782, 0
        %v3846 = vsel %vm1650, %v3784, 0
        %v3849 = vsel %vm1650, %v3786, 0
        %v3852 = vsel %vm1650, %v3788, 0
        %v3855 = vsel %vm1650, %v3790, 0
        %v3858 = vsel %vm1650, %v3792, 0
        %v3861 = vsel %vm1650, %v3794, 0
        %v3864 = vsel %vm1650, %v3796, 0
        %v3867 = vsel %vm1650, %v3798, 0
        %v3870 = vsel %vm1650, %v3800, 0
        %v3873 = vsel %vm1650, %v3802, 0
        %3875 = vmatprep.subr.bf16.mxu0 0
        %3876 = vmatpush1.bf16.xpose.msra.mxu0 %v3828
        %3877 = vmatprep.subr.bf16.mxu0 0
        %3878 = vmatpush1.bf16.xpose.msra.mxu0 %v3831
        %3879 = vmatprep.subr.bf16.mxu0 0
        %3880 = vmatpush1.bf16.xpose.msra.mxu0 %v3834
        %3881 = vmatprep.subr.bf16.mxu0 0
        %3882 = vmatpush1.bf16.xpose.msra.mxu0 %v3837
        %3883 = vmatprep.subr.bf16.mxu0 0
        %3884 = vmatpush1.bf16.xpose.msra.mxu0 %v3840
        %3885 = vmatprep.subr.bf16.mxu0 0
        %3886 = vmatpush1.bf16.xpose.msra.mxu0 %v3843
        %3887 = vmatprep.subr.bf16.mxu0 0
        %3888 = vmatpush1.bf16.xpose.msra.mxu0 %v3846
        %3889 = vmatprep.subr.bf16.mxu0 0
        %3890 = vmatpush1.bf16.xpose.msra.mxu0 %v3849
        %3891 = vmatprep.subr.bf16.mxu0 0
        %3892 = vmatpush1.bf16.xpose.msra.mxu0 %v3852
        %3893 = vmatprep.subr.bf16.mxu0 0
        %3894 = vmatpush1.bf16.xpose.msra.mxu0 %v3855
        %3895 = vmatprep.subr.bf16.mxu0 0
        %3896 = vmatpush1.bf16.xpose.msra.mxu0 %v3858
        %3897 = vmatprep.subr.bf16.mxu0 0
        %3898 = vmatpush1.bf16.xpose.msra.mxu0 %v3861
        %3899 = vmatprep.subr.bf16.mxu0 0
        %3900 = vmatpush1.bf16.xpose.msra.mxu0 %v3864
        %3901 = vmatprep.subr.bf16.mxu0 0
        %3902 = vmatpush1.bf16.xpose.msra.mxu0 %v3867
        %3903 = vmatprep.subr.bf16.mxu0 0
        %3904 = vmatpush1.bf16.xpose.msra.mxu0 %v3870
        %3905 = vmatprep.subr.bf16.mxu0 0
        %3906 = vmatpush1.bf16.xpose.msra.mxu0 %v3873
        %3907 = vmatprep.mubr.bf16.mxu0 0
        %3908 = vmatmul.mubr.bf16.gmra.mrb[0].mxu0 %v3804
        %v3909 = vpop.f32.mrb[0].mxu0
        %v3910 = vadd.f32 0.0, %v3909
        %v3911 = vpop.f32.mrb[0].mxu0
        %v3912 = vadd.f32 0.0, %v3911
        %v3913 = vpop.f32.mrb[0].mxu0
        %v3914 = vadd.f32 0.0, %v3913
        %v3915 = vpop.f32.mrb[0].mxu0
        %v3916 = vadd.f32 0.0, %v3915
        %3917 = vmatprep.mubr.bf16.mxu0 0
        %3918 = vmatmul.mubr.bf16.gmra.mrb[0].mxu0 %v3807
        %v3919 = vpop.f32.mrb[0].mxu0
        %v3920 = vadd.f32 0.0, %v3919
        %v3921 = vpop.f32.mrb[0].mxu0
        %v3922 = vadd.f32 0.0, %v3921
        %v3923 = vpop.f32.mrb[0].mxu0
        %v3924 = vadd.f32 0.0, %v3923
        %v3925 = vpop.f32.mrb[0].mxu0
        %v3926 = vadd.f32 0.0, %v3925
        %3927 = vmatprep.mubr.bf16.mxu0 0
        %3928 = vmatmul.mubr.bf16.gmra.mrb[0].mxu0 %v3810
        %v3929 = vpop.f32.mrb[0].mxu0
        %v3930 = vadd.f32 0.0, %v3929
        %v3931 = vpop.f32.mrb[0].mxu0
        %v3932 = vadd.f32 0.0, %v3931
        %v3933 = vpop.f32.mrb[0].mxu0
        %v3934 = vadd.f32 0.0, %v3933
        %v3935 = vpop.f32.mrb[0].mxu0
        %v3936 = vadd.f32 0.0, %v3935
        %3937 = vmatprep.mubr.bf16.mxu0 0
        %3938 = vmatmul.mubr.bf16.gmra.mrb[0].mxu0 %v3813
        %v3939 = vpop.f32.mrb[0].mxu0
        %v3940 = vadd.f32 0.0, %v3939
        %v3941 = vpop.f32.mrb[0].mxu0
        %v3942 = vadd.f32 0.0, %v3941
        %v3943 = vpop.f32.mrb[0].mxu0
        %v3944 = vadd.f32 0.0, %v3943
        %v3945 = vpop.f32.mrb[0].mxu0
        %v3946 = vadd.f32 0.0, %v3945
        %3947 = vmatprep.mubr.bf16.mxu0 0
        %3948 = vmatmul.mubr.bf16.gmra.mrb[0].mxu0 %v3816
        %v3949 = vpop.f32.mrb[0].mxu0
        %v3950 = vadd.f32 0.0, %v3949
        %v3951 = vpop.f32.mrb[0].mxu0
        %v3952 = vadd.f32 0.0, %v3951
        %v3953 = vpop.f32.mrb[0].mxu0
        %v3954 = vadd.f32 0.0, %v3953
        %v3955 = vpop.f32.mrb[0].mxu0
        %v3956 = vadd.f32 0.0, %v3955
        %3957 = vmatprep.mubr.bf16.mxu0 0
        %3958 = vmatmul.mubr.bf16.gmra.mrb[0].mxu0 %v3819
        %v3959 = vpop.f32.mrb[0].mxu0
        %v3960 = vadd.f32 0.0, %v3959
        %v3961 = vpop.f32.mrb[0].mxu0
        %v3962 = vadd.f32 0.0, %v3961
        %v3963 = vpop.f32.mrb[0].mxu0
        %v3964 = vadd.f32 0.0, %v3963
        %v3965 = vpop.f32.mrb[0].mxu0
        %v3966 = vadd.f32 0.0, %v3965
        %3967 = vmatprep.mubr.bf16.mxu0 0
        %3968 = vmatmul.mubr.bf16.gmra.mrb[0].mxu0 %v3822
        %v3969 = vpop.f32.mrb[0].mxu0
        %v3970 = vadd.f32 0.0, %v3969
        %v3971 = vpop.f32.mrb[0].mxu0
        %v3972 = vadd.f32 0.0, %v3971
        %v3973 = vpop.f32.mrb[0].mxu0
        %v3974 = vadd.f32 0.0, %v3973
        %v3975 = vpop.f32.mrb[0].mxu0
        %v3976 = vadd.f32 0.0, %v3975
        %3977 = vmatprep.mubr.bf16.mxu0 0
        %3978 = vmatmul.mubr.bf16.gmra.mrb[0].mxu0 %v3825
        %v3979 = vpop.f32.mrb[0].mxu0
        %v3980 = vadd.f32 0.0, %v3979
        %v3981 = vpop.f32.mrb[0].mxu0
        %v3982 = vadd.f32 0.0, %v3981
        %v3983 = vpop.f32.mrb[0].mxu0
        %v3984 = vadd.f32 0.0, %v3983
        %v3985 = vpop.f32.mrb[0].mxu0
        %v3986 = vadd.f32 0.0, %v3985
        %3987 = vdwg.mxu0
        %v3988 = vmax.f32 %v3910, %v3912
        %3989 = vmax.xlane.f32.xlu0 %v3988
        %v3990 = vpop.xlane.xlu0 %3989
        %v3991 = vmax.f32 %v3914, %v3916
        %3992 = vmax.xlane.f32.xlu0 %v3991
        %v3993 = vpop.xlane.xlu0 %3992
        %v3994 = vmax.f32 %v3920, %v3922
        %3995 = vmax.xlane.f32.xlu0 %v3994
        %v3996 = vpop.xlane.xlu0 %3995
        %v3997 = vmax.f32 %v3924, %v3926
        %3998 = vmax.xlane.f32.xlu0 %v3997
        %v3999 = vpop.xlane.xlu0 %3998
        %v4000 = vmax.f32 %v3930, %v3932
        %4001 = vmax.xlane.f32.xlu0 %v4000
        %v4002 = vpop.xlane.xlu0 %4001
        %v4003 = vmax.f32 %v3934, %v3936
        %4004 = vmax.xlane.f32.xlu0 %v4003
        %v4005 = vpop.xlane.xlu0 %4004
        %v4006 = vmax.f32 %v3940, %v3942
        %4007 = vmax.xlane.f32.xlu0 %v4006
        %v4008 = vpop.xlane.xlu0 %4007
        %v4009 = vmax.f32 %v3944, %v3946
        %4010 = vmax.xlane.f32.xlu0 %v4009
        %v4011 = vpop.xlane.xlu0 %4010
        %v4012 = vmax.f32 %v3950, %v3952
        %4013 = vmax.xlane.f32.xlu0 %v4012
        %v4014 = vpop.xlane.xlu0 %4013
        %v4015 = vmax.f32 %v3954, %v3956
        %4016 = vmax.xlane.f32.xlu0 %v4015
        %v4017 = vpop.xlane.xlu0 %4016
        %v4018 = vmax.f32 %v3960, %v3962
        %4019 = vmax.xlane.f32.xlu0 %v4018
        %v4020 = vpop.xlane.xlu0 %4019
        %v4021 = vmax.f32 %v3964, %v3966
        %4022 = vmax.xlane.f32.xlu0 %v4021
        %v4023 = vpop.xlane.xlu0 %4022
        %v4024 = vmax.f32 %v3970, %v3972
        %4025 = vmax.xlane.f32.xlu0 %v4024
        %v4026 = vpop.xlane.xlu0 %4025
        %v4027 = vmax.f32 %v3974, %v3976
        %4028 = vmax.xlane.f32.xlu0 %v4027
        %v4029 = vpop.xlane.xlu0 %4028
        %v4030 = vmax.f32 %v3980, %v3982
        %4031 = vmax.xlane.f32.xlu0 %v4030
        %v4032 = vpop.xlane.xlu0 %4031
        %v4033 = vmax.f32 %v3984, %v3986
        %4034 = vmax.xlane.f32.xlu0 %v4033
        %v4035 = vpop.xlane.xlu0 %4034
        %v4036 = vsub.f32 %v3910, %v3990
        %v4037 = vsub.f32 %v3912, %v3990
        %v4038 = vsub.f32 %v3914, %v3993
        %v4039 = vsub.f32 %v3916, %v3993
        %v4040 = vsub.f32 %v3920, %v3996
        %v4041 = vsub.f32 %v3922, %v3996
        %v4042 = vsub.f32 %v3924, %v3999
        %v4043 = vsub.f32 %v3926, %v3999
        %v4044 = vsub.f32 %v3930, %v4002
        %v4045 = vsub.f32 %v3932, %v4002
        %v4046 = vsub.f32 %v3934, %v4005
        %v4047 = vsub.f32 %v3936, %v4005
        %v4048 = vsub.f32 %v3940, %v4008
        %v4049 = vsub.f32 %v3942, %v4008
        %v4050 = vsub.f32 %v3944, %v4011
        %v4051 = vsub.f32 %v3946, %v4011
        %v4052 = vsub.f32 %v3950, %v4014
        %v4053 = vsub.f32 %v3952, %v4014
        %v4054 = vsub.f32 %v3954, %v4017
        %v4055 = vsub.f32 %v3956, %v4017
        %v4056 = vsub.f32 %v3960, %v4020
        %v4057 = vsub.f32 %v3962, %v4020
        %v4058 = vsub.f32 %v3964, %v4023
        %v4059 = vsub.f32 %v3966, %v4023
        %v4060 = vsub.f32 %v3970, %v4026
        %v4061 = vsub.f32 %v3972, %v4026
        %v4062 = vsub.f32 %v3974, %v4029
        %v4063 = vsub.f32 %v3976, %v4029
        %v4064 = vsub.f32 %v3980, %v4032
        %v4065 = vsub.f32 %v3982, %v4032
        %v4066 = vsub.f32 %v3984, %v4035
        %v4067 = vsub.f32 %v3986, %v4035
        %v4068 = vmul.f32 %v4036, 1.442695
        %v4069 = vpow.pop %v4068
        %v4070 = vmul.f32 %v4037, 1.442695
        %v4071 = vpow.pop %v4070
        %v4072 = vmul.f32 %v4038, 1.442695
        %v4073 = vpow.pop %v4072
        %v4074 = vmul.f32 %v4039, 1.442695
        %v4075 = vpow.pop %v4074
        %v4076 = vmul.f32 %v4040, 1.442695
        %v4077 = vpow.pop %v4076
        %v4078 = vmul.f32 %v4041, 1.442695
        %v4079 = vpow.pop %v4078
        %v4080 = vmul.f32 %v4042, 1.442695
        %v4081 = vpow.pop %v4080
        %v4082 = vmul.f32 %v4043, 1.442695
        %v4083 = vpow.pop %v4082
        %v4084 = vmul.f32 %v4044, 1.442695
        %v4085 = vpow.pop %v4084
        %v4086 = vmul.f32 %v4045, 1.442695
        %v4087 = vpow.pop %v4086
        %v4088 = vmul.f32 %v4046, 1.442695
        %v4089 = vpow.pop %v4088
        %v4090 = vmul.f32 %v4047, 1.442695
        %v4091 = vpow.pop %v4090
        %v4092 = vmul.f32 %v4048, 1.442695
        %v4093 = vpow.pop %v4092
        %v4094 = vmul.f32 %v4049, 1.442695
        %v4095 = vpow.pop %v4094
        %v4096 = vmul.f32 %v4050, 1.442695
        %v4097 = vpow.pop %v4096
        %v4098 = vmul.f32 %v4051, 1.442695
        %v4099 = vpow.pop %v4098
        %v4100 = vmul.f32 %v4052, 1.442695
        %v4101 = vpow.pop %v4100
        %v4102 = vmul.f32 %v4053, 1.442695
        %v4103 = vpow.pop %v4102
        %v4104 = vmul.f32 %v4054, 1.442695
        %v4105 = vpow.pop %v4104
        %v4106 = vmul.f32 %v4055, 1.442695
        %v4107 = vpow.pop %v4106
        %v4108 = vmul.f32 %v4056, 1.442695
        %v4109 = vpow.pop %v4108
        %v4110 = vmul.f32 %v4057, 1.442695
        %v4111 = vpow.pop %v4110
        %v4112 = vmul.f32 %v4058, 1.442695
        %v4113 = vpow.pop %v4112
        %v4114 = vmul.f32 %v4059, 1.442695
        %v4115 = vpow.pop %v4114
        %v4116 = vmul.f32 %v4060, 1.442695
        %v4117 = vpow.pop %v4116
        %v4118 = vmul.f32 %v4061, 1.442695
        %v4119 = vpow.pop %v4118
        %v4120 = vmul.f32 %v4062, 1.442695
        %v4121 = vpow.pop %v4120
        %v4122 = vmul.f32 %v4063, 1.442695
        %v4123 = vpow.pop %v4122
        %v4124 = vmul.f32 %v4064, 1.442695
        %v4125 = vpow.pop %v4124
        %v4126 = vmul.f32 %v4065, 1.442695
        %v4127 = vpow.pop %v4126
        %v4128 = vmul.f32 %v4066, 1.442695
        %v4129 = vpow.pop %v4128
        %v4130 = vmul.f32 %v4067, 1.442695
        %v4131 = vpow.pop %v4130
        %v4132 = vadd.f32 %v4069, %v4071
        %4133 = vadd.xlane.f32.xlu0 %v4132
        %v4134 = vpop.xlane.xlu0 %4133
        %v4135 = vadd.f32 %v4073, %v4075
        %4136 = vadd.xlane.f32.xlu0 %v4135
        %v4137 = vpop.xlane.xlu0 %4136
        %v4138 = vadd.f32 %v4077, %v4079
        %4139 = vadd.xlane.f32.xlu0 %v4138
        %v4140 = vpop.xlane.xlu0 %4139
        %v4141 = vadd.f32 %v4081, %v4083
        %4142 = vadd.xlane.f32.xlu0 %v4141
        %v4143 = vpop.xlane.xlu0 %4142
        %v4144 = vadd.f32 %v4085, %v4087
        %4145 = vadd.xlane.f32.xlu0 %v4144
        %v4146 = vpop.xlane.xlu0 %4145
        %v4147 = vadd.f32 %v4089, %v4091
        %4148 = vadd.xlane.f32.xlu0 %v4147
        %v4149 = vpop.xlane.xlu0 %4148
        %v4150 = vadd.f32 %v4093, %v4095
        %4151 = vadd.xlane.f32.xlu0 %v4150
        %v4152 = vpop.xlane.xlu0 %4151
        %v4153 = vadd.f32 %v4097, %v4099
        %4154 = vadd.xlane.f32.xlu0 %v4153
        %v4155 = vpop.xlane.xlu0 %4154
        %v4156 = vadd.f32 %v4101, %v4103
        %4157 = vadd.xlane.f32.xlu0 %v4156
        %v4158 = vpop.xlane.xlu0 %4157
        %v4159 = vadd.f32 %v4105, %v4107
        %4160 = vadd.xlane.f32.xlu0 %v4159
        %v4161 = vpop.xlane.xlu0 %4160
        %v4162 = vadd.f32 %v4109, %v4111
        %4163 = vadd.xlane.f32.xlu0 %v4162
        %v4164 = vpop.xlane.xlu0 %4163
        %v4165 = vadd.f32 %v4113, %v4115
        %4166 = vadd.xlane.f32.xlu0 %v4165
        %v4167 = vpop.xlane.xlu0 %4166
        %v4168 = vadd.f32 %v4117, %v4119
        %4169 = vadd.xlane.f32.xlu0 %v4168
        %v4170 = vpop.xlane.xlu0 %4169
        %v4171 = vadd.f32 %v4121, %v4123
        %4172 = vadd.xlane.f32.xlu0 %v4171
        %v4173 = vpop.xlane.xlu0 %4172
        %v4174 = vadd.f32 %v4125, %v4127
        %4175 = vadd.xlane.f32.xlu0 %v4174
        %v4176 = vpop.xlane.xlu0 %4175
        %v4177 = vadd.f32 %v4129, %v4131
        %4178 = vadd.xlane.f32.xlu0 %v4177
        %v4179 = vpop.xlane.xlu0 %4178
        %v4180 = vrcp.pop %v4134
        %v4181 = vmul.f32 %v4069, %v4180
        %v4182 = vmul.f32 %v4071, %v4180
        %v4183 = vrcp.pop %v4137
        %v4184 = vmul.f32 %v4073, %v4183
        %v4185 = vmul.f32 %v4075, %v4183
        %v4186 = vrcp.pop %v4140
        %v4187 = vmul.f32 %v4077, %v4186
        %v4188 = vmul.f32 %v4079, %v4186
        %v4189 = vrcp.pop %v4143
        %v4190 = vmul.f32 %v4081, %v4189
        %v4191 = vmul.f32 %v4083, %v4189
        %v4192 = vrcp.pop %v4146
        %v4193 = vmul.f32 %v4085, %v4192
        %v4194 = vmul.f32 %v4087, %v4192
        %v4195 = vrcp.pop %v4149
        %v4196 = vmul.f32 %v4089, %v4195
        %v4197 = vmul.f32 %v4091, %v4195
        %v4198 = vrcp.pop %v4152
        %v4199 = vmul.f32 %v4093, %v4198
        %v4200 = vmul.f32 %v4095, %v4198
        %v4201 = vrcp.pop %v4155
        %v4202 = vmul.f32 %v4097, %v4201
        %v4203 = vmul.f32 %v4099, %v4201
        %v4204 = vrcp.pop %v4158
        %v4205 = vmul.f32 %v4101, %v4204
        %v4206 = vmul.f32 %v4103, %v4204
        %v4207 = vrcp.pop %v4161
        %v4208 = vmul.f32 %v4105, %v4207
        %v4209 = vmul.f32 %v4107, %v4207
        %v4210 = vrcp.pop %v4164
        %v4211 = vmul.f32 %v4109, %v4210
        %v4212 = vmul.f32 %v4111, %v4210
        %v4213 = vrcp.pop %v4167
        %v4214 = vmul.f32 %v4113, %v4213
        %v4215 = vmul.f32 %v4115, %v4213
        %v4216 = vrcp.pop %v4170
        %v4217 = vmul.f32 %v4117, %v4216
        %v4218 = vmul.f32 %v4119, %v4216
        %v4219 = vrcp.pop %v4173
        %v4220 = vmul.f32 %v4121, %v4219
        %v4221 = vmul.f32 %v4123, %v4219
        %v4222 = vrcp.pop %v4176
        %v4223 = vmul.f32 %v4125, %v4222
        %v4224 = vmul.f32 %v4127, %v4222
        %v4225 = vrcp.pop %v4179
        %v4226 = vmul.f32 %v4129, %v4225
        %v4227 = vmul.f32 %v4131, %v4225
        %v4228 = vpack.c.bf16 %v4184, %v4181
        %v4229 = vpack.c.bf16 %v4185, %v4182
        %v4230 = vpack.c.bf16 %v4190, %v4187
        %v4231 = vpack.c.bf16 %v4191, %v4188
        %v4232 = vpack.c.bf16 %v4196, %v4193
        %v4233 = vpack.c.bf16 %v4197, %v4194
        %v4234 = vpack.c.bf16 %v4202, %v4199
        %v4235 = vpack.c.bf16 %v4203, %v4200
        %v4236 = vpack.c.bf16 %v4208, %v4205
        %v4237 = vpack.c.bf16 %v4209, %v4206
        %v4238 = vpack.c.bf16 %v4214, %v4211
        %v4239 = vpack.c.bf16 %v4215, %v4212
        %v4240 = vpack.c.bf16 %v4220, %v4217
        %v4241 = vpack.c.bf16 %v4221, %v4218
        %v4242 = vpack.c.bf16 %v4226, %v4223
        %v4243 = vpack.c.bf16 %v4227, %v4224
        %4260 = vrot.lane.b32.xlu0 %v3723, 32
        %v4261 = vpop.permute.xlu0 %4260
        %4262 = vrot.lane.b32.xlu0 %v3724, 32
        %v4263 = vpop.permute.xlu0 %4262
        %4264 = vrot.lane.b32.xlu0 %v3725, 32
        %v4265 = vpop.permute.xlu0 %4264
        %4266 = vrot.lane.b32.xlu0 %v3726, 32
        %v4267 = vpop.permute.xlu0 %4266
        %4268 = vrot.lane.b32.xlu0 %v3727, 32
        %v4269 = vpop.permute.xlu0 %4268
        %4270 = vrot.lane.b32.xlu0 %v3728, 32
        %v4271 = vpop.permute.xlu0 %4270
        %4272 = vrot.lane.b32.xlu0 %v3729, 32
        %v4273 = vpop.permute.xlu0 %4272
        %4274 = vrot.lane.b32.xlu0 %v3730, 32
        %v4275 = vpop.permute.xlu0 %4274
        %4276 = vrot.lane.b32.xlu0 %v3731, 32
        %v4277 = vpop.permute.xlu0 %4276
        %4278 = vrot.lane.b32.xlu0 %v3732, 32
        %v4279 = vpop.permute.xlu0 %4278
        %4280 = vrot.lane.b32.xlu0 %v3733, 32
        %v4281 = vpop.permute.xlu0 %4280
        %4282 = vrot.lane.b32.xlu0 %v3734, 32
        %v4283 = vpop.permute.xlu0 %4282
        %4284 = vrot.lane.b32.xlu0 %v3735, 32
        %v4285 = vpop.permute.xlu0 %4284
        %4286 = vrot.lane.b32.xlu0 %v3736, 32
        %v4287 = vpop.permute.xlu0 %4286
        %4288 = vrot.lane.b32.xlu0 %v3737, 32
        %v4289 = vpop.permute.xlu0 %4288
        %4290 = vrot.lane.b32.xlu0 %v3738, 32
        %v4291 = vpop.permute.xlu0 %4290
        %4308 = vmatprep.subr.bf16.mxu0 0
        %4309 = vmatpush1.bf16.msra.mxu0 %v4261
        %4310 = vmatprep.subr.bf16.mxu0 0
        %4311 = vmatpush1.bf16.msra.mxu0 %v4263
        %4312 = vmatprep.subr.bf16.mxu0 0
        %4313 = vmatpush1.bf16.msra.mxu0 %v4265
        %4314 = vmatprep.subr.bf16.mxu0 0
        %4315 = vmatpush1.bf16.msra.mxu0 %v4267
        %4316 = vmatprep.subr.bf16.mxu0 0
        %4317 = vmatpush1.bf16.msra.mxu0 %v4269
        %4318 = vmatprep.subr.bf16.mxu0 0
        %4319 = vmatpush1.bf16.msra.mxu0 %v4271
        %4320 = vmatprep.subr.bf16.mxu0 0
        %4321 = vmatpush1.bf16.msra.mxu0 %v4273
        %4322 = vmatprep.subr.bf16.mxu0 0
        %4323 = vmatpush1.bf16.msra.mxu0 %v4275
        %4324 = vmatprep.subr.bf16.mxu0 0
        %4325 = vmatpush1.bf16.msra.mxu0 %v4277
        %4326 = vmatprep.subr.bf16.mxu0 0
        %4327 = vmatpush1.bf16.msra.mxu0 %v4279
        %4328 = vmatprep.subr.bf16.mxu0 0
        %4329 = vmatpush1.bf16.msra.mxu0 %v4281
        %4330 = vmatprep.subr.bf16.mxu0 0
        %4331 = vmatpush1.bf16.msra.mxu0 %v4283
        %4332 = vmatprep.subr.bf16.mxu0 0
        %4333 = vmatpush1.bf16.msra.mxu0 %v4285
        %4334 = vmatprep.subr.bf16.mxu0 0
        %4335 = vmatpush1.bf16.msra.mxu0 %v4287
        %4336 = vmatprep.subr.bf16.mxu0 0
        %4337 = vmatpush1.bf16.msra.mxu0 %v4289
        %4338 = vmatprep.subr.bf16.mxu0 0
        %4339 = vmatpush1.bf16.msra.mxu0 %v4291
        %4340 = vmatprep.mubr.bf16.mxu0 %v4229
        %4341 = vmatmul.mubr.bf16.gmra.mrb[0].mxu0 %v4228
        %v4342 = vpop.f32.mrb[0].mxu0
        %v4343 = vadd.f32 0.0, %v4342
        %v4344 = vpop.f32.mrb[0].mxu0
        %v4345 = vpop.f32.mrb[0].mxu0
        %v4346 = vadd.f32 0.0, %v4345
        %v4347 = vpop.f32.mrb[0].mxu0
        %4348 = vmatprep.mubr.bf16.mxu0 %v4231
        %4349 = vmatmul.mubr.bf16.gmra.mrb[0].mxu0 %v4230
        %v4350 = vpop.f32.mrb[0].mxu0
        %v4351 = vadd.f32 0.0, %v4350
        %v4352 = vpop.f32.mrb[0].mxu0
        %v4353 = vpop.f32.mrb[0].mxu0
        %v4354 = vadd.f32 0.0, %v4353
        %v4355 = vpop.f32.mrb[0].mxu0
        %4356 = vmatprep.mubr.bf16.mxu0 %v4233
        %4357 = vmatmul.mubr.bf16.gmra.mrb[0].mxu0 %v4232
        %v4358 = vpop.f32.mrb[0].mxu0
        %v4359 = vadd.f32 0.0, %v4358
        %v4360 = vpop.f32.mrb[0].mxu0
        %v4361 = vpop.f32.mrb[0].mxu0
        %v4362 = vadd.f32 0.0, %v4361
        %v4363 = vpop.f32.mrb[0].mxu0
        %4364 = vmatprep.mubr.bf16.mxu0 %v4235
        %4365 = vmatmul.mubr.bf16.gmra.mrb[0].mxu0 %v4234
        %v4366 = vpop.f32.mrb[0].mxu0
        %v4367 = vadd.f32 0.0, %v4366
        %v4368 = vpop.f32.mrb[0].mxu0
        %v4369 = vpop.f32.mrb[0].mxu0
        %v4370 = vadd.f32 0.0, %v4369
        %v4371 = vpop.f32.mrb[0].mxu0
        %4372 = vmatprep.mubr.bf16.mxu0 %v4237
        %4373 = vmatmul.mubr.bf16.gmra.mrb[0].mxu0 %v4236
        %v4374 = vpop.f32.mrb[0].mxu0
        %v4375 = vadd.f32 0.0, %v4374
        %v4376 = vpop.f32.mrb[0].mxu0
        %v4377 = vpop.f32.mrb[0].mxu0
        %v4378 = vadd.f32 0.0, %v4377
        %v4379 = vpop.f32.mrb[0].mxu0
        %4380 = vmatprep.mubr.bf16.mxu0 %v4239
        %4381 = vmatmul.mubr.bf16.gmra.mrb[0].mxu0 %v4238
        %v4382 = vpop.f32.mrb[0].mxu0
        %v4383 = vadd.f32 0.0, %v4382
        %v4384 = vpop.f32.mrb[0].mxu0
        %v4385 = vpop.f32.mrb[0].mxu0
        %v4386 = vadd.f32 0.0, %v4385
        %v4387 = vpop.f32.mrb[0].mxu0
        %4388 = vmatprep.mubr.bf16.mxu0 %v4241
        %4389 = vmatmul.mubr.bf16.gmra.mrb[0].mxu0 %v4240
        %v4390 = vpop.f32.mrb[0].mxu0
        %v4391 = vadd.f32 0.0, %v4390
        %v4392 = vpop.f32.mrb[0].mxu0
        %v4393 = vpop.f32.mrb[0].mxu0
        %v4394 = vadd.f32 0.0, %v4393
        %v4395 = vpop.f32.mrb[0].mxu0
        %4396 = vmatprep.mubr.bf16.mxu0 %v4243
        %4397 = vmatmul.mubr.bf16.gmra.mrb[0].mxu0 %v4242
        %v4398 = vpop.f32.mrb[0].mxu0
        %v4399 = vadd.f32 0.0, %v4398
        %v4400 = vpop.f32.mrb[0].mxu0
        %v4401 = vpop.f32.mrb[0].mxu0
        %v4402 = vadd.f32 0.0, %v4401
        %v4403 = vpop.f32.mrb[0].mxu0
        %4404 = vdwg.mxu0
        %v4405 = vpack.c.bf16 %v4346, %v4343
        %v4406 = vpack.c.bf16 %v4354, %v4351
        %v4407 = vpack.c.bf16 %v4362, %v4359
        %v4408 = vpack.c.bf16 %v4370, %v4367
        %v4409 = vpack.c.bf16 %v4378, %v4375
        %v4410 = vpack.c.bf16 %v4386, %v4383
        %v4411 = vpack.c.bf16 %v4394, %v4391
        %v4412 = vpack.c.bf16 %v4402, %v4399
        %4421 = vrot.lane.b32.xlu0 %v4405, 96
        %v4422 = vpop.permute.xlu0 %4421
        %4423 = vrot.lane.b32.xlu0 %v4406, 96
        %v4424 = vpop.permute.xlu0 %4423
        %4425 = vrot.lane.b32.xlu0 %v4407, 96
        %v4426 = vpop.permute.xlu0 %4425
        %4427 = vrot.lane.b32.xlu0 %v4408, 96
        %v4428 = vpop.permute.xlu0 %4427
        %4429 = vrot.lane.b32.xlu0 %v4409, 96
        %v4430 = vpop.permute.xlu0 %4429
        %4431 = vrot.lane.b32.xlu0 %v4410, 96
        %v4432 = vpop.permute.xlu0 %4431
        %4433 = vrot.lane.b32.xlu0 %v4411, 96
        %v4434 = vpop.permute.xlu0 %4433
        %4435 = vrot.lane.b32.xlu0 %v4412, 96
        %v4436 = vpop.permute.xlu0 %4435
        %vm4445 = vcmask 1048320
        %4446 = vst.msk [vmem:[#allocation4] sm:$0xff] %vm4445, %v4422
        %4447 = vst.msk [vmem:[#allocation4 + $0x8] sm:$0xff] %vm4445, %v4424
        %4448 = vst.msk [vmem:[#allocation4 + $0x10] sm:$0xff] %vm4445, %v4426
        %4449 = vst.msk [vmem:[#allocation4 + $0x18] sm:$0xff] %vm4445, %v4428
        %4450 = vst.msk [vmem:[#allocation4 + $0x20] sm:$0xff] %vm4445, %v4430
        %4451 = vst.msk [vmem:[#allocation4 + $0x28] sm:$0xff] %vm4445, %v4432
        %4452 = vst.msk [vmem:[#allocation4 + $0x30] sm:$0xff] %vm4445, %v4434
        %4453 = vst.msk [vmem:[#allocation4 + $0x38] sm:$0xff] %vm4445, %v4436
        %v4454 = vld [vmem:[#allocation4] sm:$0xff]
        %v4455 = vld [vmem:[#allocation4 + $0x8] sm:$0xff]
        %v4456 = vld [vmem:[#allocation4 + $0x10] sm:$0xff]
        %v4457 = vld [vmem:[#allocation4 + $0x18] sm:$0xff]
        %v4458 = vld [vmem:[#allocation4 + $0x20] sm:$0xff]
        %v4459 = vld [vmem:[#allocation4 + $0x28] sm:$0xff]
        %v4460 = vld [vmem:[#allocation4 + $0x30] sm:$0xff]
        %v4461 = vld [vmem:[#allocation4 + $0x38] sm:$0xff]
        %v4462 = vld [vmem:[#allocation14] sm:$0xf]
        %v4463 = vld [vmem:[#allocation14 + $0x4] sm:$0xf]
        %v4464 = vld [vmem:[#allocation14 + $0x8] sm:$0xf]
        %v4465 = vld [vmem:[#allocation14 + $0xc] sm:$0xf]
        %v4466 = vld [vmem:[#allocation14 + $0x10] sm:$0xf]
        %v4467 = vld [vmem:[#allocation14 + $0x14] sm:$0xf]
        %v4468 = vld [vmem:[#allocation14 + $0x18] sm:$0xf]
        %v4469 = vld [vmem:[#allocation14 + $0x1c] sm:$0xf]
        %v4470 = vld [vmem:[#allocation14 + $0x20] sm:$0xf]
        %v4471 = vld [vmem:[#allocation14 + $0x24] sm:$0xf]
        %v4472 = vld [vmem:[#allocation14 + $0x28] sm:$0xf]
        %v4473 = vld [vmem:[#allocation14 + $0x2c] sm:$0xf]
        %v4474 = vld [vmem:[#allocation14 + $0x30] sm:$0xf]
        %v4475 = vld [vmem:[#allocation14 + $0x34] sm:$0xf]
        %v4476 = vld [vmem:[#allocation14 + $0x38] sm:$0xf]
        %v4477 = vld [vmem:[#allocation14 + $0x3c] sm:$0xf]
        %v4478 = vld [vmem:[%s9] sm:$0x1]
        %v4480 = vlaneseq
        %v4481 = vshrl.u32 %v4480, 7
        %v4482 = vsub.s32 0, %v4481
        %v4483 = vrot.slane %v4478, %v4482
        %v4501 = vunpack.c.l.b16 %v4462
        %v4502 = vunpack.c.l.b16 %v4463
        %v4503 = vunpack.c.l.b16 %v4464
        %v4504 = vunpack.c.l.b16 %v4465
        %v4505 = vunpack.c.l.b16 %v4466
        %v4506 = vunpack.c.l.b16 %v4467
        %v4507 = vunpack.c.l.b16 %v4468
        %v4508 = vunpack.c.l.b16 %v4469
        %v4509 = vunpack.c.l.b16 %v4470
        %v4510 = vunpack.c.l.b16 %v4471
        %v4511 = vunpack.c.l.b16 %v4472
        %v4512 = vunpack.c.l.b16 %v4473
        %v4513 = vunpack.c.l.b16 %v4474
        %v4514 = vunpack.c.l.b16 %v4475
        %v4515 = vunpack.c.l.b16 %v4476
        %v4516 = vunpack.c.l.b16 %v4477
        %v4517 = vpack.c.b16 %v4502, %v4501
        %v4518 = vpack.c.b16 %v4504, %v4503
        %v4519 = vpack.c.b16 %v4506, %v4505
        %v4520 = vpack.c.b16 %v4508, %v4507
        %v4521 = vpack.c.b16 %v4510, %v4509
        %v4522 = vpack.c.b16 %v4512, %v4511
        %v4523 = vpack.c.b16 %v4514, %v4513
        %v4524 = vpack.c.b16 %v4516, %v4515
        %4533 = vmatprep.subr.bf16.mxu0 0
        %4534 = vmatpush1.bf16.msra.mxu0 %v4517
        %4535 = vmatprep.subr.bf16.mxu0 0
        %4536 = vmatpush1.bf16.msra.mxu0 %v4518
        %4537 = vmatprep.subr.bf16.mxu0 0
        %4538 = vmatpush1.bf16.msra.mxu0 %v4519
        %4539 = vmatprep.subr.bf16.mxu0 0
        %4540 = vmatpush1.bf16.msra.mxu0 %v4520
        %4541 = vmatprep.subr.bf16.mxu0 0
        %4542 = vmatpush1.bf16.msra.mxu0 %v4521
        %4543 = vmatprep.subr.bf16.mxu0 0
        %4544 = vmatpush1.bf16.msra.mxu0 %v4522
        %4545 = vmatprep.subr.bf16.mxu0 0
        %4546 = vmatpush1.bf16.msra.mxu0 %v4523
        %4547 = vmatprep.subr.bf16.mxu0 0
        %4548 = vmatpush1.bf16.msra.mxu0 %v4524
        %4549 = vmatprep.subr.bf16.mxu0 0
        %4550 = vmatpush1.bf16.msra.mxu0 0
        %4551 = vmatprep.subr.bf16.mxu0 0
        %4552 = vmatpush1.bf16.msra.mxu0 0
        %4553 = vmatprep.subr.bf16.mxu0 0
        %4554 = vmatpush1.bf16.msra.mxu0 0
        %4555 = vmatprep.subr.bf16.mxu0 0
        %4556 = vmatpush1.bf16.msra.mxu0 0
        %4557 = vmatprep.subr.bf16.mxu0 0
        %4558 = vmatpush1.bf16.msra.mxu0 0
        %4559 = vmatprep.subr.bf16.mxu0 0
        %4560 = vmatpush1.bf16.msra.mxu0 0
        %4561 = vmatprep.subr.bf16.mxu0 0
        %4562 = vmatpush1.bf16.msra.mxu0 0
        %4563 = vmatprep.subr.bf16.mxu0 0
        %4564 = vmatpush1.bf16.msra.mxu0 0
        %4565 = vmatprep.mubr.bf16.mxu0 0
        %4566 = vmatmul.mubr.bf16.gmra.mrb[0].mxu0 %v4454
        %v4567 = vpop.f32.mrb[0].mxu0
        %v4568 = vadd.f32 %v4483, %v4567
        %v4569 = vpop.f32.mrb[0].mxu0
        %v4570 = vpop.f32.mrb[0].mxu0
        %v4571 = vadd.f32 %v4483, %v4570
        %v4572 = vpop.f32.mrb[0].mxu0
        %4573 = vmatprep.mubr.bf16.mxu0 0
        %4574 = vmatmul.mubr.bf16.gmra.mrb[0].mxu0 %v4455
        %v4575 = vpop.f32.mrb[0].mxu0
        %v4576 = vadd.f32 %v4483, %v4575
        %v4577 = vpop.f32.mrb[0].mxu0
        %v4578 = vpop.f32.mrb[0].mxu0
        %v4579 = vadd.f32 %v4483, %v4578
        %v4580 = vpop.f32.mrb[0].mxu0
        %4581 = vmatprep.mubr.bf16.mxu0 0
        %4582 = vmatmul.mubr.bf16.gmra.mrb[0].mxu0 %v4456
        %v4583 = vpop.f32.mrb[0].mxu0
        %v4584 = vadd.f32 %v4483, %v4583
        %v4585 = vpop.f32.mrb[0].mxu0
        %v4586 = vpop.f32.mrb[0].mxu0
        %v4587 = vadd.f32 %v4483, %v4586
        %v4588 = vpop.f32.mrb[0].mxu0
        %4589 = vmatprep.mubr.bf16.mxu0 0
        %4590 = vmatmul.mubr.bf16.gmra.mrb[0].mxu0 %v4457
        %v4591 = vpop.f32.mrb[0].mxu0
        %v4592 = vadd.f32 %v4483, %v4591
        %v4593 = vpop.f32.mrb[0].mxu0
        %v4594 = vpop.f32.mrb[0].mxu0
        %v4595 = vadd.f32 %v4483, %v4594
        %v4596 = vpop.f32.mrb[0].mxu0
        %4597 = vmatprep.mubr.bf16.mxu0 0
        %4598 = vmatmul.mubr.bf16.gmra.mrb[0].mxu0 %v4458
        %v4599 = vpop.f32.mrb[0].mxu0
        %v4600 = vadd.f32 %v4483, %v4599
        %v4601 = vpop.f32.mrb[0].mxu0
        %v4602 = vpop.f32.mrb[0].mxu0
        %v4603 = vadd.f32 %v4483, %v4602
        %v4604 = vpop.f32.mrb[0].mxu0
        %4605 = vmatprep.mubr.bf16.mxu0 0
        %4606 = vmatmul.mubr.bf16.gmra.mrb[0].mxu0 %v4459
        %v4607 = vpop.f32.mrb[0].mxu0
        %v4608 = vadd.f32 %v4483, %v4607
        %v4609 = vpop.f32.mrb[0].mxu0
        %v4610 = vpop.f32.mrb[0].mxu0
        %v4611 = vadd.f32 %v4483, %v4610
        %v4612 = vpop.f32.mrb[0].mxu0
        %4613 = vmatprep.mubr.bf16.mxu0 0
        %4614 = vmatmul.mubr.bf16.gmra.mrb[0].mxu0 %v4460
        %v4615 = vpop.f32.mrb[0].mxu0
        %v4616 = vadd.f32 %v4483, %v4615
        %v4617 = vpop.f32.mrb[0].mxu0
        %v4618 = vpop.f32.mrb[0].mxu0
        %v4619 = vadd.f32 %v4483, %v4618
        %v4620 = vpop.f32.mrb[0].mxu0
        %4621 = vmatprep.mubr.bf16.mxu0 0
        %4622 = vmatmul.mubr.bf16.gmra.mrb[0].mxu0 %v4461
        %v4623 = vpop.f32.mrb[0].mxu0
        %v4624 = vadd.f32 %v4483, %v4623
        %v4625 = vpop.f32.mrb[0].mxu0
        %v4626 = vpop.f32.mrb[0].mxu0
        %v4627 = vadd.f32 %v4483, %v4626
        %v4628 = vpop.f32.mrb[0].mxu0
        %4629 = vdwg.mxu0
        %v4630 = vadd.f32 %v1402, %v4568
        %v4631 = vadd.f32 %v1403, %v4571
        %v4632 = vadd.f32 %v1404, %v4576
        %v4633 = vadd.f32 %v1405, %v4579
        %v4634 = vadd.f32 %v1406, %v4584
        %v4635 = vadd.f32 %v1407, %v4587
        %v4636 = vadd.f32 %v1408, %v4592
        %v4637 = vadd.f32 %v1409, %v4595
        %v4638 = vadd.f32 %v1410, %v4600
        %v4639 = vadd.f32 %v1411, %v4603
        %v4640 = vadd.f32 %v1412, %v4608
        %v4641 = vadd.f32 %v1413, %v4611
        %v4642 = vadd.f32 %v1414, %v4616
        %v4643 = vadd.f32 %v1415, %v4619
        %v4644 = vadd.f32 %v1416, %v4624
        %v4645 = vadd.f32 %v1417, %v4627
        %v4646 = vld [vmem:[%s10] sm:$0x1]
        %v4647 = vld [vmem:[%s11] sm:$0x1]
        %4648 = vadd.xlane.f32.xlu0 %v4630
        %v4649 = vpop.xlane.xlu0 %4648
        %4650 = vadd.xlane.f32.xlu0 %v4631
        %v4651 = vpop.xlane.xlu0 %4650
        %4652 = vadd.xlane.f32.xlu0 %v4632
        %v4653 = vpop.xlane.xlu0 %4652
        %4654 = vadd.xlane.f32.xlu0 %v4633
        %v4655 = vpop.xlane.xlu0 %4654
        %4656 = vadd.xlane.f32.xlu0 %v4634
        %v4657 = vpop.xlane.xlu0 %4656
        %4658 = vadd.xlane.f32.xlu0 %v4635
        %v4659 = vpop.xlane.xlu0 %4658
        %4660 = vadd.xlane.f32.xlu0 %v4636
        %v4661 = vpop.xlane.xlu0 %4660
        %4662 = vadd.xlane.f32.xlu0 %v4637
        %v4663 = vpop.xlane.xlu0 %4662
        %4664 = vadd.xlane.f32.xlu0 %v4638
        %v4665 = vpop.xlane.xlu0 %4664
        %4666 = vadd.xlane.f32.xlu0 %v4639
        %v4667 = vpop.xlane.xlu0 %4666
        %4668 = vadd.xlane.f32.xlu0 %v4640
        %v4669 = vpop.xlane.xlu0 %4668
        %4670 = vadd.xlane.f32.xlu0 %v4641
        %v4671 = vpop.xlane.xlu0 %4670
        %4672 = vadd.xlane.f32.xlu0 %v4642
        %v4673 = vpop.xlane.xlu0 %4672
        %4674 = vadd.xlane.f32.xlu0 %v4643
        %v4675 = vpop.xlane.xlu0 %4674
        %4676 = vadd.xlane.f32.xlu0 %v4644
        %v4677 = vpop.xlane.xlu0 %4676
        %4678 = vadd.xlane.f32.xlu0 %v4645
        %v4679 = vpop.xlane.xlu0 %4678
        %v4680 = vrcp.pop 128.0
        %v4681 = vmul.f32 %v4649, %v4680
        %v4682 = vmul.f32 %v4651, %v4680
        %v4683 = vmul.f32 %v4653, %v4680
        %v4684 = vmul.f32 %v4655, %v4680
        %v4685 = vmul.f32 %v4657, %v4680
        %v4686 = vmul.f32 %v4659, %v4680
        %v4687 = vmul.f32 %v4661, %v4680
        %v4688 = vmul.f32 %v4663, %v4680
        %v4689 = vmul.f32 %v4665, %v4680
        %v4690 = vmul.f32 %v4667, %v4680
        %v4691 = vmul.f32 %v4669, %v4680
        %v4692 = vmul.f32 %v4671, %v4680
        %v4693 = vmul.f32 %v4673, %v4680
        %v4694 = vmul.f32 %v4675, %v4680
        %v4695 = vmul.f32 %v4677, %v4680
        %v4696 = vmul.f32 %v4679, %v4680
        %v4697 = vsub.f32 %v4630, %v4681
        %v4698 = vsub.f32 %v4631, %v4682
        %v4699 = vsub.f32 %v4632, %v4683
        %v4700 = vsub.f32 %v4633, %v4684
        %v4701 = vsub.f32 %v4634, %v4685
        %v4702 = vsub.f32 %v4635, %v4686
        %v4703 = vsub.f32 %v4636, %v4687
        %v4704 = vsub.f32 %v4637, %v4688
        %v4705 = vsub.f32 %v4638, %v4689
        %v4706 = vsub.f32 %v4639, %v4690
        %v4707 = vsub.f32 %v4640, %v4691
        %v4708 = vsub.f32 %v4641, %v4692
        %v4709 = vsub.f32 %v4642, %v4693
        %v4710 = vsub.f32 %v4643, %v4694
        %v4711 = vsub.f32 %v4644, %v4695
        %v4712 = vsub.f32 %v4645, %v4696
        %v4713 = vmul.f32 %v4697, %v4697
        %v4714 = vmul.f32 %v4698, %v4698
        %v4715 = vmul.f32 %v4699, %v4699
        %v4716 = vmul.f32 %v4700, %v4700
        %v4717 = vmul.f32 %v4701, %v4701
        %v4718 = vmul.f32 %v4702, %v4702
        %v4719 = vmul.f32 %v4703, %v4703
        %v4720 = vmul.f32 %v4704, %v4704
        %v4721 = vmul.f32 %v4705, %v4705
        %v4722 = vmul.f32 %v4706, %v4706
        %v4723 = vmul.f32 %v4707, %v4707
        %v4724 = vmul.f32 %v4708, %v4708
        %v4725 = vmul.f32 %v4709, %v4709
        %v4726 = vmul.f32 %v4710, %v4710
        %v4727 = vmul.f32 %v4711, %v4711
        %v4728 = vmul.f32 %v4712, %v4712
        %4729 = vadd.xlane.f32.xlu0 %v4713
        %v4730 = vpop.xlane.xlu0 %4729
        %4731 = vadd.xlane.f32.xlu0 %v4714
        %v4732 = vpop.xlane.xlu0 %4731
        %4733 = vadd.xlane.f32.xlu0 %v4715
        %v4734 = vpop.xlane.xlu0 %4733
        %4735 = vadd.xlane.f32.xlu0 %v4716
        %v4736 = vpop.xlane.xlu0 %4735
        %4737 = vadd.xlane.f32.xlu0 %v4717
        %v4738 = vpop.xlane.xlu0 %4737
        %4739 = vadd.xlane.f32.xlu0 %v4718
        %v4740 = vpop.xlane.xlu0 %4739
        %4741 = vadd.xlane.f32.xlu0 %v4719
        %v4742 = vpop.xlane.xlu0 %4741
        %4743 = vadd.xlane.f32.xlu0 %v4720
        %v4744 = vpop.xlane.xlu0 %4743
        %4745 = vadd.xlane.f32.xlu0 %v4721
        %v4746 = vpop.xlane.xlu0 %4745
        %4747 = vadd.xlane.f32.xlu0 %v4722
        %v4748 = vpop.xlane.xlu0 %4747
        %4749 = vadd.xlane.f32.xlu0 %v4723
        %v4750 = vpop.xlane.xlu0 %4749
        %4751 = vadd.xlane.f32.xlu0 %v4724
        %v4752 = vpop.xlane.xlu0 %4751
        %4753 = vadd.xlane.f32.xlu0 %v4725
        %v4754 = vpop.xlane.xlu0 %4753
        %4755 = vadd.xlane.f32.xlu0 %v4726
        %v4756 = vpop.xlane.xlu0 %4755
        %4757 = vadd.xlane.f32.xlu0 %v4727
        %v4758 = vpop.xlane.xlu0 %4757
        %4759 = vadd.xlane.f32.xlu0 %v4728
        %v4760 = vpop.xlane.xlu0 %4759
        %v4761 = vmul.f32 %v4730, %v4680
        %v4762 = vmul.f32 %v4732, %v4680
        %v4763 = vmul.f32 %v4734, %v4680
        %v4764 = vmul.f32 %v4736, %v4680
        %v4765 = vmul.f32 %v4738, %v4680
        %v4766 = vmul.f32 %v4740, %v4680
        %v4767 = vmul.f32 %v4742, %v4680
        %v4768 = vmul.f32 %v4744, %v4680
        %v4769 = vmul.f32 %v4746, %v4680
        %v4770 = vmul.f32 %v4748, %v4680
        %v4771 = vmul.f32 %v4750, %v4680
        %v4772 = vmul.f32 %v4752, %v4680
        %v4773 = vmul.f32 %v4754, %v4680
        %v4774 = vmul.f32 %v4756, %v4680
        %v4775 = vmul.f32 %v4758, %v4680
        %v4776 = vmul.f32 %v4760, %v4680
        %v4777 = vadd.f32 %v4761, 1e-05
        %v4778 = vadd.f32 %v4762, 1e-05
        %v4779 = vadd.f32 %v4763, 1e-05
        %v4780 = vadd.f32 %v4764, 1e-05
        %v4781 = vadd.f32 %v4765, 1e-05
        %v4782 = vadd.f32 %v4766, 1e-05
        %v4783 = vadd.f32 %v4767, 1e-05
        %v4784 = vadd.f32 %v4768, 1e-05
        %v4785 = vadd.f32 %v4769, 1e-05
        %v4786 = vadd.f32 %v4770, 1e-05
        %v4787 = vadd.f32 %v4771, 1e-05
        %v4788 = vadd.f32 %v4772, 1e-05
        %v4789 = vadd.f32 %v4773, 1e-05
        %v4790 = vadd.f32 %v4774, 1e-05
        %v4791 = vadd.f32 %v4775, 1e-05
        %v4792 = vadd.f32 %v4776, 1e-05
        %v4793 = vrsqrt.pop %v4777
        %v4794 = vrsqrt.pop %v4778
        %v4795 = vrsqrt.pop %v4779
        %v4796 = vrsqrt.pop %v4780
        %v4797 = vrsqrt.pop %v4781
        %v4798 = vrsqrt.pop %v4782
        %v4799 = vrsqrt.pop %v4783
        %v4800 = vrsqrt.pop %v4784
        %v4801 = vrsqrt.pop %v4785
        %v4802 = vrsqrt.pop %v4786
        %v4803 = vrsqrt.pop %v4787
        %v4804 = vrsqrt.pop %v4788
        %v4805 = vrsqrt.pop %v4789
        %v4806 = vrsqrt.pop %v4790
        %v4807 = vrsqrt.pop %v4791
        %v4808 = vrsqrt.pop %v4792
        %v4809 = vmul.f32 %v4697, %v4793
        %v4810 = vmul.f32 %v4698, %v4794
        %v4811 = vmul.f32 %v4699, %v4795
        %v4812 = vmul.f32 %v4700, %v4796
        %v4813 = vmul.f32 %v4701, %v4797
        %v4814 = vmul.f32 %v4702, %v4798
        %v4815 = vmul.f32 %v4703, %v4799
        %v4816 = vmul.f32 %v4704, %v4800
        %v4817 = vmul.f32 %v4705, %v4801
        %v4818 = vmul.f32 %v4706, %v4802
        %v4819 = vmul.f32 %v4707, %v4803
        %v4820 = vmul.f32 %v4708, %v4804
        %v4821 = vmul.f32 %v4709, %v4805
        %v4822 = vmul.f32 %v4710, %v4806
        %v4823 = vmul.f32 %v4711, %v4807
        %v4824 = vmul.f32 %v4712, %v4808
        %v4826 = vlaneseq
        %v4827 = vshrl.u32 %v4826, 7
        %v4828 = vsub.s32 0, %v4827
        %v4829 = vrot.slane %v4646, %v4828
        %v4831 = vmul.f32 %v4809, %v4829
        %v4832 = vmul.f32 %v4810, %v4829
        %v4833 = vmul.f32 %v4811, %v4829
        %v4834 = vmul.f32 %v4812, %v4829
        %v4835 = vmul.f32 %v4813, %v4829
        %v4836 = vmul.f32 %v4814, %v4829
        %v4837 = vmul.f32 %v4815, %v4829
        %v4838 = vmul.f32 %v4816, %v4829
        %v4839 = vmul.f32 %v4817, %v4829
        %v4840 = vmul.f32 %v4818, %v4829
        %v4841 = vmul.f32 %v4819, %v4829
        %v4842 = vmul.f32 %v4820, %v4829
        %v4843 = vmul.f32 %v4821, %v4829
        %v4844 = vmul.f32 %v4822, %v4829
        %v4845 = vmul.f32 %v4823, %v4829
        %v4846 = vmul.f32 %v4824, %v4829
        %v4848 = vlaneseq
        %v4849 = vshrl.u32 %v4848, 7
        %v4850 = vsub.s32 0, %v4849
        %v4851 = vrot.slane %v4647, %v4850
        %v4853 = vadd.f32 %v4831, %v4851
        %v4854 = vadd.f32 %v4832, %v4851
        %v4855 = vadd.f32 %v4833, %v4851
        %v4856 = vadd.f32 %v4834, %v4851
        %v4857 = vadd.f32 %v4835, %v4851
        %v4858 = vadd.f32 %v4836, %v4851
        %v4859 = vadd.f32 %v4837, %v4851
        %v4860 = vadd.f32 %v4838, %v4851
        %v4861 = vadd.f32 %v4839, %v4851
        %v4862 = vadd.f32 %v4840, %v4851
        %v4863 = vadd.f32 %v4841, %v4851
        %v4864 = vadd.f32 %v4842, %v4851
        %v4865 = vadd.f32 %v4843, %v4851
        %v4866 = vadd.f32 %v4844, %v4851
        %v4867 = vadd.f32 %v4845, %v4851
        %v4868 = vadd.f32 %v4846, %v4851
        %v4869 = vpack.c.bf16 %v4854, %v4853
        %v4870 = vpack.c.bf16 %v4856, %v4855
        %v4871 = vpack.c.bf16 %v4858, %v4857
        %v4872 = vpack.c.bf16 %v4860, %v4859
        %v4873 = vpack.c.bf16 %v4862, %v4861
        %v4874 = vpack.c.bf16 %v4864, %v4863
        %v4875 = vpack.c.bf16 %v4866, %v4865
        %v4876 = vpack.c.bf16 %v4868, %v4867
        %v4877 = vld [vmem:[#allocation16] sm:$0xff]
        %v4878 = vld [vmem:[#allocation16 + $0x8] sm:$0xff]
        %v4879 = vld [vmem:[#allocation16 + $0x10] sm:$0xff]
        %v4880 = vld [vmem:[#allocation16 + $0x18] sm:$0xff]
        %v4881 = vld [vmem:[#allocation16 + $0x20] sm:$0xff]
        %v4882 = vld [vmem:[#allocation16 + $0x28] sm:$0xff]
        %v4883 = vld [vmem:[#allocation16 + $0x30] sm:$0xff]
        %v4884 = vld [vmem:[#allocation16 + $0x38] sm:$0xff]
        %v4885 = vld [vmem:[#allocation16 + $0x40] sm:$0xff]
        %v4886 = vld [vmem:[#allocation16 + $0x48] sm:$0xff]
        %v4887 = vld [vmem:[#allocation16 + $0x50] sm:$0xff]
        %v4888 = vld [vmem:[#allocation16 + $0x58] sm:$0xff]
        %v4889 = vld [vmem:[#allocation16 + $0x60] sm:$0xff]
        %v4890 = vld [vmem:[#allocation16 + $0x68] sm:$0xff]
        %v4891 = vld [vmem:[#allocation16 + $0x70] sm:$0xff]
        %v4892 = vld [vmem:[#allocation16 + $0x78] sm:$0xff]
        %v4893 = vld [vmem:[%s13] sm:$0x3]
        %v4895 = vlaneseq
        %v4896 = vshrl.u32 %v4895, 7
        %v4897 = vsub.s32 0, %v4896
        %v4898 = vrot.slane %v4893, %v4897
        %v4899 = vlaneseq
        %v4900 = vshrl.u32 %v4899, 7
        %v4901 = vsub.s32 1, %v4900
        %v4902 = vrot.slane %v4893, %v4901
        %v4921 = vunpack.c.l.b16 %v4877
        %v4922 = vunpack.c.h.b16 %v4877
        %v4923 = vunpack.c.l.b16 %v4878
        %v4924 = vunpack.c.h.b16 %v4878
        %v4925 = vunpack.c.l.b16 %v4879
        %v4926 = vunpack.c.h.b16 %v4879
        %v4927 = vunpack.c.l.b16 %v4880
        %v4928 = vunpack.c.h.b16 %v4880
        %v4929 = vunpack.c.l.b16 %v4881
        %v4930 = vunpack.c.h.b16 %v4881
        %v4931 = vunpack.c.l.b16 %v4882
        %v4932 = vunpack.c.h.b16 %v4882
        %v4933 = vunpack.c.l.b16 %v4883
        %v4934 = vunpack.c.h.b16 %v4883
        %v4935 = vunpack.c.l.b16 %v4884
        %v4936 = vunpack.c.h.b16 %v4884
        %v4937 = vunpack.c.l.b16 %v4885
        %v4938 = vunpack.c.h.b16 %v4885
        %v4939 = vunpack.c.l.b16 %v4886
        %v4940 = vunpack.c.h.b16 %v4886
        %v4941 = vunpack.c.l.b16 %v4887
        %v4942 = vunpack.c.h.b16 %v4887
        %v4943 = vunpack.c.l.b16 %v4888
        %v4944 = vunpack.c.h.b16 %v4888
        %v4945 = vunpack.c.l.b16 %v4889
        %v4946 = vunpack.c.h.b16 %v4889
        %v4947 = vunpack.c.l.b16 %v4890
        %v4948 = vunpack.c.h.b16 %v4890
        %v4949 = vunpack.c.l.b16 %v4891
        %v4950 = vunpack.c.h.b16 %v4891
        %v4951 = vunpack.c.l.b16 %v4892
        %v4952 = vunpack.c.h.b16 %v4892
        %v4953 = vpack.c.b16 %v4923, %v4921
        %v4954 = vpack.c.b16 %v4924, %v4922
        %v4955 = vpack.c.b16 %v4927, %v4925
        %v4956 = vpack.c.b16 %v4928, %v4926
        %v4957 = vpack.c.b16 %v4931, %v4929
        %v4958 = vpack.c.b16 %v4932, %v4930
        %v4959 = vpack.c.b16 %v4935, %v4933
        %v4960 = vpack.c.b16 %v4936, %v4934
        %v4961 = vpack.c.b16 %v4939, %v4937
        %v4962 = vpack.c.b16 %v4940, %v4938
        %v4963 = vpack.c.b16 %v4943, %v4941
        %v4964 = vpack.c.b16 %v4944, %v4942
        %v4965 = vpack.c.b16 %v4947, %v4945
        %v4966 = vpack.c.b16 %v4948, %v4946
        %v4967 = vpack.c.b16 %v4951, %v4949
        %v4968 = vpack.c.b16 %v4952, %v4950
        %4985 = vmatprep.subr.bf16.mxu0 %v4954
        %4986 = vmatpush1.bf16.msra.mxu0 %v4953
        %4987 = vmatprep.subr.bf16.mxu0 %v4956
        %4988 = vmatpush1.bf16.msra.mxu0 %v4955
        %4989 = vmatprep.subr.bf16.mxu0 %v4958
        %4990 = vmatpush1.bf16.msra.mxu0 %v4957
        %4991 = vmatprep.subr.bf16.mxu0 %v4960
        %4992 = vmatpush1.bf16.msra.mxu0 %v4959
        %4993 = vmatprep.subr.bf16.mxu0 %v4962
        %4994 = vmatpush1.bf16.msra.mxu0 %v4961
        %4995 = vmatprep.subr.bf16.mxu0 %v4964
        %4996 = vmatpush1.bf16.msra.mxu0 %v4963
        %4997 = vmatprep.subr.bf16.mxu0 %v4966
        %4998 = vmatpush1.bf16.msra.mxu0 %v4965
        %4999 = vmatprep.subr.bf16.mxu0 %v4968
        %5000 = vmatpush1.bf16.msra.mxu0 %v4967
        %5001 = vmatprep.subr.bf16.mxu0 0
        %5002 = vmatpush1.bf16.msra.mxu0 0
        %5003 = vmatprep.subr.bf16.mxu0 0
        %5004 = vmatpush1.bf16.msra.mxu0 0
        %5005 = vmatprep.subr.bf16.mxu0 0
        %5006 = vmatpush1.bf16.msra.mxu0 0
        %5007 = vmatprep.subr.bf16.mxu0 0
        %5008 = vmatpush1.bf16.msra.mxu0 0
        %5009 = vmatprep.subr.bf16.mxu0 0
        %5010 = vmatpush1.bf16.msra.mxu0 0
        %5011 = vmatprep.subr.bf16.mxu0 0
        %5012 = vmatpush1.bf16.msra.mxu0 0
        %5013 = vmatprep.subr.bf16.mxu0 0
        %5014 = vmatpush1.bf16.msra.mxu0 0
        %5015 = vmatprep.subr.bf16.mxu0 0
        %5016 = vmatpush1.bf16.msra.mxu0 0
        %5017 = vmatprep.mubr.bf16.mxu0 0
        %5018 = vmatmul.mubr.bf16.gmra.mrb[0].mxu0 %v4869
        %v5019 = vpop.f32.mrb[0].mxu0
        %v5020 = vadd.f32 %v4898, %v5019
        %v5021 = vpop.f32.mrb[0].mxu0
        %v5022 = vadd.f32 %v4902, %v5021
        %v5023 = vpop.f32.mrb[0].mxu0
        %v5024 = vadd.f32 %v4898, %v5023
        %v5025 = vpop.f32.mrb[0].mxu0
        %v5026 = vadd.f32 %v4902, %v5025
        %5027 = vmatprep.mubr.bf16.mxu0 0
        %5028 = vmatmul.mubr.bf16.gmra.mrb[0].mxu0 %v4870
        %v5029 = vpop.f32.mrb[0].mxu0
        %v5030 = vadd.f32 %v4898, %v5029
        %v5031 = vpop.f32.mrb[0].mxu0
        %v5032 = vadd.f32 %v4902, %v5031
        %v5033 = vpop.f32.mrb[0].mxu0
        %v5034 = vadd.f32 %v4898, %v5033
        %v5035 = vpop.f32.mrb[0].mxu0
        %v5036 = vadd.f32 %v4902, %v5035
        %5037 = vmatprep.mubr.bf16.mxu0 0
        %5038 = vmatmul.mubr.bf16.gmra.mrb[0].mxu0 %v4871
        %v5039 = vpop.f32.mrb[0].mxu0
        %v5040 = vadd.f32 %v4898, %v5039
        %v5041 = vpop.f32.mrb[0].mxu0
        %v5042 = vadd.f32 %v4902, %v5041
        %v5043 = vpop.f32.mrb[0].mxu0
        %v5044 = vadd.f32 %v4898, %v5043
        %v5045 = vpop.f32.mrb[0].mxu0
        %v5046 = vadd.f32 %v4902, %v5045
        %5047 = vmatprep.mubr.bf16.mxu0 0
        %5048 = vmatmul.mubr.bf16.gmra.mrb[0].mxu0 %v4872
        %v5049 = vpop.f32.mrb[0].mxu0
        %v5050 = vadd.f32 %v4898, %v5049
        %v5051 = vpop.f32.mrb[0].mxu0
        %v5052 = vadd.f32 %v4902, %v5051
        %v5053 = vpop.f32.mrb[0].mxu0
        %v5054 = vadd.f32 %v4898, %v5053
        %v5055 = vpop.f32.mrb[0].mxu0
        %v5056 = vadd.f32 %v4902, %v5055
        %5057 = vmatprep.mubr.bf16.mxu0 0
        %5058 = vmatmul.mubr.bf16.gmra.mrb[0].mxu0 %v4873
        %v5059 = vpop.f32.mrb[0].mxu0
        %v5060 = vadd.f32 %v4898, %v5059
        %v5061 = vpop.f32.mrb[0].mxu0
        %v5062 = vadd.f32 %v4902, %v5061
        %v5063 = vpop.f32.mrb[0].mxu0
        %v5064 = vadd.f32 %v4898, %v5063
        %v5065 = vpop.f32.mrb[0].mxu0
        %v5066 = vadd.f32 %v4902, %v5065
        %5067 = vmatprep.mubr.bf16.mxu0 0
        %5068 = vmatmul.mubr.bf16.gmra.mrb[0].mxu0 %v4874
        %v5069 = vpop.f32.mrb[0].mxu0
        %v5070 = vadd.f32 %v4898, %v5069
        %v5071 = vpop.f32.mrb[0].mxu0
        %v5072 = vadd.f32 %v4902, %v5071
        %v5073 = vpop.f32.mrb[0].mxu0
        %v5074 = vadd.f32 %v4898, %v5073
        %v5075 = vpop.f32.mrb[0].mxu0
        %v5076 = vadd.f32 %v4902, %v5075
        %5077 = vmatprep.mubr.bf16.mxu0 0
        %5078 = vmatmul.mubr.bf16.gmra.mrb[0].mxu0 %v4875
        %v5079 = vpop.f32.mrb[0].mxu0
        %v5080 = vadd.f32 %v4898, %v5079
        %v5081 = vpop.f32.mrb[0].mxu0
        %v5082 = vadd.f32 %v4902, %v5081
        %v5083 = vpop.f32.mrb[0].mxu0
        %v5084 = vadd.f32 %v4898, %v5083
        %v5085 = vpop.f32.mrb[0].mxu0
        %v5086 = vadd.f32 %v4902, %v5085
        %5087 = vmatprep.mubr.bf16.mxu0 0
        %5088 = vmatmul.mubr.bf16.gmra.mrb[0].mxu0 %v4876
        %v5089 = vpop.f32.mrb[0].mxu0
        %v5090 = vadd.f32 %v4898, %v5089
        %v5091 = vpop.f32.mrb[0].mxu0
        %v5092 = vadd.f32 %v4902, %v5091
        %v5093 = vpop.f32.mrb[0].mxu0
        %v5094 = vadd.f32 %v4898, %v5093
        %v5095 = vpop.f32.mrb[0].mxu0
        %v5096 = vadd.f32 %v4902, %v5095
        %5097 = vdwg.mxu0
        %v5098 = vmax.f32 %v5020, 0.0
        %v5099 = vmax.f32 %v5022, 0.0
        %v5100 = vmax.f32 %v5024, 0.0
        %v5101 = vmax.f32 %v5026, 0.0
        %v5102 = vmax.f32 %v5030, 0.0
        %v5103 = vmax.f32 %v5032, 0.0
        %v5104 = vmax.f32 %v5034, 0.0
        %v5105 = vmax.f32 %v5036, 0.0
        %v5106 = vmax.f32 %v5040, 0.0
        %v5107 = vmax.f32 %v5042, 0.0
        %v5108 = vmax.f32 %v5044, 0.0
        %v5109 = vmax.f32 %v5046, 0.0
        %v5110 = vmax.f32 %v5050, 0.0
        %v5111 = vmax.f32 %v5052, 0.0
        %v5112 = vmax.f32 %v5054, 0.0
        %v5113 = vmax.f32 %v5056, 0.0
        %v5114 = vmax.f32 %v5060, 0.0
        %v5115 = vmax.f32 %v5062, 0.0
        %v5116 = vmax.f32 %v5064, 0.0
        %v5117 = vmax.f32 %v5066, 0.0
        %v5118 = vmax.f32 %v5070, 0.0
        %v5119 = vmax.f32 %v5072, 0.0
        %v5120 = vmax.f32 %v5074, 0.0
        %v5121 = vmax.f32 %v5076, 0.0
        %v5122 = vmax.f32 %v5080, 0.0
        %v5123 = vmax.f32 %v5082, 0.0
        %v5124 = vmax.f32 %v5084, 0.0
        %v5125 = vmax.f32 %v5086, 0.0
        %v5126 = vmax.f32 %v5090, 0.0
        %v5127 = vmax.f32 %v5092, 0.0
        %v5128 = vmax.f32 %v5094, 0.0
        %v5129 = vmax.f32 %v5096, 0.0
        %v5130 = vpack.c.bf16 %v5100, %v5098
        %v5131 = vpack.c.bf16 %v5101, %v5099
        %v5132 = vpack.c.bf16 %v5104, %v5102
        %v5133 = vpack.c.bf16 %v5105, %v5103
        %v5134 = vpack.c.bf16 %v5108, %v5106
        %v5135 = vpack.c.bf16 %v5109, %v5107
        %v5136 = vpack.c.bf16 %v5112, %v5110
        %v5137 = vpack.c.bf16 %v5113, %v5111
        %v5138 = vpack.c.bf16 %v5116, %v5114
        %v5139 = vpack.c.bf16 %v5117, %v5115
        %v5140 = vpack.c.bf16 %v5120, %v5118
        %v5141 = vpack.c.bf16 %v5121, %v5119
        %v5142 = vpack.c.bf16 %v5124, %v5122
        %v5143 = vpack.c.bf16 %v5125, %v5123
        %v5144 = vpack.c.bf16 %v5128, %v5126
        %v5145 = vpack.c.bf16 %v5129, %v5127
        %v5146 = vld [vmem:[#allocation17] sm:$0xf]
        %v5147 = vld [vmem:[#allocation17 + $0x4] sm:$0xf]
        %v5148 = vld [vmem:[#allocation17 + $0x8] sm:$0xf]
        %v5149 = vld [vmem:[#allocation17 + $0xc] sm:$0xf]
        %v5150 = vld [vmem:[#allocation17 + $0x10] sm:$0xf]
        %v5151 = vld [vmem:[#allocation17 + $0x14] sm:$0xf]
        %v5152 = vld [vmem:[#allocation17 + $0x18] sm:$0xf]
        %v5153 = vld [vmem:[#allocation17 + $0x1c] sm:$0xf]
        %v5154 = vld [vmem:[#allocation17 + $0x20] sm:$0xf]
        %v5155 = vld [vmem:[#allocation17 + $0x24] sm:$0xf]
        %v5156 = vld [vmem:[#allocation17 + $0x28] sm:$0xf]
        %v5157 = vld [vmem:[#allocation17 + $0x2c] sm:$0xf]
        %v5158 = vld [vmem:[#allocation17 + $0x30] sm:$0xf]
        %v5159 = vld [vmem:[#allocation17 + $0x34] sm:$0xf]
        %v5160 = vld [vmem:[#allocation17 + $0x38] sm:$0xf]
        %v5161 = vld [vmem:[#allocation17 + $0x3c] sm:$0xf]
        %v5162 = vld [vmem:[#allocation17 + $0x40] sm:$0xf]
        %v5163 = vld [vmem:[#allocation17 + $0x44] sm:$0xf]
        %v5164 = vld [vmem:[#allocation17 + $0x48] sm:$0xf]
        %v5165 = vld [vmem:[#allocation17 + $0x4c] sm:$0xf]
        %v5166 = vld [vmem:[#allocation17 + $0x50] sm:$0xf]
        %v5167 = vld [vmem:[#allocation17 + $0x54] sm:$0xf]
        %v5168 = vld [vmem:[#allocation17 + $0x58] sm:$0xf]
        %v5169 = vld [vmem:[#allocation17 + $0x5c] sm:$0xf]
        %v5170 = vld [vmem:[#allocation17 + $0x60] sm:$0xf]
        %v5171 = vld [vmem:[#allocation17 + $0x64] sm:$0xf]
        %v5172 = vld [vmem:[#allocation17 + $0x68] sm:$0xf]
        %v5173 = vld [vmem:[#allocation17 + $0x6c] sm:$0xf]
        %v5174 = vld [vmem:[#allocation17 + $0x70] sm:$0xf]
        %v5175 = vld [vmem:[#allocation17 + $0x74] sm:$0xf]
        %v5176 = vld [vmem:[#allocation17 + $0x78] sm:$0xf]
        %v5177 = vld [vmem:[#allocation17 + $0x7c] sm:$0xf]
        %v5178 = vld [vmem:[%s15] sm:$0x1]
        %v5180 = vlaneseq
        %v5181 = vshrl.u32 %v5180, 7
        %v5182 = vsub.s32 0, %v5181
        %v5183 = vrot.slane %v5178, %v5182
        %v5217 = vunpack.c.l.b16 %v5146
        %v5218 = vunpack.c.l.b16 %v5147
        %v5219 = vunpack.c.l.b16 %v5148
        %v5220 = vunpack.c.l.b16 %v5149
        %v5221 = vunpack.c.l.b16 %v5150
        %v5222 = vunpack.c.l.b16 %v5151
        %v5223 = vunpack.c.l.b16 %v5152
        %v5224 = vunpack.c.l.b16 %v5153
        %v5225 = vunpack.c.l.b16 %v5154
        %v5226 = vunpack.c.l.b16 %v5155
        %v5227 = vunpack.c.l.b16 %v5156
        %v5228 = vunpack.c.l.b16 %v5157
        %v5229 = vunpack.c.l.b16 %v5158
        %v5230 = vunpack.c.l.b16 %v5159
        %v5231 = vunpack.c.l.b16 %v5160
        %v5232 = vunpack.c.l.b16 %v5161
        %v5233 = vunpack.c.l.b16 %v5162
        %v5234 = vunpack.c.l.b16 %v5163
        %v5235 = vunpack.c.l.b16 %v5164
        %v5236 = vunpack.c.l.b16 %v5165
        %v5237 = vunpack.c.l.b16 %v5166
        %v5238 = vunpack.c.l.b16 %v5167
        %v5239 = vunpack.c.l.b16 %v5168
        %v5240 = vunpack.c.l.b16 %v5169
        %v5241 = vunpack.c.l.b16 %v5170
        %v5242 = vunpack.c.l.b16 %v5171
        %v5243 = vunpack.c.l.b16 %v5172
        %v5244 = vunpack.c.l.b16 %v5173
        %v5245 = vunpack.c.l.b16 %v5174
        %v5246 = vunpack.c.l.b16 %v5175
        %v5247 = vunpack.c.l.b16 %v5176
        %v5248 = vunpack.c.l.b16 %v5177
        %v5249 = vpack.c.b16 %v5218, %v5217
        %v5250 = vpack.c.b16 %v5220, %v5219
        %v5251 = vpack.c.b16 %v5222, %v5221
        %v5252 = vpack.c.b16 %v5224, %v5223
        %v5253 = vpack.c.b16 %v5226, %v5225
        %v5254 = vpack.c.b16 %v5228, %v5227
        %v5255 = vpack.c.b16 %v5230, %v5229
        %v5256 = vpack.c.b16 %v5232, %v5231
        %v5257 = vpack.c.b16 %v5234, %v5233
        %v5258 = vpack.c.b16 %v5236, %v5235
        %v5259 = vpack.c.b16 %v5238, %v5237
        %v5260 = vpack.c.b16 %v5240, %v5239
        %v5261 = vpack.c.b16 %v5242, %v5241
        %v5262 = vpack.c.b16 %v5244, %v5243
        %v5263 = vpack.c.b16 %v5246, %v5245
        %v5264 = vpack.c.b16 %v5248, %v5247
        %5281 = vmatprep.subr.bf16.mxu0 0
        %5282 = vmatpush1.bf16.msra.mxu0 %v5249
        %5283 = vmatprep.subr.bf16.mxu0 0
        %5284 = vmatpush1.bf16.msra.mxu0 %v5250
        %5285 = vmatprep.subr.bf16.mxu0 0
        %5286 = vmatpush1.bf16.msra.mxu0 %v5251
        %5287 = vmatprep.subr.bf16.mxu0 0
        %5288 = vmatpush1.bf16.msra.mxu0 %v5252
        %5289 = vmatprep.subr.bf16.mxu0 0
        %5290 = vmatpush1.bf16.msra.mxu0 %v5253
        %5291 = vmatprep.subr.bf16.mxu0 0
        %5292 = vmatpush1.bf16.msra.mxu0 %v5254
        %5293 = vmatprep.subr.bf16.mxu0 0
        %5294 = vmatpush1.bf16.msra.mxu0 %v5255
        %5295 = vmatprep.subr.bf16.mxu0 0
        %5296 = vmatpush1.bf16.msra.mxu0 %v5256
        %5297 = vmatprep.subr.bf16.mxu0 0
        %5298 = vmatpush1.bf16.msra.mxu0 %v5257
        %5299 = vmatprep.subr.bf16.mxu0 0
        %5300 = vmatpush1.bf16.msra.mxu0 %v5258
        %5301 = vmatprep.subr.bf16.mxu0 0
        %5302 = vmatpush1.bf16.msra.mxu0 %v5259
        %5303 = vmatprep.subr.bf16.mxu0 0
        %5304 = vmatpush1.bf16.msra.mxu0 %v5260
        %5305 = vmatprep.subr.bf16.mxu0 0
        %5306 = vmatpush1.bf16.msra.mxu0 %v5261
        %5307 = vmatprep.subr.bf16.mxu0 0
        %5308 = vmatpush1.bf16.msra.mxu0 %v5262
        %5309 = vmatprep.subr.bf16.mxu0 0
        %5310 = vmatpush1.bf16.msra.mxu0 %v5263
        %5311 = vmatprep.subr.bf16.mxu0 0
        %5312 = vmatpush1.bf16.msra.mxu0 %v5264
        %5313 = vmatprep.mubr.bf16.mxu0 %v5131
        %5314 = vmatmul.mubr.bf16.gmra.mrb[0].mxu0 %v5130
        %v5315 = vpop.f32.mrb[0].mxu0
        %v5316 = vadd.f32 %v5183, %v5315
        %v5317 = vpop.f32.mrb[0].mxu0
        %v5318 = vpop.f32.mrb[0].mxu0
        %v5319 = vadd.f32 %v5183, %v5318
        %v5320 = vpop.f32.mrb[0].mxu0
        %5321 = vmatprep.mubr.bf16.mxu0 %v5133
        %5322 = vmatmul.mubr.bf16.gmra.mrb[0].mxu0 %v5132
        %v5323 = vpop.f32.mrb[0].mxu0
        %v5324 = vadd.f32 %v5183, %v5323
        %v5325 = vpop.f32.mrb[0].mxu0
        %v5326 = vpop.f32.mrb[0].mxu0
        %v5327 = vadd.f32 %v5183, %v5326
        %v5328 = vpop.f32.mrb[0].mxu0
        %5329 = vmatprep.mubr.bf16.mxu0 %v5135
        %5330 = vmatmul.mubr.bf16.gmra.mrb[0].mxu0 %v5134
        %v5331 = vpop.f32.mrb[0].mxu0
        %v5332 = vadd.f32 %v5183, %v5331
        %v5333 = vpop.f32.mrb[0].mxu0
        %v5334 = vpop.f32.mrb[0].mxu0
        %v5335 = vadd.f32 %v5183, %v5334
        %v5336 = vpop.f32.mrb[0].mxu0
        %5337 = vmatprep.mubr.bf16.mxu0 %v5137
        %5338 = vmatmul.mubr.bf16.gmra.mrb[0].mxu0 %v5136
        %v5339 = vpop.f32.mrb[0].mxu0
        %v5340 = vadd.f32 %v5183, %v5339
        %v5341 = vpop.f32.mrb[0].mxu0
        %v5342 = vpop.f32.mrb[0].mxu0
        %v5343 = vadd.f32 %v5183, %v5342
        %v5344 = vpop.f32.mrb[0].mxu0
        %5345 = vmatprep.mubr.bf16.mxu0 %v5139
        %5346 = vmatmul.mubr.bf16.gmra.mrb[0].mxu0 %v5138
        %v5347 = vpop.f32.mrb[0].mxu0
        %v5348 = vadd.f32 %v5183, %v5347
        %v5349 = vpop.f32.mrb[0].mxu0
        %v5350 = vpop.f32.mrb[0].mxu0
        %v5351 = vadd.f32 %v5183, %v5350
        %v5352 = vpop.f32.mrb[0].mxu0
        %5353 = vmatprep.mubr.bf16.mxu0 %v5141
        %5354 = vmatmul.mubr.bf16.gmra.mrb[0].mxu0 %v5140
        %v5355 = vpop.f32.mrb[0].mxu0
        %v5356 = vadd.f32 %v5183, %v5355
        %v5357 = vpop.f32.mrb[0].mxu0
        %v5358 = vpop.f32.mrb[0].mxu0
        %v5359 = vadd.f32 %v5183, %v5358
        %v5360 = vpop.f32.mrb[0].mxu0
        %5361 = vmatprep.mubr.bf16.mxu0 %v5143
        %5362 = vmatmul.mubr.bf16.gmra.mrb[0].mxu0 %v5142
        %v5363 = vpop.f32.mrb[0].mxu0
        %v5364 = vadd.f32 %v5183, %v5363
        %v5365 = vpop.f32.mrb[0].mxu0
        %v5366 = vpop.f32.mrb[0].mxu0
        %v5367 = vadd.f32 %v5183, %v5366
        %v5368 = vpop.f32.mrb[0].mxu0
        %5369 = vmatprep.mubr.bf16.mxu0 %v5145
        %5370 = vmatmul.mubr.bf16.gmra.mrb[0].mxu0 %v5144
        %v5371 = vpop.f32.mrb[0].mxu0
        %v5372 = vadd.f32 %v5183, %v5371
        %v5373 = vpop.f32.mrb[0].mxu0
        %v5374 = vpop.f32.mrb[0].mxu0
        %v5375 = vadd.f32 %v5183, %v5374
        %v5376 = vpop.f32.mrb[0].mxu0
        %5377 = vdwg.mxu0
        %v5378 = vadd.f32 %v4853, %v5316
        %v5379 = vadd.f32 %v4854, %v5319
        %v5380 = vadd.f32 %v4855, %v5324
        %v5381 = vadd.f32 %v4856, %v5327
        %v5382 = vadd.f32 %v4857, %v5332
        %v5383 = vadd.f32 %v4858, %v5335
        %v5384 = vadd.f32 %v4859, %v5340
        %v5385 = vadd.f32 %v4860, %v5343
        %v5386 = vadd.f32 %v4861, %v5348
        %v5387 = vadd.f32 %v4862, %v5351
        %v5388 = vadd.f32 %v4863, %v5356
        %v5389 = vadd.f32 %v4864, %v5359
        %v5390 = vadd.f32 %v4865, %v5364
        %v5391 = vadd.f32 %v4866, %v5367
        %v5392 = vadd.f32 %v4867, %v5372
        %v5393 = vadd.f32 %v4868, %v5375
        %v5394 = vld [vmem:[%s16] sm:$0x1]
        %v5395 = vld [vmem:[%s17] sm:$0x1]
        %5396 = vadd.xlane.f32.xlu0 %v5378
        %v5397 = vpop.xlane.xlu0 %5396
        %5398 = vadd.xlane.f32.xlu0 %v5379
        %v5399 = vpop.xlane.xlu0 %5398
        %5400 = vadd.xlane.f32.xlu0 %v5380
        %v5401 = vpop.xlane.xlu0 %5400
        %5402 = vadd.xlane.f32.xlu0 %v5381
        %v5403 = vpop.xlane.xlu0 %5402
        %5404 = vadd.xlane.f32.xlu0 %v5382
        %v5405 = vpop.xlane.xlu0 %5404
        %5406 = vadd.xlane.f32.xlu0 %v5383
        %v5407 = vpop.xlane.xlu0 %5406
        %5408 = vadd.xlane.f32.xlu0 %v5384
        %v5409 = vpop.xlane.xlu0 %5408
        %5410 = vadd.xlane.f32.xlu0 %v5385
        %v5411 = vpop.xlane.xlu0 %5410
        %5412 = vadd.xlane.f32.xlu0 %v5386
        %v5413 = vpop.xlane.xlu0 %5412
        %5414 = vadd.xlane.f32.xlu0 %v5387
        %v5415 = vpop.xlane.xlu0 %5414
        %5416 = vadd.xlane.f32.xlu0 %v5388
        %v5417 = vpop.xlane.xlu0 %5416
        %5418 = vadd.xlane.f32.xlu0 %v5389
        %v5419 = vpop.xlane.xlu0 %5418
        %5420 = vadd.xlane.f32.xlu0 %v5390
        %v5421 = vpop.xlane.xlu0 %5420
        %5422 = vadd.xlane.f32.xlu0 %v5391
        %v5423 = vpop.xlane.xlu0 %5422
        %5424 = vadd.xlane.f32.xlu0 %v5392
        %v5425 = vpop.xlane.xlu0 %5424
        %5426 = vadd.xlane.f32.xlu0 %v5393
        %v5427 = vpop.xlane.xlu0 %5426
        %v5428 = vmul.f32 %v5397, %v4680
        %v5429 = vmul.f32 %v5399, %v4680
        %v5430 = vmul.f32 %v5401, %v4680
        %v5431 = vmul.f32 %v5403, %v4680
        %v5432 = vmul.f32 %v5405, %v4680
        %v5433 = vmul.f32 %v5407, %v4680
        %v5434 = vmul.f32 %v5409, %v4680
        %v5435 = vmul.f32 %v5411, %v4680
        %v5436 = vmul.f32 %v5413, %v4680
        %v5437 = vmul.f32 %v5415, %v4680
        %v5438 = vmul.f32 %v5417, %v4680
        %v5439 = vmul.f32 %v5419, %v4680
        %v5440 = vmul.f32 %v5421, %v4680
        %v5441 = vmul.f32 %v5423, %v4680
        %v5442 = vmul.f32 %v5425, %v4680
        %v5443 = vmul.f32 %v5427, %v4680
        %v5444 = vsub.f32 %v5378, %v5428
        %v5445 = vsub.f32 %v5379, %v5429
        %v5446 = vsub.f32 %v5380, %v5430
        %v5447 = vsub.f32 %v5381, %v5431
        %v5448 = vsub.f32 %v5382, %v5432
        %v5449 = vsub.f32 %v5383, %v5433
        %v5450 = vsub.f32 %v5384, %v5434
        %v5451 = vsub.f32 %v5385, %v5435
        %v5452 = vsub.f32 %v5386, %v5436
        %v5453 = vsub.f32 %v5387, %v5437
        %v5454 = vsub.f32 %v5388, %v5438
        %v5455 = vsub.f32 %v5389, %v5439
        %v5456 = vsub.f32 %v5390, %v5440
        %v5457 = vsub.f32 %v5391, %v5441
        %v5458 = vsub.f32 %v5392, %v5442
        %v5459 = vsub.f32 %v5393, %v5443
        %v5460 = vmul.f32 %v5444, %v5444
        %v5461 = vmul.f32 %v5445, %v5445
        %v5462 = vmul.f32 %v5446, %v5446
        %v5463 = vmul.f32 %v5447, %v5447
        %v5464 = vmul.f32 %v5448, %v5448
        %v5465 = vmul.f32 %v5449, %v5449
        %v5466 = vmul.f32 %v5450, %v5450
        %v5467 = vmul.f32 %v5451, %v5451
        %v5468 = vmul.f32 %v5452, %v5452
        %v5469 = vmul.f32 %v5453, %v5453
        %v5470 = vmul.f32 %v5454, %v5454
        %v5471 = vmul.f32 %v5455, %v5455
        %v5472 = vmul.f32 %v5456, %v5456
        %v5473 = vmul.f32 %v5457, %v5457
        %v5474 = vmul.f32 %v5458, %v5458
        %v5475 = vmul.f32 %v5459, %v5459
        %5476 = vadd.xlane.f32.xlu0 %v5460
        %v5477 = vpop.xlane.xlu0 %5476
        %5478 = vadd.xlane.f32.xlu0 %v5461
        %v5479 = vpop.xlane.xlu0 %5478
        %5480 = vadd.xlane.f32.xlu0 %v5462
        %v5481 = vpop.xlane.xlu0 %5480
        %5482 = vadd.xlane.f32.xlu0 %v5463
        %v5483 = vpop.xlane.xlu0 %5482
        %5484 = vadd.xlane.f32.xlu0 %v5464
        %v5485 = vpop.xlane.xlu0 %5484
        %5486 = vadd.xlane.f32.xlu0 %v5465
        %v5487 = vpop.xlane.xlu0 %5486
        %5488 = vadd.xlane.f32.xlu0 %v5466
        %v5489 = vpop.xlane.xlu0 %5488
        %5490 = vadd.xlane.f32.xlu0 %v5467
        %v5491 = vpop.xlane.xlu0 %5490
        %5492 = vadd.xlane.f32.xlu0 %v5468
        %v5493 = vpop.xlane.xlu0 %5492
        %5494 = vadd.xlane.f32.xlu0 %v5469
        %v5495 = vpop.xlane.xlu0 %5494
        %5496 = vadd.xlane.f32.xlu0 %v5470
        %v5497 = vpop.xlane.xlu0 %5496
        %5498 = vadd.xlane.f32.xlu0 %v5471
        %v5499 = vpop.xlane.xlu0 %5498
        %5500 = vadd.xlane.f32.xlu0 %v5472
        %v5501 = vpop.xlane.xlu0 %5500
        %5502 = vadd.xlane.f32.xlu0 %v5473
        %v5503 = vpop.xlane.xlu0 %5502
        %5504 = vadd.xlane.f32.xlu0 %v5474
        %v5505 = vpop.xlane.xlu0 %5504
        %5506 = vadd.xlane.f32.xlu0 %v5475
        %v5507 = vpop.xlane.xlu0 %5506
        %v5508 = vmul.f32 %v5477, %v4680
        %v5509 = vmul.f32 %v5479, %v4680
        %v5510 = vmul.f32 %v5481, %v4680
        %v5511 = vmul.f32 %v5483, %v4680
        %v5512 = vmul.f32 %v5485, %v4680
        %v5513 = vmul.f32 %v5487, %v4680
        %v5514 = vmul.f32 %v5489, %v4680
        %v5515 = vmul.f32 %v5491, %v4680
        %v5516 = vmul.f32 %v5493, %v4680
        %v5517 = vmul.f32 %v5495, %v4680
        %v5518 = vmul.f32 %v5497, %v4680
        %v5519 = vmul.f32 %v5499, %v4680
        %v5520 = vmul.f32 %v5501, %v4680
        %v5521 = vmul.f32 %v5503, %v4680
        %v5522 = vmul.f32 %v5505, %v4680
        %v5523 = vmul.f32 %v5507, %v4680
        %v5524 = vadd.f32 %v5508, 1e-05
        %v5525 = vadd.f32 %v5509, 1e-05
        %v5526 = vadd.f32 %v5510, 1e-05
        %v5527 = vadd.f32 %v5511, 1e-05
        %v5528 = vadd.f32 %v5512, 1e-05
        %v5529 = vadd.f32 %v5513, 1e-05
        %v5530 = vadd.f32 %v5514, 1e-05
        %v5531 = vadd.f32 %v5515, 1e-05
        %v5532 = vadd.f32 %v5516, 1e-05
        %v5533 = vadd.f32 %v5517, 1e-05
        %v5534 = vadd.f32 %v5518, 1e-05
        %v5535 = vadd.f32 %v5519, 1e-05
        %v5536 = vadd.f32 %v5520, 1e-05
        %v5537 = vadd.f32 %v5521, 1e-05
        %v5538 = vadd.f32 %v5522, 1e-05
        %v5539 = vadd.f32 %v5523, 1e-05
        %v5540 = vrsqrt.pop %v5524
        %v5541 = vrsqrt.pop %v5525
        %v5542 = vrsqrt.pop %v5526
        %v5543 = vrsqrt.pop %v5527
        %v5544 = vrsqrt.pop %v5528
        %v5545 = vrsqrt.pop %v5529
        %v5546 = vrsqrt.pop %v5530
        %v5547 = vrsqrt.pop %v5531
        %v5548 = vrsqrt.pop %v5532
        %v5549 = vrsqrt.pop %v5533
        %v5550 = vrsqrt.pop %v5534
        %v5551 = vrsqrt.pop %v5535
        %v5552 = vrsqrt.pop %v5536
        %v5553 = vrsqrt.pop %v5537
        %v5554 = vrsqrt.pop %v5538
        %v5555 = vrsqrt.pop %v5539
        %v5556 = vmul.f32 %v5444, %v5540
        %v5557 = vmul.f32 %v5445, %v5541
        %v5558 = vmul.f32 %v5446, %v5542
        %v5559 = vmul.f32 %v5447, %v5543
        %v5560 = vmul.f32 %v5448, %v5544
        %v5561 = vmul.f32 %v5449, %v5545
        %v5562 = vmul.f32 %v5450, %v5546
        %v5563 = vmul.f32 %v5451, %v5547
        %v5564 = vmul.f32 %v5452, %v5548
        %v5565 = vmul.f32 %v5453, %v5549
        %v5566 = vmul.f32 %v5454, %v5550
        %v5567 = vmul.f32 %v5455, %v5551
        %v5568 = vmul.f32 %v5456, %v5552
        %v5569 = vmul.f32 %v5457, %v5553
        %v5570 = vmul.f32 %v5458, %v5554
        %v5571 = vmul.f32 %v5459, %v5555
        %v5573 = vlaneseq
        %v5574 = vshrl.u32 %v5573, 7
        %v5575 = vsub.s32 0, %v5574
        %v5576 = vrot.slane %v5394, %v5575
        %v5578 = vmul.f32 %v5556, %v5576
        %v5579 = vmul.f32 %v5557, %v5576
        %v5580 = vmul.f32 %v5558, %v5576
        %v5581 = vmul.f32 %v5559, %v5576
        %v5582 = vmul.f32 %v5560, %v5576
        %v5583 = vmul.f32 %v5561, %v5576
        %v5584 = vmul.f32 %v5562, %v5576
        %v5585 = vmul.f32 %v5563, %v5576
        %v5586 = vmul.f32 %v5564, %v5576
        %v5587 = vmul.f32 %v5565, %v5576
        %v5588 = vmul.f32 %v5566, %v5576
        %v5589 = vmul.f32 %v5567, %v5576
        %v5590 = vmul.f32 %v5568, %v5576
        %v5591 = vmul.f32 %v5569, %v5576
        %v5592 = vmul.f32 %v5570, %v5576
        %v5593 = vmul.f32 %v5571, %v5576
        %v5595 = vlaneseq
        %v5596 = vshrl.u32 %v5595, 7
        %v5597 = vsub.s32 0, %v5596
        %v5598 = vrot.slane %v5395, %v5597
        %v5600 = vadd.f32 %v5578, %v5598
        %v5601 = vadd.f32 %v5579, %v5598
        %v5602 = vadd.f32 %v5580, %v5598
        %v5603 = vadd.f32 %v5581, %v5598
        %v5604 = vadd.f32 %v5582, %v5598
        %v5605 = vadd.f32 %v5583, %v5598
        %v5606 = vadd.f32 %v5584, %v5598
        %v5607 = vadd.f32 %v5585, %v5598
        %v5608 = vadd.f32 %v5586, %v5598
        %v5609 = vadd.f32 %v5587, %v5598
        %v5610 = vadd.f32 %v5588, %v5598
        %v5611 = vadd.f32 %v5589, %v5598
        %v5612 = vadd.f32 %v5590, %v5598
        %v5613 = vadd.f32 %v5591, %v5598
        %v5614 = vadd.f32 %v5592, %v5598
        %v5615 = vadd.f32 %v5593, %v5598
        %5616 = vst [vmem:[%s738] sm:$0xff] %v5600
        %5617 = vst [vmem:[%s738 + $0x8] sm:$0xff] %v5601
        %5618 = vst [vmem:[%s738 + $0x10] sm:$0xff] %v5602
        %5619 = vst [vmem:[%s738 + $0x18] sm:$0xff] %v5603
        %5620 = vst [vmem:[%s738 + $0x20] sm:$0xff] %v5604
        %5621 = vst [vmem:[%s738 + $0x28] sm:$0xff] %v5605
        %5622 = vst [vmem:[%s738 + $0x30] sm:$0xff] %v5606
        %5623 = vst [vmem:[%s738 + $0x38] sm:$0xff] %v5607
        %5624 = vst [vmem:[%s738 + $0x40] sm:$0xff] %v5608
        %5625 = vst [vmem:[%s738 + $0x48] sm:$0xff] %v5609
        %5626 = vst [vmem:[%s738 + $0x50] sm:$0xff] %v5610
        %5627 = vst [vmem:[%s738 + $0x58] sm:$0xff] %v5611
        %5628 = vst [vmem:[%s738 + $0x60] sm:$0xff] %v5612
        %5629 = vst [vmem:[%s738 + $0x68] sm:$0xff] %v5613
        %5630 = vst [vmem:[%s738 + $0x70] sm:$0xff] %v5614
        %5631 = vst [vmem:[%s738 + $0x78] sm:$0xff] %v5615
        %s5632 = sand.u32 %s453, 1
        %s5633 = scalar_lea.sflag [#allocation7], %s5632
        %s5634 = sand.u32 %s453, 1
        %s5635 = smul.addr %s5634, 128
        %s5636 = scalar_lea.vmem [#allocation19], %s5635
        // Predicated region
        $region129: #{tpu_custom_call.1} parent=91 // pred_check
          %p5637 = pneg %p463
        $region130: #{tpu_custom_call.1} parent=91 // pred_check_branch
          %5639 = sbr.rel (%p5637) target = $region132
        $region131: #{tpu_custom_call.1} parent=91 // pred_region
          %s5640 = smul.u32 16, %s46
          %s5642 = ssub.s32 2048, 2048
          %5643 = vsyncadd %s5633, %s5642
          %s5644 = smul.addr %s45, 32
          %s5645 = sadd.s32 %s5640, %s5644
          %s5646 = smul.addr %s5645, 128
          %s5647 = scalar_lea.hbm %s18, %s5646
          %s5648 = sshll.u32 %s5636, 4
          %s5649 = int_to_ptr.vmem [resolvable:$true] %s5648
          %5654 = dma.vmem_to_hbm [thread:$0]  %s5649, 2048, %s5647, %s5633, 128, 128, 8
        $region132: #{tpu_custom_call.1} parent=91 // pred_fallthru
          _
      $region92: #{tpu_custom_call.1} parent=5 // pred_fallthru
        _
      %p5655 = scmp.le.s32.totalorder 2, %s36
      // Predicated region
      $region133: #{tpu_custom_call.1} parent=5 // pred_check
        %p5656 = pneg %p5655
      $region134: #{tpu_custom_call.1} parent=5 // pred_check_branch
        %5658 = sbr.rel (%p5656) target = $region136
      $region135: #{tpu_custom_call.1} parent=5 // pred_region
        %s5659 = ssub.s32 %s36, 2
        // Predicated region
        $region137: #{tpu_custom_call.1} parent=135 // pred_check
          %p5660 = pneg %p469
        $region138: #{tpu_custom_call.1} parent=135 // pred_check_branch
          %5662 = sbr.rel (%p5660) target = $region140
        $region139: #{tpu_custom_call.1} parent=135 // pred_region
          %s5663 = sand.u32 %s454, 1
          %s5664 = scalar_lea.sflag [#allocation7], %s5663
          %s5665 = sand.u32 %s454, 1
          %s5666 = smul.addr %s5665, 128
          %s5667 = scalar_lea.vmem [#allocation19], %s5666
          %5668 = dma.done %s5664, 2048
        $region140: #{tpu_custom_call.1} parent=135 // pred_fallthru
          _
      $region136: #{tpu_custom_call.1} parent=5 // pred_fallthru
        _
    $region6: #{tpu_custom_call.1} parent=1 // loop_footer
      %s40 = sadd.s32 1, %s36
    $region7: #{tpu_custom_call.1} parent=1 // loop_footer_branch
      %35 = sbr.rel target = $region3
    $region8: #{tpu_custom_call.1} parent=1 // loop_exit
      _
    %5669 = vsyncpa [#allocation6], 1
    %s5670 = scalar_lea.sflag [#allocation6], 1
    %5671 = vsyncpa %s5670, 1
    %5672 = vsyncpa [#allocation9], 1
    %s5673 = scalar_lea.sflag [#allocation9], 1
    %5674 = vsyncpa %s5673, 1
    %5675 = vsyncpa [#allocation12], 1
    %5676 = vsyncpa [#allocation15], 1
    %5677 = vsyncpa [#allocation18], 1
    %5678 = vsyncpa [#allocation7], 1
    %s5679 = scalar_lea.sflag [#allocation7], 1
    %5680 = vsyncpa %s5679, 1

</llo_original>
